<compile_context>
chip_gen: v6e
topology: v6e:2x2x1
jax: 0.10.0
libtpu: 0.0.40
codegen_flags: <defaults>
</compile_context>

<pallas_src>
import functools
import math

import jax
import jax.numpy as jnp
from jax import lax
from jax.experimental import pallas as pl
from jax.experimental.pallas import tpu as pltpu


def _atan_pos(x):
    """Cephes-style float32 atan for non-negative inputs."""
    t3p8 = 2.414213562373095   # tan(3*pi/8)
    tp8 = 0.4142135623730951   # tan(pi/8)
    big = x > t3p8
    mid = jnp.logical_and(x > tp8, jnp.logical_not(big))
    y0 = jnp.where(big, jnp.float32(math.pi / 2.0),
                   jnp.where(mid, jnp.float32(math.pi / 4.0), jnp.float32(0.0)))
    safe_x = jnp.maximum(x, 1e-20)
    xr = jnp.where(big, -pl.reciprocal(safe_x, approx=True),
                   jnp.where(mid, (x - 1.0) * pl.reciprocal(x + 1.0, approx=True), x))
    z = xr * xr
    p = ((((8.05374449538e-2 * z - 1.38776856032e-1) * z
           + 1.99777106478e-1) * z - 3.33329491539e-1) * z * xr + xr)
    return y0 + p


def _atan(x):
    """Signed atan (handles degenerate predicted boxes with negative w/h)."""
    sgn = jnp.where(x < 0.0, jnp.float32(-1.0), jnp.float32(1.0))
    return sgn * _atan_pos(jnp.abs(x))


def _pow_int(x, p):
    """x**p for a float p that is a positive integer (alpha=1.0, beta=6.0),
    via exponentiation by squaring (beta=6 -> 3 multiplies)."""
    n = int(round(p))
    # TODO(synk): non-integer alpha/beta would need exp/log with 0-handling.
    assert n >= 1 and abs(p - n) < 1e-12
    result = None
    base = x
    while True:
        if n & 1:
            result = base if result is None else result * base
        n >>= 1
        if n == 0:
            break
        base = base * base
    return result


def _tal_kernel(ps_ref, pb_ref, anc_ref, gtc_ref, ts_ref, pk_ref,
                *, topk, alpha, beta, eps, use_eps_guard):
    f32 = jnp.float32
    i32 = jnp.int32
    Bt, A, C = ps_ref.shape
    G = gtc_ref.shape[1]

    ps = ps_ref[...]                  # (Bt, A, C)  predicted class scores (natural layout)
    pb = pb_ref[...]                  # (Bt, 4, A)  predicted boxes xyxy, anchor-minor
    anc = anc_ref[...]                # (2, A)
    gtc = gtc_ref[...]                # (Bt, G, 8)  [x1,y1,x2,y2,label,mask,0,0]

    ax = anc[0:1, :]                  # (1, A)
    ay = anc[1:2, :]
    gx1 = gtc[:, :, 0:1]
    gy1 = gtc[:, :, 1:2]
    gx2 = gtc[:, :, 2:3]
    gy2 = gtc[:, :, 3:4]              # (Bt, G, 1)
    gl_i = gtc[:, :, 4:5].astype(i32)  # (Bt, G, 1) int labels
    mg = gtc[:, :, 5:6]               # (Bt, G, 1) float mask_gt

    # Iotas hoisted once, leading dim 1 so they broadcast over Bt (fewer
    # long-lived constant vregs than fully-materialized (Bt, G, A) tensors).
    a_iota = lax.broadcasted_iota(i32, (1, G, A), 2)
    g_iota = lax.broadcasted_iota(i32, (1, G, A), 1)
    c_iota = lax.broadcasted_iota(i32, (1, 1, C), 2)

    # ---- select_candidates_in_gts: anchor centers inside gt boxes ----
    d = jnp.minimum(jnp.minimum(ax - gx1, ay - gy1),
                    jnp.minimum(gx2 - ax, gy2 - ay))             # (Bt, G, A)
    maskb = jnp.logical_and(d > 1e-9, mg > 0.5)                  # in-gts & mask_gt

    # ---- get_box_metrics: per-gt class score gather (one-hot on the MXU) ----
    # "NT" contraction (minor dim of both operands) keeps pd_scores in its
    # natural (A, C) layout -> no wrapper/HBM transpose of the largest input.
    onehot_lbl = (c_iota == gl_i).astype(f32)                    # (Bt, G, C)
    bbox_scores = jnp.einsum('bgc,bac->bga', onehot_lbl, ps,
                             preferred_element_type=f32,
                             precision=lax.Precision.HIGHEST)    # (Bt, G, A)
    bbox_scores = jnp.where(maskb, bbox_scores, 0.0)

    # ---- CIoU overlaps (xyxy); divisions moved to the EUP via reciprocal ----
    # TODO(synk): all_iou_loss assumed to be ultralytics bbox_iou(xywh=False,
    # CIoU=True, eps=1e-7); atan implemented as a float32 polynomial approx.
    px1 = pb[:, 0:1, :]
    py1 = pb[:, 1:2, :]
    px2 = pb[:, 2:3, :]
    py2 = pb[:, 3:4, :]                                          # (Bt, 1, A)
    ceps = 1e-7
    w1 = gx2 - gx1
    h1 = gy2 - gy1 + ceps
    w2 = px2 - px1
    h2 = py2 - py1 + ceps
    inter = (jnp.maximum(jnp.minimum(gx2, px2) - jnp.maximum(gx1, px1), 0.0)
             * jnp.maximum(jnp.minimum(gy2, py2) - jnp.maximum(gy1, py1), 0.0))
    union = w1 * h1 + w2 * h2 - inter + ceps
    iou = inter * pl.reciprocal(union, approx=True)
    cw = jnp.maximum(gx2, px2) - jnp.minimum(gx1, px1)
    ch = jnp.maximum(gy2, py2) - jnp.minimum(gy1, py1)
    c2 = cw * cw + ch * ch + ceps
    rho2 = ((px1 + px2 - gx1 - gx2) ** 2 + (py1 + py2 - gy1 - gy2) ** 2) * 0.25
    v = (4.0 / (math.pi ** 2)) * (
        _atan(w2 * pl.reciprocal(h2, approx=True))
        - _atan(w1 * pl.reciprocal(h1, approx=True))) ** 2
    a_ciou = v * pl.reciprocal(v - iou + (1.0 + ceps), approx=True)
    ciou = iou - (rho2 * pl.reciprocal(c2, approx=True) + v * a_ciou)
    ov = jnp.where(maskb, jnp.maximum(ciou, 0.0), 0.0)           # (Bt, G, A)

    # ---- align metric (alpha=1, beta=6 -> powers by squaring) ----
    am = _pow_int(bbox_scores, alpha) * _pow_int(ov, beta)       # (Bt, G, A)

    # ---- top-k over anchors: one packed-key reduction per iteration ----
    # am >= 0 so its f32 bit pattern orders like an int; the low bits carry the
    # inverted lane index so a single max yields max value + lowest-index argmax.
    # TODO(synk): for production na (>~2K) switch the topk serial reductions to
    # a threshold-style top-k (find the k-th value once, then one mask pass).
    abits = max(1, (A - 1).bit_length())
    inv_a = (A - 1) - a_iota
    key = ((pltpu.bitcast(am, i32) >> abits) << abits) | inv_a   # (Bt, G, A)
    topk_mask = None
    guard = None
    for it in range(topk):
        kmax = jnp.max(key, axis=2, keepdims=True)               # (Bt, G, 1)
        if it == 0 and use_eps_guard:
            best = pltpu.bitcast((kmax >> abits) << abits, f32)
            guard = best > eps
        sel = key == kmax                      # keys unique thanks to inv_a bits
        topk_mask = sel if topk_mask is None else jnp.logical_or(topk_mask, sel)
        key = jnp.where(sel, -1, key)
    if use_eps_guard:
        # ultralytics zeroes the top-k mask for GTs whose best align metric is
        # <= eps; the trimmed reference spec relies on torch.topk tie order in
        # that degenerate all-zero-metric case, so keep the canonical guard.
        topk_mask = jnp.logical_and(topk_mask, guard)

    mask_pos = jnp.logical_and(topk_mask, maskb)                 # (Bt, G, A)

    # ---- select_highest_overlaps (identity when no anchor is multi-assigned) --
    fg_cnt = jnp.sum(mask_pos.astype(f32), axis=1, keepdims=True)  # (Bt, 1, A)
    multi = fg_cnt > 1.0
    gbits = max(1, (G - 1).bit_length())
    inv_g = (G - 1) - g_iota
    okey = ((pltpu.bitcast(ov, i32) >> gbits) << gbits) | inv_g
    omax = jnp.max(okey, axis=1, keepdims=True)
    max_ov_idx = (G - 1) - (omax & ((1 << gbits) - 1))           # (Bt, 1, A)
    keep = jnp.logical_or(jnp.logical_not(multi), g_iota == max_ov_idx)
    mask_pos = jnp.logical_and(mask_pos, keep)
    mask_pos_f = mask_pos.astype(f32)

    # ---- fused argmax over gts; the key also carries the clamped gt label so
    #      target_gt_idx / fg_mask / target_labels come from ONE reduction ----
    lbits = 16
    lab_p = jnp.clip(gl_i, 0, (1 << lbits) - 1)                  # (Bt, G, 1)
    tkey = ((mask_pos.astype(i32) << (gbits + lbits))
            | (inv_g << lbits) | lab_p)                          # (Bt, G, A)
    tmax = jnp.max(tkey, axis=1, keepdims=True)                  # (Bt, 1, A)
    t_labels = tmax & ((1 << lbits) - 1)                         # clamped labels
    tgi = (G - 1) - ((tmax >> lbits) & ((1 << gbits) - 1))       # target gt idx
    fg = tmax >> (gbits + lbits)                                 # 0/1 fg flag

    # ---- get_targets: bbox gather on the VPU (exact f32, no MXU, no extra
    #      transposed-GT input) ----
    onehot_gt = (g_iota == tgi).astype(f32)                      # (Bt, G, A)
    tb = jnp.concatenate(
        [jnp.sum(gtc[:, :, k:k + 1] * onehot_gt, axis=1, keepdims=True)
         for k in range(4)], axis=1)                             # (Bt, 4, A)

    # ---- normalization of target scores (exact division: lands in output) ----
    am2 = am * mask_pos_f
    pos_align = jnp.max(am2, axis=2, keepdims=True)              # (Bt, G, 1)
    pos_ov = jnp.max(ov * mask_pos_f, axis=2, keepdims=True)     # (Bt, G, 1)
    norm = jnp.max(am2 * (pos_ov / (pos_align + eps)),
                   axis=1, keepdims=True)                        # (Bt, 1, A)
    scale = jnp.where(fg > 0, norm, 0.0)                         # (Bt, 1, A)

    # target_scores written directly in the PyTorch (na, C) layout:
    # (onehot_gt * scale)^T @ onehot_lbl places `scale` at (a, label[gt[a]]).
    scaled_gt = onehot_gt * scale                                # (Bt, G, A)
    ts = jnp.einsum('bag,bgc->bac', jnp.transpose(scaled_gt, (0, 2, 1)),
                    onehot_lbl, preferred_element_type=f32,
                    precision=lax.Precision.HIGHEST)             # (Bt, A, C)

    ts_ref[...] = ts
    # One dense (8, 128)-tiled int32 slab: labels / fg / gt_idx / bbox (bits).
    pk_ref[...] = jnp.concatenate(
        [t_labels, fg, tgi, pltpu.bitcast(tb, i32),
         jnp.zeros((Bt, 1, A), i32)], axis=1)                    # (Bt, 8, A)


def _round_up(x, m):
    return -(-x // m) * m


def _tpu_vmem_capacity_bytes(default=64 * 1024 * 1024):
    """Physical VMEM of the current chip; conservative 64 MiB (v7x) fallback."""
    try:
        info = pltpu.get_tpu_info()
        cap = getattr(info, "vmem_capacity_bytes", None)
        if cap:
            return int(cap)
    except Exception:
        pass
    return default


def _per_batch_vmem_bytes(na, C, G):
    """Rough per-batch-element VMEM footprint: lane/sublane-padded I/O blocks
    (double-buffered by the pipeline) plus the live (G, na)/(na, C)
    intermediates of the kernel body."""
    lanes_c = _round_up(C, 128)                 # (na, C) tiles pad C to 128 lanes
    io = (na * lanes_c                          # pd_scores block
          + _round_up(4, 8) * na                # pd_bboxes block
          + _round_up(G, 8) * 128               # packed gt block
          + na * lanes_c                        # target_scores out
          + 8 * na)                             # packed int out
    io *= 2 * 4                                 # double-buffered, 4 B elements
    interm = 4 * (16 * _round_up(G, 8) * na     # ~16 live (G, na) f32 temporaries
                  + 3 * na * lanes_c            # ps copy / ts / transposed onehot
                  + 2 * _round_up(G, 8) * lanes_c)
    return io + interm


def _choose_block_batch(bs, per_batch_bytes, max_bt, vmem_budget):
    """Largest batch-per-step dividing bs that fits the VMEM budget; prefer an
    even grid count (balanced across the two v7x TensorCores), then >= 2 steps
    (DMA/compute overlap), then the biggest block."""
    divisors = [d for d in range(1, bs + 1) if bs % d == 0]
    fits = [d for d in divisors
            if d <= max_bt and d * per_batch_bytes <= vmem_budget]
    if not fits:
        fits = [1]
    even = [d for d in fits if (bs // d) >= 2 and (bs // d) % 2 == 0]
    multi = [d for d in fits if (bs // d) >= 2]
    cand = even or multi or fits
    return max(cand)


def task_aligned_assigner(pd_scores, pd_bboxes, anc_points, gt_labels, gt_bboxes,
                          mask_gt, *, topk=13, num_classes=20, alpha=1.0,
                          beta=6.0, eps=1e-9, topk_eps_guard=True,
                          max_batch_per_step=16):
    bs, na, C = pd_scores.shape
    G = gt_bboxes.shape[1]
    assert C == num_classes
    # TODO(synk): the PyTorch n_max_boxes == 0 early-return branch is host-side
    # control flow and is not replicated inside the kernel.
    assert G > 0 and na > topk >= 1

    f32 = jnp.float32
    ps = pd_scores.astype(f32)                                   # (b, na, C) natural
    pb_t = jnp.transpose(pd_bboxes, (0, 2, 1)).astype(f32)       # (b, 4, na) (tiny)
    anc_t = jnp.transpose(anc_points, (1, 0)).astype(f32)        # (2, na)
    gtc = jnp.concatenate([
        gt_bboxes.astype(f32).reshape(bs, G, 4),
        gt_labels.astype(f32).reshape(bs, G, 1),
        mask_gt.astype(f32).reshape(bs, G, 1),
        jnp.zeros((bs, G, 2), f32),
    ], axis=-1)                                                  # (b, G, 8)

    phys_vmem = _tpu_vmem_capacity_bytes()
    vmem_limit = int(min(int(phys_vmem * 0.8), 112 * 1024 * 1024))
    per_batch = _per_batch_vmem_bytes(na, C, G)
    bt = _choose_block_batch(bs, per_batch, max_batch_per_step,
                             int(vmem_limit * 0.7))
    grid = (bs // bt,)

    kernel = functools.partial(_tal_kernel, topk=topk, alpha=alpha, beta=beta,
                               eps=eps, use_eps_guard=topk_eps_guard)

    out_shapes = (
        jax.ShapeDtypeStruct((bs, na, C), f32),          # target_scores (natural)
        jax.ShapeDtypeStruct((bs, 8, na), jnp.int32),    # packed lbl/fg/idx/bbox
    )
    in_specs = [
        pl.BlockSpec((bt, na, C), lambda i: (i, 0, 0)),
        pl.BlockSpec((bt, 4, na), lambda i: (i, 0, 0)),
        pl.BlockSpec((2, na), lambda i: (0, 0)),
        pl.BlockSpec((bt, G, 8), lambda i: (i, 0, 0)),
    ]
    out_specs = (
        pl.BlockSpec((bt, na, C), lambda i: (i, 0, 0)),
        pl.BlockSpec((bt, 8, na), lambda i: (i, 0, 0)),
    )

    tst, pk = pl.pallas_call(
        kernel,
        out_shape=out_shapes,
        grid=grid,
        in_specs=in_specs,
        out_specs=out_specs,
        compiler_params=pltpu.CompilerParams(
            dimension_semantics=("parallel",),
            vmem_limit_bytes=vmem_limit),
    )(ps, pb_t, anc_t, gtc)

    target_labels = pk[:, 0, :]                          # (b, na) int32
    fg_mask = pk[:, 1, :].astype(bool)                   # (b, na) bool
    target_gt_idx = pk[:, 2, :]                          # (b, na) int32
    target_bboxes = jnp.transpose(
        lax.bitcast_convert_type(pk[:, 3:7, :], f32), (0, 2, 1))  # (b, na, 4)
    target_scores = tst                                  # (b, na, C), no transpose
    return target_labels, target_bboxes, target_scores, fg_mask, target_gt_idx


if __name__ == "__main__":
    key = jax.random.PRNGKey(0)
    bs, H, W, C, G = 4, 8, 16, 20, 8          # na = 128 anchors, 8 max gt boxes
    na = H * W
    k1, k2, k3, k4, k5, k6 = jax.random.split(key, 6)

    # anchor centers of an 8x16 feature map (stride 1)
    ys, xs = jnp.meshgrid(jnp.arange(H, dtype=jnp.float32) + 0.5,
                          jnp.arange(W, dtype=jnp.float32) + 0.5, indexing="ij")
    anc_points = jnp.stack([xs.reshape(-1), ys.reshape(-1)], axis=-1)   # (na, 2)

    pd_scores = jax.nn.sigmoid(jax.random.normal(k1, (bs, na, C), jnp.float32))

    # predicted boxes (xyxy) around anchor centers with positive extents
    wh = 1.0 + 3.0 * jax.random.uniform(k2, (bs, na, 2), jnp.float32)
    ctr = anc_points[None] + 0.5 * jax.random.normal(k3, (bs, na, 2), jnp.float32)
    pd_bboxes = jnp.concatenate([ctr - wh / 2.0, ctr + wh / 2.0], axis=-1)

    # ground-truth boxes (xyxy) with positive extents
    gxy = 1.0 + jax.random.uniform(k4, (bs, G, 2), jnp.float32) \
        * jnp.array([W - 6.0, H - 6.0], jnp.float32)
    gwh = 1.0 + 3.0 * jax.random.uniform(k5, (bs, G, 2), jnp.float32)
    gt_bboxes = jnp.concatenate([gxy, gxy + gwh], axis=-1)
    gt_labels = jax.random.randint(k6, (bs, G, 1), 0, C).astype(jnp.int32)

    # some gts are padding
    mask_gt = jnp.ones((bs, G, 1), jnp.float32)
    mask_gt = mask_gt.at[0, G - 2:, :].set(0.0)
    mask_gt = mask_gt.at[3, G - 1:, :].set(0.0)

    outs = task_aligned_assigner(pd_scores, pd_bboxes, anc_points,
                                 gt_labels, gt_bboxes, mask_gt,
                                 topk=13, num_classes=C, alpha=1.0, beta=6.0)
    outs = jax.block_until_ready(outs)
    print("KERNEL_OK")
</pallas_src>

<mosaic_0001>
module attributes {stable_mosaic.version = 11 : i64} {
  func.func @_tal_kernel(%arg0: i32, %arg1: memref<2x128x20xf32, #tpu.memory_space<vmem>>, %arg2: memref<2x4x128xf32, #tpu.memory_space<vmem>>, %arg3: memref<2x128xf32, #tpu.memory_space<vmem>>, %arg4: memref<2x8x8xf32, #tpu.memory_space<vmem>>, %arg5: memref<2x128x20xf32, #tpu.memory_space<vmem>>, %arg6: memref<2x8x128xi32, #tpu.memory_space<vmem>>) attributes {dimension_semantics = [#tpu.dimension_semantics<parallel>], iteration_bounds = array<i64: 2>, scalar_prefetch = 0 : i64, scratch_operands = 0 : i64, tpu.core_type = #tpu.core_type<tc>, window_params = [{transform_indices = @transform_0, window_bounds = array<i64: 2, 128, 20>}, {transform_indices = @transform_1, window_bounds = array<i64: 2, 4, 128>}, {pipeline_mode = #tpu.pipeline_mode<synchronous>, transform_indices = @transform_2, window_bounds = array<i64: 2, 128>}, {transform_indices = @transform_3, window_bounds = array<i64: 2, 8, 8>}, {transform_indices = @transform_4, window_bounds = array<i64: 2, 128, 20>}, {transform_indices = @transform_5, window_bounds = array<i64: 2, 8, 128>}]} {
    %c0 = arith.constant 0 : index
    %c0_0 = arith.constant 0 : index
    %c0_1 = arith.constant 0 : index
    %0 = vector.load %arg1[%c0, %c0_0, %c0_1] : memref<2x128x20xf32, #tpu.memory_space<vmem>>, vector<2x128x20xf32>
    %c0_2 = arith.constant 0 : index
    %c0_3 = arith.constant 0 : index
    %c0_4 = arith.constant 0 : index
    %1 = vector.load %arg2[%c0_2, %c0_3, %c0_4] : memref<2x4x128xf32, #tpu.memory_space<vmem>>, vector<2x4x128xf32>
    %c0_5 = arith.constant 0 : index
    %c0_6 = arith.constant 0 : index
    %2 = vector.load %arg3[%c0_5, %c0_6] : memref<2x128xf32, #tpu.memory_space<vmem>>, vector<2x128xf32>
    %c0_7 = arith.constant 0 : index
    %c0_8 = arith.constant 0 : index
    %c0_9 = arith.constant 0 : index
    %3 = vector.load %arg4[%c0_7, %c0_8, %c0_9] : memref<2x8x8xf32, #tpu.memory_space<vmem>>, vector<2x8x8xf32>
    %4 = vector.extract_strided_slice %2 {offsets = [0, 0], sizes = [1, 128], strides = [1, 1]} : vector<2x128xf32> to vector<1x128xf32>
    %5 = vector.extract_strided_slice %2 {offsets = [1, 0], sizes = [1, 128], strides = [1, 1]} : vector<2x128xf32> to vector<1x128xf32>
    %6 = vector.extract_strided_slice %3 {offsets = [0, 0, 0], sizes = [2, 8, 1], strides = [1, 1, 1]} : vector<2x8x8xf32> to vector<2x8x1xf32>
    %7 = vector.extract_strided_slice %3 {offsets = [0, 0, 1], sizes = [2, 8, 1], strides = [1, 1, 1]} : vector<2x8x8xf32> to vector<2x8x1xf32>
    %8 = vector.extract_strided_slice %3 {offsets = [0, 0, 2], sizes = [2, 8, 1], strides = [1, 1, 1]} : vector<2x8x8xf32> to vector<2x8x1xf32>
    %9 = vector.extract_strided_slice %3 {offsets = [0, 0, 3], sizes = [2, 8, 1], strides = [1, 1, 1]} : vector<2x8x8xf32> to vector<2x8x1xf32>
    %10 = vector.extract_strided_slice %3 {offsets = [0, 0, 4], sizes = [2, 8, 1], strides = [1, 1, 1]} : vector<2x8x8xf32> to vector<2x8x1xf32>
    %11 = arith.fptosi %10 : vector<2x8x1xf32> to vector<2x8x1xi32>
    %12 = vector.extract_strided_slice %3 {offsets = [0, 0, 5], sizes = [2, 8, 1], strides = [1, 1, 1]} : vector<2x8x8xf32> to vector<2x8x1xf32>
    %13 = tpu.iota {dimensions = array<i32: 2>} : vector<1x8x128xi32>
    %14 = tpu.iota {dimensions = array<i32: 1>} : vector<1x8x128xi32>
    %15 = tpu.iota {dimensions = array<i32: 2>} : vector<1x1x20xi32>
    %16 = vector.shape_cast %4 : vector<1x128xf32> to vector<1x1x128xf32>
    %17 = vector.broadcast %16 : vector<1x1x128xf32> to vector<2x8x128xf32>
    %18 = vector.broadcast %6 : vector<2x8x1xf32> to vector<2x8x128xf32>
    %19 = arith.subf %17, %18 : vector<2x8x128xf32>
    %20 = vector.shape_cast %5 : vector<1x128xf32> to vector<1x1x128xf32>
    %21 = vector.broadcast %20 : vector<1x1x128xf32> to vector<2x8x128xf32>
    %22 = vector.broadcast %7 : vector<2x8x1xf32> to vector<2x8x128xf32>
    %23 = arith.subf %21, %22 : vector<2x8x128xf32>
    %24 = arith.minimumf %19, %23 : vector<2x8x128xf32>
    %25 = vector.shape_cast %4 : vector<1x128xf32> to vector<1x1x128xf32>
    %26 = vector.broadcast %8 : vector<2x8x1xf32> to vector<2x8x128xf32>
    %27 = vector.broadcast %25 : vector<1x1x128xf32> to vector<2x8x128xf32>
    %28 = arith.subf %26, %27 : vector<2x8x128xf32>
    %29 = vector.shape_cast %5 : vector<1x128xf32> to vector<1x1x128xf32>
    %30 = vector.broadcast %9 : vector<2x8x1xf32> to vector<2x8x128xf32>
    %31 = vector.broadcast %29 : vector<1x1x128xf32> to vector<2x8x128xf32>
    %32 = arith.subf %30, %31 : vector<2x8x128xf32>
    %33 = arith.minimumf %28, %32 : vector<2x8x128xf32>
    %34 = arith.minimumf %24, %33 : vector<2x8x128xf32>
    %cst = arith.constant 9.99999971E-10 : f32
    %35 = vector.broadcast %cst : f32 to vector<2x8x128xf32>
    %36 = arith.cmpf ogt, %34, %35 : vector<2x8x128xf32>
    %cst_10 = arith.constant 5.000000e-01 : f32
    %37 = vector.broadcast %cst_10 : f32 to vector<2x8x1xf32>
    %38 = arith.cmpf ogt, %12, %37 : vector<2x8x1xf32>
    %39 = vector.broadcast %38 : vector<2x8x1xi1> to vector<2x8x128xi1>
    %40 = arith.andi %36, %39 : vector<2x8x128xi1>
    %41 = vector.broadcast %15 : vector<1x1x20xi32> to vector<2x8x20xi32>
    %42 = vector.broadcast %11 : vector<2x8x1xi32> to vector<2x8x20xi32>
    %43 = arith.cmpi eq, %41, %42 : vector<2x8x20xi32>
    %44 = arith.extui %43 : vector<2x8x20xi1> to vector<2x8x20xi32>
    %45 = arith.sitofp %44 : vector<2x8x20xi32> to vector<2x8x20xf32>
    "tpu.trace_start"() <{level = 10 : i32, message = "bgc,bac->bga"}> : () -> ()
    %cst_11 = arith.constant dense<0.000000e+00> : vector<2x8x128xf32>
    %46 = tpu.matmul %45, %0, %cst_11 {dimension_numbers = #tpu.dot_dimension_numbers<[2], [2], [1], [1], [0, 0, 0, 1, 1, 1], [0], [0]>, precision = #tpu.contract_precision<fp32>} : vector<2x8x20xf32>, vector<2x128x20xf32>, vector<2x8x128xf32> -> vector<2x8x128xf32>
    %cst_12 = arith.constant 0.000000e+00 : f32
    "tpu.trace_stop"() : () -> ()
    %47 = vector.broadcast %cst_12 : f32 to vector<2x8x128xf32>
    %48 = arith.select %40, %46, %47 : vector<2x8x128xi1>, vector<2x8x128xf32>
    %49 = vector.extract_strided_slice %1 {offsets = [0, 0, 0], sizes = [2, 1, 128], strides = [1, 1, 1]} : vector<2x4x128xf32> to vector<2x1x128xf32>
    %50 = vector.extract_strided_slice %1 {offsets = [0, 1, 0], sizes = [2, 1, 128], strides = [1, 1, 1]} : vector<2x4x128xf32> to vector<2x1x128xf32>
    %51 = vector.extract_strided_slice %1 {offsets = [0, 2, 0], sizes = [2, 1, 128], strides = [1, 1, 1]} : vector<2x4x128xf32> to vector<2x1x128xf32>
    %52 = vector.extract_strided_slice %1 {offsets = [0, 3, 0], sizes = [2, 1, 128], strides = [1, 1, 1]} : vector<2x4x128xf32> to vector<2x1x128xf32>
    %53 = arith.subf %8, %6 : vector<2x8x1xf32>
    %54 = arith.subf %9, %7 : vector<2x8x1xf32>
    %cst_13 = arith.constant 1.000000e-07 : f32
    %55 = vector.broadcast %cst_13 : f32 to vector<2x8x1xf32>
    %56 = arith.addf %54, %55 : vector<2x8x1xf32>
    %57 = arith.subf %51, %49 : vector<2x1x128xf32>
    %58 = arith.subf %52, %50 : vector<2x1x128xf32>
    %cst_14 = arith.constant 1.000000e-07 : f32
    %59 = vector.broadcast %cst_14 : f32 to vector<2x1x128xf32>
    %60 = arith.addf %58, %59 : vector<2x1x128xf32>
    %61 = vector.broadcast %8 : vector<2x8x1xf32> to vector<2x8x128xf32>
    %62 = vector.broadcast %51 : vector<2x1x128xf32> to vector<2x8x128xf32>
    %63 = arith.minimumf %61, %62 : vector<2x8x128xf32>
    %64 = vector.broadcast %6 : vector<2x8x1xf32> to vector<2x8x128xf32>
    %65 = vector.broadcast %49 : vector<2x1x128xf32> to vector<2x8x128xf32>
    %66 = arith.maximumf %64, %65 : vector<2x8x128xf32>
    %67 = arith.subf %63, %66 : vector<2x8x128xf32>
    %cst_15 = arith.constant 0.000000e+00 : f32
    %68 = vector.broadcast %cst_15 : f32 to vector<2x8x128xf32>
    %69 = arith.maximumf %67, %68 : vector<2x8x128xf32>
    %70 = vector.broadcast %9 : vector<2x8x1xf32> to vector<2x8x128xf32>
    %71 = vector.broadcast %52 : vector<2x1x128xf32> to vector<2x8x128xf32>
    %72 = arith.minimumf %70, %71 : vector<2x8x128xf32>
    %73 = vector.broadcast %7 : vector<2x8x1xf32> to vector<2x8x128xf32>
    %74 = vector.broadcast %50 : vector<2x1x128xf32> to vector<2x8x128xf32>
    %75 = arith.maximumf %73, %74 : vector<2x8x128xf32>
    %76 = arith.subf %72, %75 : vector<2x8x128xf32>
    %cst_16 = arith.constant 0.000000e+00 : f32
    %77 = vector.broadcast %cst_16 : f32 to vector<2x8x128xf32>
    %78 = arith.maximumf %76, %77 : vector<2x8x128xf32>
    %79 = arith.mulf %69, %78 : vector<2x8x128xf32>
    %80 = arith.mulf %53, %56 : vector<2x8x1xf32>
    %81 = arith.mulf %57, %60 : vector<2x1x128xf32>
    %82 = vector.broadcast %80 : vector<2x8x1xf32> to vector<2x8x128xf32>
    %83 = vector.broadcast %81 : vector<2x1x128xf32> to vector<2x8x128xf32>
    %84 = arith.addf %82, %83 : vector<2x8x128xf32>
    %85 = arith.subf %84, %79 : vector<2x8x128xf32>
    %cst_17 = arith.constant 1.000000e-07 : f32
    %86 = vector.broadcast %cst_17 : f32 to vector<2x8x128xf32>
    %87 = arith.addf %85, %86 : vector<2x8x128xf32>
    %88 = tpu.reciprocal %87 {approx = true} : vector<2x8x128xf32> -> vector<2x8x128xf32>
    %89 = arith.mulf %79, %88 : vector<2x8x128xf32>
    %90 = vector.broadcast %8 : vector<2x8x1xf32> to vector<2x8x128xf32>
    %91 = vector.broadcast %51 : vector<2x1x128xf32> to vector<2x8x128xf32>
    %92 = arith.maximumf %90, %91 : vector<2x8x128xf32>
    %93 = vector.broadcast %6 : vector<2x8x1xf32> to vector<2x8x128xf32>
    %94 = vector.broadcast %49 : vector<2x1x128xf32> to vector<2x8x128xf32>
    %95 = arith.minimumf %93, %94 : vector<2x8x128xf32>
    %96 = arith.subf %92, %95 : vector<2x8x128xf32>
    %97 = vector.broadcast %9 : vector<2x8x1xf32> to vector<2x8x128xf32>
    %98 = vector.broadcast %52 : vector<2x1x128xf32> to vector<2x8x128xf32>
    %99 = arith.maximumf %97, %98 : vector<2x8x128xf32>
    %100 = vector.broadcast %7 : vector<2x8x1xf32> to vector<2x8x128xf32>
    %101 = vector.broadcast %50 : vector<2x1x128xf32> to vector<2x8x128xf32>
    %102 = arith.minimumf %100, %101 : vector<2x8x128xf32>
    %103 = arith.subf %99, %102 : vector<2x8x128xf32>
    %104 = arith.mulf %96, %96 : vector<2x8x128xf32>
    %105 = arith.mulf %103, %103 : vector<2x8x128xf32>
    %106 = arith.addf %104, %105 : vector<2x8x128xf32>
    %cst_18 = arith.constant 1.000000e-07 : f32
    %107 = vector.broadcast %cst_18 : f32 to vector<2x8x128xf32>
    %108 = arith.addf %106, %107 : vector<2x8x128xf32>
    %109 = arith.addf %49, %51 : vector<2x1x128xf32>
    %110 = vector.broadcast %109 : vector<2x1x128xf32> to vector<2x8x128xf32>
    %111 = vector.broadcast %6 : vector<2x8x1xf32> to vector<2x8x128xf32>
    %112 = arith.subf %110, %111 : vector<2x8x128xf32>
    %113 = vector.broadcast %8 : vector<2x8x1xf32> to vector<2x8x128xf32>
    %114 = arith.subf %112, %113 : vector<2x8x128xf32>
    %115 = arith.mulf %114, %114 : vector<2x8x128xf32>
    %116 = arith.addf %50, %52 : vector<2x1x128xf32>
    %117 = vector.broadcast %116 : vector<2x1x128xf32> to vector<2x8x128xf32>
    %118 = vector.broadcast %7 : vector<2x8x1xf32> to vector<2x8x128xf32>
    %119 = arith.subf %117, %118 : vector<2x8x128xf32>
    %120 = vector.broadcast %9 : vector<2x8x1xf32> to vector<2x8x128xf32>
    %121 = arith.subf %119, %120 : vector<2x8x128xf32>
    %122 = arith.mulf %121, %121 : vector<2x8x128xf32>
    %123 = arith.addf %115, %122 : vector<2x8x128xf32>
    %cst_19 = arith.constant 2.500000e-01 : f32
    %124 = vector.broadcast %cst_19 : f32 to vector<2x8x128xf32>
    %125 = arith.mulf %123, %124 : vector<2x8x128xf32>
    %126 = tpu.reciprocal %60 {approx = true} : vector<2x1x128xf32> -> vector<2x1x128xf32>
    %127 = arith.mulf %57, %126 : vector<2x1x128xf32>
    %cst_20 = arith.constant 0.000000e+00 : f32
    %128 = vector.broadcast %cst_20 : f32 to vector<2x1x128xf32>
    %129 = arith.cmpf olt, %127, %128 : vector<2x1x128xf32>
    %cst_21 = arith.constant -1.000000e+00 : f32
    %cst_22 = arith.constant 1.000000e+00 : f32
    %130 = vector.broadcast %cst_21 : f32 to vector<2x1x128xf32>
    %131 = vector.broadcast %cst_22 : f32 to vector<2x1x128xf32>
    %132 = arith.select %129, %130, %131 : vector<2x1x128xi1>, vector<2x1x128xf32>
    %133 = math.absf %127 : vector<2x1x128xf32>
    %cst_23 = arith.constant 2.41421366 : f32
    %134 = vector.broadcast %cst_23 : f32 to vector<2x1x128xf32>
    %135 = arith.cmpf ogt, %133, %134 : vector<2x1x128xf32>
    %cst_24 = arith.constant 0.414213568 : f32
    %136 = vector.broadcast %cst_24 : f32 to vector<2x1x128xf32>
    %137 = arith.cmpf ogt, %133, %136 : vector<2x1x128xf32>
    %cst_25 = arith.constant dense<true> : vector<2x1x128xi1>
    %138 = arith.xori %135, %cst_25 : vector<2x1x128xi1>
    %139 = arith.andi %137, %138 : vector<2x1x128xi1>
    %cst_26 = arith.constant 0.785398185 : f32
    %cst_27 = arith.constant 0.000000e+00 : f32
    %140 = vector.broadcast %cst_26 : f32 to vector<2x1x128xf32>
    %141 = vector.broadcast %cst_27 : f32 to vector<2x1x128xf32>
    %142 = arith.select %139, %140, %141 : vector<2x1x128xi1>, vector<2x1x128xf32>
    %cst_28 = arith.constant 1.57079637 : f32
    %143 = vector.broadcast %cst_28 : f32 to vector<2x1x128xf32>
    %144 = arith.select %135, %143, %142 : vector<2x1x128xi1>, vector<2x1x128xf32>
    %cst_29 = arith.constant 9.99999968E-21 : f32
    %145 = vector.broadcast %cst_29 : f32 to vector<2x1x128xf32>
    %146 = arith.maximumf %133, %145 : vector<2x1x128xf32>
    %147 = tpu.reciprocal %146 {approx = true} : vector<2x1x128xf32> -> vector<2x1x128xf32>
    %cst_30 = arith.constant 0.000000e+00 : f32
    %148 = vector.broadcast %cst_30 : f32 to vector<2x1x128xf32>
    %149 = arith.subf %148, %147 : vector<2x1x128xf32>
    %cst_31 = arith.constant 1.000000e+00 : f32
    %150 = vector.broadcast %cst_31 : f32 to vector<2x1x128xf32>
    %151 = arith.subf %133, %150 : vector<2x1x128xf32>
    %cst_32 = arith.constant 1.000000e+00 : f32
    %152 = vector.broadcast %cst_32 : f32 to vector<2x1x128xf32>
    %153 = arith.addf %133, %152 : vector<2x1x128xf32>
    %154 = tpu.reciprocal %153 {approx = true} : vector<2x1x128xf32> -> vector<2x1x128xf32>
    %155 = arith.mulf %151, %154 : vector<2x1x128xf32>
    %156 = arith.select %139, %155, %133 : vector<2x1x128xi1>, vector<2x1x128xf32>
    %157 = arith.select %135, %149, %156 : vector<2x1x128xi1>, vector<2x1x128xf32>
    %158 = arith.mulf %157, %157 : vector<2x1x128xf32>
    %cst_33 = arith.constant 0.0805374458 : f32
    %159 = vector.broadcast %cst_33 : f32 to vector<2x1x128xf32>
    %160 = arith.mulf %159, %158 : vector<2x1x128xf32>
    %cst_34 = arith.constant 0.138776854 : f32
    %161 = vector.broadcast %cst_34 : f32 to vector<2x1x128xf32>
    %162 = arith.subf %160, %161 : vector<2x1x128xf32>
    %163 = arith.mulf %162, %158 : vector<2x1x128xf32>
    %cst_35 = arith.constant 0.199777111 : f32
    %164 = vector.broadcast %cst_35 : f32 to vector<2x1x128xf32>
    %165 = arith.addf %163, %164 : vector<2x1x128xf32>
    %166 = arith.mulf %165, %158 : vector<2x1x128xf32>
    %cst_36 = arith.constant 0.333329499 : f32
    %167 = vector.broadcast %cst_36 : f32 to vector<2x1x128xf32>
    %168 = arith.subf %166, %167 : vector<2x1x128xf32>
    %169 = arith.mulf %168, %158 : vector<2x1x128xf32>
    %170 = arith.mulf %169, %157 : vector<2x1x128xf32>
    %171 = arith.addf %170, %157 : vector<2x1x128xf32>
    %172 = arith.addf %144, %171 : vector<2x1x128xf32>
    %173 = arith.mulf %132, %172 : vector<2x1x128xf32>
    %174 = tpu.reciprocal %56 {approx = true} : vector<2x8x1xf32> -> vector<2x8x1xf32>
    %175 = arith.mulf %53, %174 : vector<2x8x1xf32>
    %cst_37 = arith.constant 0.000000e+00 : f32
    %176 = vector.broadcast %cst_37 : f32 to vector<2x8x1xf32>
    %177 = arith.cmpf olt, %175, %176 : vector<2x8x1xf32>
    %cst_38 = arith.constant -1.000000e+00 : f32
    %cst_39 = arith.constant 1.000000e+00 : f32
    %178 = vector.broadcast %cst_38 : f32 to vector<2x8x1xf32>
    %179 = vector.broadcast %cst_39 : f32 to vector<2x8x1xf32>
    %180 = arith.select %177, %178, %179 : vector<2x8x1xi1>, vector<2x8x1xf32>
    %181 = math.absf %175 : vector<2x8x1xf32>
    %cst_40 = arith.constant 2.41421366 : f32
    %182 = vector.broadcast %cst_40 : f32 to vector<2x8x1xf32>
    %183 = arith.cmpf ogt, %181, %182 : vector<2x8x1xf32>
    %cst_41 = arith.constant 0.414213568 : f32
    %184 = vector.broadcast %cst_41 : f32 to vector<2x8x1xf32>
    %185 = arith.cmpf ogt, %181, %184 : vector<2x8x1xf32>
    %cst_42 = arith.constant dense<true> : vector<2x8x1xi1>
    %186 = arith.xori %183, %cst_42 : vector<2x8x1xi1>
    %187 = arith.andi %185, %186 : vector<2x8x1xi1>
    %cst_43 = arith.constant 0.785398185 : f32
    %cst_44 = arith.constant 0.000000e+00 : f32
    %188 = vector.broadcast %cst_43 : f32 to vector<2x8x1xf32>
    %189 = vector.broadcast %cst_44 : f32 to vector<2x8x1xf32>
    %190 = arith.select %187, %188, %189 : vector<2x8x1xi1>, vector<2x8x1xf32>
    %cst_45 = arith.constant 1.57079637 : f32
    %191 = vector.broadcast %cst_45 : f32 to vector<2x8x1xf32>
    %192 = arith.select %183, %191, %190 : vector<2x8x1xi1>, vector<2x8x1xf32>
    %cst_46 = arith.constant 9.99999968E-21 : f32
    %193 = vector.broadcast %cst_46 : f32 to vector<2x8x1xf32>
    %194 = arith.maximumf %181, %193 : vector<2x8x1xf32>
    %195 = tpu.reciprocal %194 {approx = true} : vector<2x8x1xf32> -> vector<2x8x1xf32>
    %cst_47 = arith.constant 0.000000e+00 : f32
    %196 = vector.broadcast %cst_47 : f32 to vector<2x8x1xf32>
    %197 = arith.subf %196, %195 : vector<2x8x1xf32>
    %cst_48 = arith.constant 1.000000e+00 : f32
    %198 = vector.broadcast %cst_48 : f32 to vector<2x8x1xf32>
    %199 = arith.subf %181, %198 : vector<2x8x1xf32>
    %cst_49 = arith.constant 1.000000e+00 : f32
    %200 = vector.broadcast %cst_49 : f32 to vector<2x8x1xf32>
    %201 = arith.addf %181, %200 : vector<2x8x1xf32>
    %202 = tpu.reciprocal %201 {approx = true} : vector<2x8x1xf32> -> vector<2x8x1xf32>
    %203 = arith.mulf %199, %202 : vector<2x8x1xf32>
    %204 = arith.select %187, %203, %181 : vector<2x8x1xi1>, vector<2x8x1xf32>
    %205 = arith.select %183, %197, %204 : vector<2x8x1xi1>, vector<2x8x1xf32>
    %206 = arith.mulf %205, %205 : vector<2x8x1xf32>
    %cst_50 = arith.constant 0.0805374458 : f32
    %207 = vector.broadcast %cst_50 : f32 to vector<2x8x1xf32>
    %208 = arith.mulf %207, %206 : vector<2x8x1xf32>
    %cst_51 = arith.constant 0.138776854 : f32
    %209 = vector.broadcast %cst_51 : f32 to vector<2x8x1xf32>
    %210 = arith.subf %208, %209 : vector<2x8x1xf32>
    %211 = arith.mulf %210, %206 : vector<2x8x1xf32>
    %cst_52 = arith.constant 0.199777111 : f32
    %212 = vector.broadcast %cst_52 : f32 to vector<2x8x1xf32>
    %213 = arith.addf %211, %212 : vector<2x8x1xf32>
    %214 = arith.mulf %213, %206 : vector<2x8x1xf32>
    %cst_53 = arith.constant 0.333329499 : f32
    %215 = vector.broadcast %cst_53 : f32 to vector<2x8x1xf32>
    %216 = arith.subf %214, %215 : vector<2x8x1xf32>
    %217 = arith.mulf %216, %206 : vector<2x8x1xf32>
    %218 = arith.mulf %217, %205 : vector<2x8x1xf32>
    %219 = arith.addf %218, %205 : vector<2x8x1xf32>
    %220 = arith.addf %192, %219 : vector<2x8x1xf32>
    %221 = arith.mulf %180, %220 : vector<2x8x1xf32>
    %222 = vector.broadcast %173 : vector<2x1x128xf32> to vector<2x8x128xf32>
    %223 = vector.broadcast %221 : vector<2x8x1xf32> to vector<2x8x128xf32>
    %224 = arith.subf %222, %223 : vector<2x8x128xf32>
    %225 = arith.mulf %224, %224 : vector<2x8x128xf32>
    %cst_54 = arith.constant 0.405284733 : f32
    %226 = vector.broadcast %cst_54 : f32 to vector<2x8x128xf32>
    %227 = arith.mulf %226, %225 : vector<2x8x128xf32>
    %228 = arith.subf %227, %89 : vector<2x8x128xf32>
    %cst_55 = arith.constant 1.00000012 : f32
    %229 = vector.broadcast %cst_55 : f32 to vector<2x8x128xf32>
    %230 = arith.addf %228, %229 : vector<2x8x128xf32>
    %231 = tpu.reciprocal %230 {approx = true} : vector<2x8x128xf32> -> vector<2x8x128xf32>
    %232 = arith.mulf %227, %231 : vector<2x8x128xf32>
    %233 = tpu.reciprocal %108 {approx = true} : vector<2x8x128xf32> -> vector<2x8x128xf32>
    %234 = arith.mulf %125, %233 : vector<2x8x128xf32>
    %235 = arith.mulf %227, %232 : vector<2x8x128xf32>
    %236 = arith.addf %234, %235 : vector<2x8x128xf32>
    %237 = arith.subf %89, %236 : vector<2x8x128xf32>
    %cst_56 = arith.constant 0.000000e+00 : f32
    %238 = vector.broadcast %cst_56 : f32 to vector<2x8x128xf32>
    %239 = arith.maximumf %237, %238 : vector<2x8x128xf32>
    %cst_57 = arith.constant 0.000000e+00 : f32
    %240 = vector.broadcast %cst_57 : f32 to vector<2x8x128xf32>
    %241 = arith.select %40, %239, %240 : vector<2x8x128xi1>, vector<2x8x128xf32>
    %242 = arith.mulf %241, %241 : vector<2x8x128xf32>
    %243 = arith.mulf %242, %242 : vector<2x8x128xf32>
    %244 = arith.mulf %242, %243 : vector<2x8x128xf32>
    %245 = arith.mulf %48, %244 : vector<2x8x128xf32>
    %c127_i32 = arith.constant 127 : i32
    %246 = vector.broadcast %c127_i32 : i32 to vector<1x8x128xi32>
    %247 = arith.subi %246, %13 : vector<1x8x128xi32>
    %248 = tpu.bitcast %245 : vector<2x8x128xf32> -> vector<2x8x128xi32>
    %c7_i32 = arith.constant 7 : i32
    %249 = vector.broadcast %c7_i32 : i32 to vector<2x8x128xi32>
    %250 = arith.shrsi %248, %249 : vector<2x8x128xi32>
    %c7_i32_58 = arith.constant 7 : i32
    %251 = vector.broadcast %c7_i32_58 : i32 to vector<2x8x128xi32>
    %252 = arith.shli %250, %251 : vector<2x8x128xi32>
    %253 = vector.broadcast %247 : vector<1x8x128xi32> to vector<2x8x128xi32>
    %254 = arith.ori %252, %253 : vector<2x8x128xi32>
    %cst_59 = arith.constant dense<-2147483648> : vector<2x8xi32>
    %255 = vector.multi_reduction <maxsi>, %254, %cst_59 [2] : vector<2x8x128xi32> to vector<2x8xi32>
    %256 = vector.shape_cast %255 : vector<2x8xi32> to vector<2x8x1xi32>
    %c7_i32_60 = arith.constant 7 : i32
    %257 = vector.broadcast %c7_i32_60 : i32 to vector<2x8x1xi32>
    %258 = arith.shrsi %256, %257 : vector<2x8x1xi32>
    %c7_i32_61 = arith.constant 7 : i32
    %259 = vector.broadcast %c7_i32_61 : i32 to vector<2x8x1xi32>
    %260 = arith.shli %258, %259 : vector<2x8x1xi32>
    %261 = tpu.bitcast %260 : vector<2x8x1xi32> -> vector<2x8x1xf32>
    %cst_62 = arith.constant 9.99999971E-10 : f32
    %262 = vector.broadcast %cst_62 : f32 to vector<2x8x1xf32>
    %263 = arith.cmpf ogt, %261, %262 : vector<2x8x1xf32>
    %264 = vector.broadcast %256 : vector<2x8x1xi32> to vector<2x8x128xi32>
    %265 = arith.cmpi eq, %254, %264 : vector<2x8x128xi32>
    %c-1_i32 = arith.constant -1 : i32
    %266 = vector.broadcast %c-1_i32 : i32 to vector<2x8x128xi32>
    %267 = arith.select %265, %266, %254 : vector<2x8x128xi1>, vector<2x8x128xi32>
    %cst_63 = arith.constant dense<-2147483648> : vector<2x8xi32>
    %268 = vector.multi_reduction <maxsi>, %267, %cst_63 [2] : vector<2x8x128xi32> to vector<2x8xi32>
    %269 = vector.shape_cast %268 : vector<2x8xi32> to vector<2x8x1xi32>
    %270 = vector.broadcast %269 : vector<2x8x1xi32> to vector<2x8x128xi32>
    %271 = arith.cmpi eq, %267, %270 : vector<2x8x128xi32>
    %272 = arith.ori %265, %271 : vector<2x8x128xi1>
    %c-1_i32_64 = arith.constant -1 : i32
    %273 = vector.broadcast %c-1_i32_64 : i32 to vector<2x8x128xi32>
    %274 = arith.select %271, %273, %267 : vector<2x8x128xi1>, vector<2x8x128xi32>
    %cst_65 = arith.constant dense<-2147483648> : vector<2x8xi32>
    %275 = vector.multi_reduction <maxsi>, %274, %cst_65 [2] : vector<2x8x128xi32> to vector<2x8xi32>
    %276 = vector.shape_cast %275 : vector<2x8xi32> to vector<2x8x1xi32>
    %277 = vector.broadcast %276 : vector<2x8x1xi32> to vector<2x8x128xi32>
    %278 = arith.cmpi eq, %274, %277 : vector<2x8x128xi32>
    %279 = arith.ori %272, %278 : vector<2x8x128xi1>
    %c-1_i32_66 = arith.constant -1 : i32
    %280 = vector.broadcast %c-1_i32_66 : i32 to vector<2x8x128xi32>
    %281 = arith.select %278, %280, %274 : vector<2x8x128xi1>, vector<2x8x128xi32>
    %cst_67 = arith.constant dense<-2147483648> : vector<2x8xi32>
    %282 = vector.multi_reduction <maxsi>, %281, %cst_67 [2] : vector<2x8x128xi32> to vector<2x8xi32>
    %283 = vector.shape_cast %282 : vector<2x8xi32> to vector<2x8x1xi32>
    %284 = vector.broadcast %283 : vector<2x8x1xi32> to vector<2x8x128xi32>
    %285 = arith.cmpi eq, %281, %284 : vector<2x8x128xi32>
    %286 = arith.ori %279, %285 : vector<2x8x128xi1>
    %c-1_i32_68 = arith.constant -1 : i32
    %287 = vector.broadcast %c-1_i32_68 : i32 to vector<2x8x128xi32>
    %288 = arith.select %285, %287, %281 : vector<2x8x128xi1>, vector<2x8x128xi32>
    %cst_69 = arith.constant dense<-2147483648> : vector<2x8xi32>
    %289 = vector.multi_reduction <maxsi>, %288, %cst_69 [2] : vector<2x8x128xi32> to vector<2x8xi32>
    %290 = vector.shape_cast %289 : vector<2x8xi32> to vector<2x8x1xi32>
    %291 = vector.broadcast %290 : vector<2x8x1xi32> to vector<2x8x128xi32>
    %292 = arith.cmpi eq, %288, %291 : vector<2x8x128xi32>
    %293 = arith.ori %286, %292 : vector<2x8x128xi1>
    %c-1_i32_70 = arith.constant -1 : i32
    %294 = vector.broadcast %c-1_i32_70 : i32 to vector<2x8x128xi32>
    %295 = arith.select %292, %294, %288 : vector<2x8x128xi1>, vector<2x8x128xi32>
    %cst_71 = arith.constant dense<-2147483648> : vector<2x8xi32>
    %296 = vector.multi_reduction <maxsi>, %295, %cst_71 [2] : vector<2x8x128xi32> to vector<2x8xi32>
    %297 = vector.shape_cast %296 : vector<2x8xi32> to vector<2x8x1xi32>
    %298 = vector.broadcast %297 : vector<2x8x1xi32> to vector<2x8x128xi32>
    %299 = arith.cmpi eq, %295, %298 : vector<2x8x128xi32>
    %300 = arith.ori %293, %299 : vector<2x8x128xi1>
    %c-1_i32_72 = arith.constant -1 : i32
    %301 = vector.broadcast %c-1_i32_72 : i32 to vector<2x8x128xi32>
    %302 = arith.select %299, %301, %295 : vector<2x8x128xi1>, vector<2x8x128xi32>
    %cst_73 = arith.constant dense<-2147483648> : vector<2x8xi32>
    %303 = vector.multi_reduction <maxsi>, %302, %cst_73 [2] : vector<2x8x128xi32> to vector<2x8xi32>
    %304 = vector.shape_cast %303 : vector<2x8xi32> to vector<2x8x1xi32>
    %305 = vector.broadcast %304 : vector<2x8x1xi32> to vector<2x8x128xi32>
    %306 = arith.cmpi eq, %302, %305 : vector<2x8x128xi32>
    %307 = arith.ori %300, %306 : vector<2x8x128xi1>
    %c-1_i32_74 = arith.constant -1 : i32
    %308 = vector.broadcast %c-1_i32_74 : i32 to vector<2x8x128xi32>
    %309 = arith.select %306, %308, %302 : vector<2x8x128xi1>, vector<2x8x128xi32>
    %cst_75 = arith.constant dense<-2147483648> : vector<2x8xi32>
    %310 = vector.multi_reduction <maxsi>, %309, %cst_75 [2] : vector<2x8x128xi32> to vector<2x8xi32>
    %311 = vector.shape_cast %310 : vector<2x8xi32> to vector<2x8x1xi32>
    %312 = vector.broadcast %311 : vector<2x8x1xi32> to vector<2x8x128xi32>
    %313 = arith.cmpi eq, %309, %312 : vector<2x8x128xi32>
    %314 = arith.ori %307, %313 : vector<2x8x128xi1>
    %c-1_i32_76 = arith.constant -1 : i32
    %315 = vector.broadcast %c-1_i32_76 : i32 to vector<2x8x128xi32>
    %316 = arith.select %313, %315, %309 : vector<2x8x128xi1>, vector<2x8x128xi32>
    %cst_77 = arith.constant dense<-2147483648> : vector<2x8xi32>
    %317 = vector.multi_reduction <maxsi>, %316, %cst_77 [2] : vector<2x8x128xi32> to vector<2x8xi32>
    %318 = vector.shape_cast %317 : vector<2x8xi32> to vector<2x8x1xi32>
    %319 = vector.broadcast %318 : vector<2x8x1xi32> to vector<2x8x128xi32>
    %320 = arith.cmpi eq, %316, %319 : vector<2x8x128xi32>
    %321 = arith.ori %314, %320 : vector<2x8x128xi1>
    %c-1_i32_78 = arith.constant -1 : i32
    %322 = vector.broadcast %c-1_i32_78 : i32 to vector<2x8x128xi32>
    %323 = arith.select %320, %322, %316 : vector<2x8x128xi1>, vector<2x8x128xi32>
    %cst_79 = arith.constant dense<-2147483648> : vector<2x8xi32>
    %324 = vector.multi_reduction <maxsi>, %323, %cst_79 [2] : vector<2x8x128xi32> to vector<2x8xi32>
    %325 = vector.shape_cast %324 : vector<2x8xi32> to vector<2x8x1xi32>
    %326 = vector.broadcast %325 : vector<2x8x1xi32> to vector<2x8x128xi32>
    %327 = arith.cmpi eq, %323, %326 : vector<2x8x128xi32>
    %328 = arith.ori %321, %327 : vector<2x8x128xi1>
    %c-1_i32_80 = arith.constant -1 : i32
    %329 = vector.broadcast %c-1_i32_80 : i32 to vector<2x8x128xi32>
    %330 = arith.select %327, %329, %323 : vector<2x8x128xi1>, vector<2x8x128xi32>
    %cst_81 = arith.constant dense<-2147483648> : vector<2x8xi32>
    %331 = vector.multi_reduction <maxsi>, %330, %cst_81 [2] : vector<2x8x128xi32> to vector<2x8xi32>
    %332 = vector.shape_cast %331 : vector<2x8xi32> to vector<2x8x1xi32>
    %333 = vector.broadcast %332 : vector<2x8x1xi32> to vector<2x8x128xi32>
    %334 = arith.cmpi eq, %330, %333 : vector<2x8x128xi32>
    %335 = arith.ori %328, %334 : vector<2x8x128xi1>
    %c-1_i32_82 = arith.constant -1 : i32
    %336 = vector.broadcast %c-1_i32_82 : i32 to vector<2x8x128xi32>
    %337 = arith.select %334, %336, %330 : vector<2x8x128xi1>, vector<2x8x128xi32>
    %cst_83 = arith.constant dense<-2147483648> : vector<2x8xi32>
    %338 = vector.multi_reduction <maxsi>, %337, %cst_83 [2] : vector<2x8x128xi32> to vector<2x8xi32>
    %339 = vector.shape_cast %338 : vector<2x8xi32> to vector<2x8x1xi32>
    %340 = vector.broadcast %339 : vector<2x8x1xi32> to vector<2x8x128xi32>
    %341 = arith.cmpi eq, %337, %340 : vector<2x8x128xi32>
    %342 = arith.ori %335, %341 : vector<2x8x128xi1>
    %c-1_i32_84 = arith.constant -1 : i32
    %343 = vector.broadcast %c-1_i32_84 : i32 to vector<2x8x128xi32>
    %344 = arith.select %341, %343, %337 : vector<2x8x128xi1>, vector<2x8x128xi32>
    %cst_85 = arith.constant dense<-2147483648> : vector<2x8xi32>
    %345 = vector.multi_reduction <maxsi>, %344, %cst_85 [2] : vector<2x8x128xi32> to vector<2x8xi32>
    %346 = vector.shape_cast %345 : vector<2x8xi32> to vector<2x8x1xi32>
    %347 = vector.broadcast %346 : vector<2x8x1xi32> to vector<2x8x128xi32>
    %348 = arith.cmpi eq, %344, %347 : vector<2x8x128xi32>
    %349 = arith.ori %342, %348 : vector<2x8x128xi1>
    %350 = vector.broadcast %263 : vector<2x8x1xi1> to vector<2x8x128xi1>
    %351 = arith.andi %349, %350 : vector<2x8x128xi1>
    %352 = arith.andi %351, %40 : vector<2x8x128xi1>
    %353 = arith.extui %352 : vector<2x8x128xi1> to vector<2x8x128xi32>
    %354 = arith.sitofp %353 : vector<2x8x128xi32> to vector<2x8x128xf32>
    %cst_86 = arith.constant dense<0.000000e+00> : vector<2x128xf32>
    %355 = vector.multi_reduction <add>, %354, %cst_86 [1] : vector<2x8x128xf32> to vector<2x128xf32>
    %356 = vector.shape_cast %355 : vector<2x128xf32> to vector<2x1x128xf32>
    %cst_87 = arith.constant 1.000000e+00 : f32
    %357 = vector.broadcast %cst_87 : f32 to vector<2x1x128xf32>
    %358 = arith.cmpf ogt, %356, %357 : vector<2x1x128xf32>
    %c7_i32_88 = arith.constant 7 : i32
    %359 = vector.broadcast %c7_i32_88 : i32 to vector<1x8x128xi32>
    %360 = arith.subi %359, %14 : vector<1x8x128xi32>
    %361 = tpu.bitcast %241 : vector<2x8x128xf32> -> vector<2x8x128xi32>
    %c3_i32 = arith.constant 3 : i32
    %362 = vector.broadcast %c3_i32 : i32 to vector<2x8x128xi32>
    %363 = arith.shrsi %361, %362 : vector<2x8x128xi32>
    %c3_i32_89 = arith.constant 3 : i32
    %364 = vector.broadcast %c3_i32_89 : i32 to vector<2x8x128xi32>
    %365 = arith.shli %363, %364 : vector<2x8x128xi32>
    %366 = vector.broadcast %360 : vector<1x8x128xi32> to vector<2x8x128xi32>
    %367 = arith.ori %365, %366 : vector<2x8x128xi32>
    %cst_90 = arith.constant dense<-2147483648> : vector<2x128xi32>
    %368 = vector.multi_reduction <maxsi>, %367, %cst_90 [1] : vector<2x8x128xi32> to vector<2x128xi32>
    %369 = vector.shape_cast %368 : vector<2x128xi32> to vector<2x1x128xi32>
    %c7_i32_91 = arith.constant 7 : i32
    %370 = vector.broadcast %c7_i32_91 : i32 to vector<2x1x128xi32>
    %371 = arith.andi %369, %370 : vector<2x1x128xi32>
    %c7_i32_92 = arith.constant 7 : i32
    %372 = vector.broadcast %c7_i32_92 : i32 to vector<2x1x128xi32>
    %373 = arith.subi %372, %371 : vector<2x1x128xi32>
    %cst_93 = arith.constant dense<true> : vector<2x1x128xi1>
    %374 = arith.xori %358, %cst_93 : vector<2x1x128xi1>
    %375 = vector.broadcast %14 : vector<1x8x128xi32> to vector<2x8x128xi32>
    %376 = vector.broadcast %373 : vector<2x1x128xi32> to vector<2x8x128xi32>
    %377 = arith.cmpi eq, %375, %376 : vector<2x8x128xi32>
    %378 = vector.broadcast %374 : vector<2x1x128xi1> to vector<2x8x128xi1>
    %379 = arith.ori %378, %377 : vector<2x8x128xi1>
    %380 = arith.andi %352, %379 : vector<2x8x128xi1>
    %381 = arith.extui %380 : vector<2x8x128xi1> to vector<2x8x128xi32>
    %382 = arith.sitofp %381 : vector<2x8x128xi32> to vector<2x8x128xf32>
    %c0_i32 = arith.constant 0 : i32
    %c65535_i32 = arith.constant 65535 : i32
    %383 = vector.broadcast %c0_i32 : i32 to vector<2x8x1xi32>
    %384 = arith.maxsi %383, %11 : vector<2x8x1xi32>
    %385 = vector.broadcast %c65535_i32 : i32 to vector<2x8x1xi32>
    %386 = arith.minsi %385, %384 : vector<2x8x1xi32>
    %387 = arith.extui %380 : vector<2x8x128xi1> to vector<2x8x128xi32>
    %c19_i32 = arith.constant 19 : i32
    %388 = vector.broadcast %c19_i32 : i32 to vector<2x8x128xi32>
    %389 = arith.shli %387, %388 : vector<2x8x128xi32>
    %c16_i32 = arith.constant 16 : i32
    %390 = vector.broadcast %c16_i32 : i32 to vector<1x8x128xi32>
    %391 = arith.shli %360, %390 : vector<1x8x128xi32>
    %392 = vector.broadcast %391 : vector<1x8x128xi32> to vector<2x8x128xi32>
    %393 = arith.ori %389, %392 : vector<2x8x128xi32>
    %394 = vector.broadcast %386 : vector<2x8x1xi32> to vector<2x8x128xi32>
    %395 = arith.ori %393, %394 : vector<2x8x128xi32>
    %cst_94 = arith.constant dense<-2147483648> : vector<2x128xi32>
    %396 = vector.multi_reduction <maxsi>, %395, %cst_94 [1] : vector<2x8x128xi32> to vector<2x128xi32>
    %397 = vector.shape_cast %396 : vector<2x128xi32> to vector<2x1x128xi32>
    %c65535_i32_95 = arith.constant 65535 : i32
    %398 = vector.broadcast %c65535_i32_95 : i32 to vector<2x1x128xi32>
    %399 = arith.andi %397, %398 : vector<2x1x128xi32>
    %c16_i32_96 = arith.constant 16 : i32
    %400 = vector.broadcast %c16_i32_96 : i32 to vector<2x1x128xi32>
    %401 = arith.shrsi %397, %400 : vector<2x1x128xi32>
    %c7_i32_97 = arith.constant 7 : i32
    %402 = vector.broadcast %c7_i32_97 : i32 to vector<2x1x128xi32>
    %403 = arith.andi %401, %402 : vector<2x1x128xi32>
    %c7_i32_98 = arith.constant 7 : i32
    %404 = vector.broadcast %c7_i32_98 : i32 to vector<2x1x128xi32>
    %405 = arith.subi %404, %403 : vector<2x1x128xi32>
    %c19_i32_99 = arith.constant 19 : i32
    %406 = vector.broadcast %c19_i32_99 : i32 to vector<2x1x128xi32>
    %407 = arith.shrsi %397, %406 : vector<2x1x128xi32>
    %408 = vector.broadcast %14 : vector<1x8x128xi32> to vector<2x8x128xi32>
    %409 = vector.broadcast %405 : vector<2x1x128xi32> to vector<2x8x128xi32>
    %410 = arith.cmpi eq, %408, %409 : vector<2x8x128xi32>
    %411 = arith.extui %410 : vector<2x8x128xi1> to vector<2x8x128xi32>
    %412 = arith.sitofp %411 : vector<2x8x128xi32> to vector<2x8x128xf32>
    %413 = vector.extract_strided_slice %3 {offsets = [0, 0, 0], sizes = [2, 8, 1], strides = [1, 1, 1]} : vector<2x8x8xf32> to vector<2x8x1xf32>
    %414 = vector.broadcast %413 : vector<2x8x1xf32> to vector<2x8x128xf32>
    %415 = arith.mulf %414, %412 : vector<2x8x128xf32>
    %cst_100 = arith.constant dense<0.000000e+00> : vector<2x128xf32>
    %416 = vector.multi_reduction <add>, %415, %cst_100 [1] : vector<2x8x128xf32> to vector<2x128xf32>
    %417 = vector.shape_cast %416 : vector<2x128xf32> to vector<2x1x128xf32>
    %418 = vector.extract_strided_slice %3 {offsets = [0, 0, 1], sizes = [2, 8, 1], strides = [1, 1, 1]} : vector<2x8x8xf32> to vector<2x8x1xf32>
    %419 = vector.broadcast %418 : vector<2x8x1xf32> to vector<2x8x128xf32>
    %420 = arith.mulf %419, %412 : vector<2x8x128xf32>
    %cst_101 = arith.constant dense<0.000000e+00> : vector<2x128xf32>
    %421 = vector.multi_reduction <add>, %420, %cst_101 [1] : vector<2x8x128xf32> to vector<2x128xf32>
    %422 = vector.shape_cast %421 : vector<2x128xf32> to vector<2x1x128xf32>
    %423 = vector.extract_strided_slice %3 {offsets = [0, 0, 2], sizes = [2, 8, 1], strides = [1, 1, 1]} : vector<2x8x8xf32> to vector<2x8x1xf32>
    %424 = vector.broadcast %423 : vector<2x8x1xf32> to vector<2x8x128xf32>
    %425 = arith.mulf %424, %412 : vector<2x8x128xf32>
    %cst_102 = arith.constant dense<0.000000e+00> : vector<2x128xf32>
    %426 = vector.multi_reduction <add>, %425, %cst_102 [1] : vector<2x8x128xf32> to vector<2x128xf32>
    %427 = vector.shape_cast %426 : vector<2x128xf32> to vector<2x1x128xf32>
    %428 = vector.extract_strided_slice %3 {offsets = [0, 0, 3], sizes = [2, 8, 1], strides = [1, 1, 1]} : vector<2x8x8xf32> to vector<2x8x1xf32>
    %429 = vector.broadcast %428 : vector<2x8x1xf32> to vector<2x8x128xf32>
    %430 = arith.mulf %429, %412 : vector<2x8x128xf32>
    %cst_103 = arith.constant dense<0.000000e+00> : vector<2x128xf32>
    %431 = vector.multi_reduction <add>, %430, %cst_103 [1] : vector<2x8x128xf32> to vector<2x128xf32>
    %432 = vector.shape_cast %431 : vector<2x128xf32> to vector<2x1x128xf32>
    %433 = tpu.concatenate %417, %422, %427, %432 in 1 : vector<2x1x128xf32>, vector<2x1x128xf32>, vector<2x1x128xf32>, vector<2x1x128xf32> -> vector<2x4x128xf32>
    %434 = arith.mulf %245, %382 : vector<2x8x128xf32>
    %cst_104 = arith.constant dense<0xFF800000> : vector<2x8xf32>
    %435 = vector.multi_reduction <maximumf>, %434, %cst_104 [2] : vector<2x8x128xf32> to vector<2x8xf32>
    %436 = vector.shape_cast %435 : vector<2x8xf32> to vector<2x8x1xf32>
    %437 = arith.mulf %241, %382 : vector<2x8x128xf32>
    %cst_105 = arith.constant dense<0xFF800000> : vector<2x8xf32>
    %438 = vector.multi_reduction <maximumf>, %437, %cst_105 [2] : vector<2x8x128xf32> to vector<2x8xf32>
    %439 = vector.shape_cast %438 : vector<2x8xf32> to vector<2x8x1xf32>
    %cst_106 = arith.constant 9.99999971E-10 : f32
    %440 = vector.broadcast %cst_106 : f32 to vector<2x8x1xf32>
    %441 = arith.addf %436, %440 : vector<2x8x1xf32>
    %442 = arith.divf %439, %441 : vector<2x8x1xf32>
    %443 = vector.broadcast %442 : vector<2x8x1xf32> to vector<2x8x128xf32>
    %444 = arith.mulf %434, %443 : vector<2x8x128xf32>
    %cst_107 = arith.constant dense<0xFF800000> : vector<2x128xf32>
    %445 = vector.multi_reduction <maximumf>, %444, %cst_107 [1] : vector<2x8x128xf32> to vector<2x128xf32>
    %446 = vector.shape_cast %445 : vector<2x128xf32> to vector<2x1x128xf32>
    %c0_i32_108 = arith.constant 0 : i32
    %447 = vector.broadcast %c0_i32_108 : i32 to vector<2x1x128xi32>
    %448 = arith.cmpi sgt, %407, %447 : vector<2x1x128xi32>
    %cst_109 = arith.constant 0.000000e+00 : f32
    %449 = vector.broadcast %cst_109 : f32 to vector<2x1x128xf32>
    %450 = arith.select %448, %446, %449 : vector<2x1x128xi1>, vector<2x1x128xf32>
    %451 = vector.broadcast %450 : vector<2x1x128xf32> to vector<2x8x128xf32>
    %452 = arith.mulf %412, %451 : vector<2x8x128xf32>
    %453 = tpu.transpose %452, [0, 2, 1] : vector<2x8x128xf32> -> vector<2x128x8xf32>
    "tpu.trace_start"() <{level = 10 : i32, message = "bag,bgc->bac"}> : () -> ()
    %cst_110 = arith.constant dense<0.000000e+00> : vector<2x128x20xf32>
    %454 = tpu.matmul %453, %45, %cst_110 {dimension_numbers = #tpu.dot_dimension_numbers<[2], [1], [1], [2], [0, 0, 0, 1, 1, 2], [0], [0]>, precision = #tpu.contract_precision<fp32>} : vector<2x128x8xf32>, vector<2x8x20xf32>, vector<2x128x20xf32> -> vector<2x128x20xf32>
    "tpu.trace_stop"() : () -> ()
    %c0_111 = arith.constant 0 : index
    %c0_112 = arith.constant 0 : index
    %c0_113 = arith.constant 0 : index
    %455 = vector.load %arg5[%c0_111, %c0_112, %c0_113] : memref<2x128x20xf32, #tpu.memory_space<vmem>>, vector<2x128x20xf32>
    tpu.vector_store %arg5[%c0_111, %c0_112, %c0_113], %454 {strides = array<i32>} : memref<2x128x20xf32, #tpu.memory_space<vmem>>, vector<2x128x20xf32>,
    %456 = tpu.bitcast %433 : vector<2x4x128xf32> -> vector<2x4x128xi32>
    %c0_i32_114 = arith.constant 0 : i32
    %457 = vector.broadcast %c0_i32_114 : i32 to vector<2x1x128xi32>
    %458 = tpu.concatenate %399, %407, %405, %456, %457 in 1 : vector<2x1x128xi32>, vector<2x1x128xi32>, vector<2x1x128xi32>, vector<2x4x128xi32>, vector<2x1x128xi32> -> vector<2x8x128xi32>
    %c0_115 = arith.constant 0 : index
    %c0_116 = arith.constant 0 : index
    %c0_117 = arith.constant 0 : index
    %459 = vector.load %arg6[%c0_115, %c0_116, %c0_117] : memref<2x8x128xi32, #tpu.memory_space<vmem>>, vector<2x8x128xi32>
    tpu.vector_store %arg6[%c0_115, %c0_116, %c0_117], %458 {strides = array<i32>} : memref<2x8x128xi32, #tpu.memory_space<vmem>>, vector<2x8x128xi32>,
    return
  }
  func.func @transform_0(%arg0: i32) -> (i32, i32, i32) {
    %c0_i32 = arith.constant 0 : i32
    %c0_i32_0 = arith.constant 0 : i32
    %c0_i32_1 = arith.constant 0 : i32
    return %arg0, %c0_i32, %c0_i32_0 : i32, i32, i32
  }
  func.func @transform_1(%arg0: i32) -> (i32, i32, i32) {
    %c0_i32 = arith.constant 0 : i32
    %c0_i32_0 = arith.constant 0 : i32
    %c0_i32_1 = arith.constant 0 : i32
    return %arg0, %c0_i32, %c0_i32_0 : i32, i32, i32
  }
  func.func @transform_2(%arg0: i32) -> (i32, i32) {
    %c0_i32 = arith.constant 0 : i32
    %c0_i32_0 = arith.constant 0 : i32
    %c0_i32_1 = arith.constant 0 : i32
    return %c0_i32, %c0_i32_0 : i32, i32
  }
  func.func @transform_3(%arg0: i32) -> (i32, i32, i32) {
    %c0_i32 = arith.constant 0 : i32
    %c0_i32_0 = arith.constant 0 : i32
    %c0_i32_1 = arith.constant 0 : i32
    return %arg0, %c0_i32, %c0_i32_0 : i32, i32, i32
  }
  func.func @transform_4(%arg0: i32) -> (i32, i32, i32) {
    %c0_i32 = arith.constant 0 : i32
    %c0_i32_0 = arith.constant 0 : i32
    %c0_i32_1 = arith.constant 0 : i32
    return %arg0, %c0_i32, %c0_i32_0 : i32, i32, i32
  }
  func.func @transform_5(%arg0: i32) -> (i32, i32, i32) {
    %c0_i32 = arith.constant 0 : i32
    %c0_i32_0 = arith.constant 0 : i32
    %c0_i32_1 = arith.constant 0 : i32
    return %arg0, %c0_i32, %c0_i32_0 : i32, i32, i32
  }
}

</mosaic_0001>

<llo_original>
// kernel: tpu_custom_call.1
$region0: #{tpu_custom_call.1}
  #allocation0 [shape = 'u32[]', space=smem, size = 0x4, offset = 0x4, fixed_abs, tag = 'smem constant byte address 0x4 - core index']
  #allocation1 [shape = 'u32[144,128]{1,0:T(1,128)}', space=vmem, size = 0x12000, scoped, tag = 'internal scratch']
  %s0 = inlined_call_operand.vmem [shape: f32[4,128,20], index: 0, kind: input, shape index: {}]
  %s1 = inlined_call_operand.vmem [shape: f32[4,4,128], index: 1, kind: input, shape index: {}]
  %s2 = inlined_call_operand.vmem [shape: f32[2,128], index: 2, kind: input, shape index: {}]
  %s3 = inlined_call_operand.vmem [shape: f32[4,8,8], index: 3, kind: input, shape index: {}]
  %s4 = inlined_call_operand.vmem [shape: f32[4,128,20], index: 4, kind: output, shape index: {0}]
  %s5 = inlined_call_operand.hbm [shape: s32[4,8,128], index: 5, kind: output, shape index: {1}]
  %6 = xla_tuple %s4, %s5
  %s7 = sld [smem:[#allocation0]]
  $region57: #{tpu_custom_call.1} parent=0
    _
  %s9 = ssub.s32 1, %s7
  %s10 = scalar_select 0, %s9, %s7
  $region1: #{tpu_custom_call.1} parent=0
    #allocation2 [shape = 'u8[16384]{0}', space=vmem, size = 0x4000, scoped, tag = 'output window, operand 1']
    #allocation3 [shape = 's32[2]{0}', space=sflag, size = 0x8, scoped, tag = 'scoped memory for tpu_custom_call.1']
    %11 = vsyncpa [#allocation3], 0
    %s12 = scalar_lea.sflag [#allocation3], 1
    %13 = vsyncpa %s12, 0
    loop: start=0, step=1, limit=4
    $region2: #{tpu_custom_call.1} parent=1 // loop_pre_header
      _
    $region3: #{tpu_custom_call.1} parent=1 // loop_header
      %s15 = sphi 0, %s19
      %p16 = scmp.ge.s32.totalorder %s15, 4
      %s25 = sphi 0, %s27
      %s28 = sphi 0, %s25
      %s29 = sphi 0, %s28
      %s45 = sphi 0, %s29
      %s51 = sphi 0, %s53
      %s54 = sphi 0, %s51
      %s55 = sphi 0, %s54
      %s71 = sphi 0, %s55
      %s75 = sphi 0, %s75
      %s77 = sphi 0, %s75
      %s78 = sphi 0, %s77
      %s92 = sphi 0, %s78
      %s98 = sphi 0, %s100
      %s101 = sphi 0, %s98
      %s102 = sphi 0, %s101
      %s118 = sphi 0, %s102
      %s124 = sphi 0, %s126
      %s127 = sphi 0, %s124
      %s128 = sphi 0, %s127
      %s144 = sphi 0, %s128
      %s150 = sphi 0, %s152
      %s153 = sphi 0, %s150
      %s154 = sphi 0, %s153
      %s170 = sphi 0, %s154
    $region4: #{tpu_custom_call.1} parent=1 // loop_header_branch
      %18 = sbr.rel (%p16) target = $region8
    $region5: #{tpu_custom_call.1} parent=1 // loop_body
      %s20 = ssub.s32 %s15, 1
      %s21 = ssub.s32 %s15, 2
      %s22 = sadd.s32 %s15, 1
      %s23 = ssub.s32 %s15, %s22
      %p24 = scmp.eq.s32.totalorder %s23, 0
      %s26 = sadd.s32 %s25, 1
      %s27 = scalar_select %p24, %s25, %s26
      %p30 = pneg %p24
      %p31 = scmp.eq.s32.totalorder %s15, 1
      %p32 = por %p30, %p31
      %p33 = scmp.ne.s32.totalorder %s25, %s28
      %p34 = scmp.eq.s32.totalorder %s15, 0
      %p35 = por %p33, %p34
      %p36 = scmp.ne.s32.totalorder %s25, %s28
      %p37 = scmp.eq.s32.totalorder %s20, 1
      %p38 = por %p36, %p37
      %p39 = scmp.ne.s32.totalorder %s28, %s29
      %p40 = scmp.eq.s32.totalorder %s20, 0
      %p41 = por %p39, %p40
      %p42 = scmp.ne.s32.totalorder %s28, %s29
      %p43 = scmp.eq.s32.totalorder %s21, 1
      %p44 = por %p42, %p43
      %p46 = scmp.ne.s32.totalorder %s29, %s45
      %p47 = scmp.eq.s32.totalorder %s21, 0
      %p48 = por %p46, %p47
      %s49 = ssub.s32 %s15, %s22
      %p50 = scmp.eq.s32.totalorder %s49, 0
      %s52 = sadd.s32 %s51, 1
      %s53 = scalar_select %p50, %s51, %s52
      %p56 = pneg %p50
      %p57 = scmp.eq.s32.totalorder %s15, 1
      %p58 = por %p56, %p57
      %p59 = scmp.ne.s32.totalorder %s51, %s54
      %p60 = scmp.eq.s32.totalorder %s15, 0
      %p61 = por %p59, %p60
      %p62 = scmp.ne.s32.totalorder %s51, %s54
      %p63 = scmp.eq.s32.totalorder %s20, 1
      %p64 = por %p62, %p63
      %p65 = scmp.ne.s32.totalorder %s54, %s55
      %p66 = scmp.eq.s32.totalorder %s20, 0
      %p67 = por %p65, %p66
      %p68 = scmp.ne.s32.totalorder %s54, %s55
      %p69 = scmp.eq.s32.totalorder %s21, 1
      %p70 = por %p68, %p69
      %p72 = scmp.ne.s32.totalorder %s55, %s71
      %p73 = scmp.eq.s32.totalorder %s21, 0
      %p74 = por %p72, %p73
      %s76 = sadd.s32 %s75, 1
      %p79 = scmp.eq.s32.totalorder %s15, 1
      %p80 = scmp.ne.s32.totalorder %s75, %s77
      %p81 = scmp.eq.s32.totalorder %s15, 0
      %p82 = por %p80, %p81
      %p83 = scmp.ne.s32.totalorder %s75, %s77
      %p84 = scmp.eq.s32.totalorder %s20, 1
      %p85 = por %p83, %p84
      %p86 = scmp.ne.s32.totalorder %s77, %s78
      %p87 = scmp.eq.s32.totalorder %s20, 0
      %p88 = por %p86, %p87
      %p89 = scmp.ne.s32.totalorder %s77, %s78
      %p90 = scmp.eq.s32.totalorder %s21, 1
      %p91 = por %p89, %p90
      %p93 = scmp.ne.s32.totalorder %s78, %s92
      %p94 = scmp.eq.s32.totalorder %s21, 0
      %p95 = por %p93, %p94
      %s96 = ssub.s32 %s15, %s22
      %p97 = scmp.eq.s32.totalorder %s96, 0
      %s99 = sadd.s32 %s98, 1
      %s100 = scalar_select %p97, %s98, %s99
      %p103 = pneg %p97
      %p104 = scmp.eq.s32.totalorder %s15, 1
      %p105 = por %p103, %p104
      %p106 = scmp.ne.s32.totalorder %s98, %s101
      %p107 = scmp.eq.s32.totalorder %s15, 0
      %p108 = por %p106, %p107
      %p109 = scmp.ne.s32.totalorder %s98, %s101
      %p110 = scmp.eq.s32.totalorder %s20, 1
      %p111 = por %p109, %p110
      %p112 = scmp.ne.s32.totalorder %s101, %s102
      %p113 = scmp.eq.s32.totalorder %s20, 0
      %p114 = por %p112, %p113
      %p115 = scmp.ne.s32.totalorder %s101, %s102
      %p116 = scmp.eq.s32.totalorder %s21, 1
      %p117 = por %p115, %p116
      %p119 = scmp.ne.s32.totalorder %s102, %s118
      %p120 = scmp.eq.s32.totalorder %s21, 0
      %p121 = por %p119, %p120
      %s122 = ssub.s32 %s15, %s22
      %p123 = scmp.eq.s32.totalorder %s122, 0
      %s125 = sadd.s32 %s124, 1
      %s126 = scalar_select %p123, %s124, %s125
      %p129 = pneg %p123
      %p130 = scmp.eq.s32.totalorder %s15, 1
      %p131 = por %p129, %p130
      %p132 = scmp.ne.s32.totalorder %s124, %s127
      %p133 = scmp.eq.s32.totalorder %s15, 0
      %p134 = por %p132, %p133
      %p135 = scmp.ne.s32.totalorder %s124, %s127
      %p136 = scmp.eq.s32.totalorder %s20, 1
      %p137 = por %p135, %p136
      %p138 = scmp.ne.s32.totalorder %s127, %s128
      %p139 = scmp.eq.s32.totalorder %s20, 0
      %p140 = por %p138, %p139
      %p141 = scmp.ne.s32.totalorder %s127, %s128
      %p142 = scmp.eq.s32.totalorder %s21, 1
      %p143 = por %p141, %p142
      %p145 = scmp.ne.s32.totalorder %s128, %s144
      %p146 = scmp.eq.s32.totalorder %s21, 0
      %p147 = por %p145, %p146
      %s148 = ssub.s32 %s15, %s22
      %p149 = scmp.eq.s32.totalorder %s148, 0
      %s151 = sadd.s32 %s150, 1
      %s152 = scalar_select %p149, %s150, %s151
      %p155 = pneg %p149
      %p156 = scmp.eq.s32.totalorder %s15, 1
      %p157 = por %p155, %p156
      %p158 = scmp.ne.s32.totalorder %s150, %s153
      %p159 = scmp.eq.s32.totalorder %s15, 0
      %p160 = por %p158, %p159
      %p161 = scmp.ne.s32.totalorder %s150, %s153
      %p162 = scmp.eq.s32.totalorder %s20, 1
      %p163 = por %p161, %p162
      %p164 = scmp.ne.s32.totalorder %s153, %s154
      %p165 = scmp.eq.s32.totalorder %s20, 0
      %p166 = por %p164, %p165
      %p167 = scmp.ne.s32.totalorder %s153, %s154
      %p168 = scmp.eq.s32.totalorder %s21, 1
      %p169 = por %p167, %p168
      %p171 = scmp.ne.s32.totalorder %s154, %s170
      %p172 = scmp.eq.s32.totalorder %s21, 0
      %p173 = por %p171, %p172
      %p174 = scmp.le.s32.totalorder 1, %s15
      %p175 = scmp.lt.s32.totalorder %s15, 3
      %p176 = pnand %p174, %p175
      %p177 = pneg %p176
      // Predicated region
      $region9: #{tpu_custom_call.1} parent=5 // pred_check
        _
      $region10: #{tpu_custom_call.1} parent=5 // pred_check_branch
        %179 = sbr.rel (%p176) target = $region12
      $region11: #{tpu_custom_call.1} parent=5 // pred_region
        %s180 = ssub.s32 %s15, 1
        // Predicated region
        $region13: #{tpu_custom_call.1} parent=11 // pred_check
          %p181 = pneg %p88
        $region14: #{tpu_custom_call.1} parent=11 // pred_check_branch
          %183 = sbr.rel (%p181) target = $region16
        $region15: #{tpu_custom_call.1} parent=11 // pred_region
          _
        $region16: #{tpu_custom_call.1} parent=11 // pred_fallthru
          _
      $region12: #{tpu_custom_call.1} parent=5 // pred_fallthru
        _
      %p184 = scmp.lt.s32.totalorder %s15, 2
      // Predicated region
      $region17: #{tpu_custom_call.1} parent=5 // pred_check
        %p185 = pneg %p184
      $region18: #{tpu_custom_call.1} parent=5 // pred_check_branch
        %187 = sbr.rel (%p185) target = $region20
      $region19: #{tpu_custom_call.1} parent=5 // pred_region
        // Predicated region
        $region21: #{tpu_custom_call.1} parent=19 // pred_check
          %p188 = pneg %p35
        $region22: #{tpu_custom_call.1} parent=19 // pred_check_branch
          %190 = sbr.rel (%p188) target = $region24
        $region23: #{tpu_custom_call.1} parent=19 // pred_region
          %s191 = smul.u32 2, %s15
          %p192 = scmp.lt.s32.totalorder %s191, 3
          %s193 = scalar_select %p192, %s191, 3
          %s194 = smul.addr %s193, 16
          %s195 = smul.addr %s194, 8
          %s196 = scalar_lea.vmem %s0, %s195
          %s197 = smul.u32 2, %s15
        $region24: #{tpu_custom_call.1} parent=19 // pred_fallthru
          _
        // Predicated region
        $region25: #{tpu_custom_call.1} parent=19 // pred_check
          %p198 = pneg %p61
        $region26: #{tpu_custom_call.1} parent=19 // pred_check_branch
          %200 = sbr.rel (%p198) target = $region28
        $region27: #{tpu_custom_call.1} parent=19 // pred_region
          %s201 = smul.u32 2, %s15
          %p202 = scmp.lt.s32.totalorder %s201, 3
          %s203 = scalar_select %p202, %s201, 3
          %s204 = smul.addr %s203, 4
          %s205 = scalar_lea.vmem %s1, %s204
          %s206 = smul.u32 2, %s15
        $region28: #{tpu_custom_call.1} parent=19 // pred_fallthru
          _
        // Predicated region
        $region29: #{tpu_custom_call.1} parent=19 // pred_check
          %p207 = pneg %p108
        $region30: #{tpu_custom_call.1} parent=19 // pred_check_branch
          %209 = sbr.rel (%p207) target = $region32
        $region31: #{tpu_custom_call.1} parent=19 // pred_region
          %s210 = smul.u32 2, %s15
          %p211 = scmp.lt.s32.totalorder %s210, 3
          %s212 = scalar_select %p211, %s210, 3
          %s213 = smul.addr %s212, 8
          %s214 = scalar_lea.vmem %s3, %s213
          %s215 = smul.u32 2, %s15
        $region32: #{tpu_custom_call.1} parent=19 // pred_fallthru
          _
      $region20: #{tpu_custom_call.1} parent=5 // pred_fallthru
        _
      %p216 = scmp.le.s32.totalorder 1, %s15
      %p217 = scmp.lt.s32.totalorder %s15, 3
      %p218 = pnand %p216, %p217
      %p219 = pneg %p218
      // Predicated region
      $region33: #{tpu_custom_call.1} parent=5 // pred_check
        _
      $region34: #{tpu_custom_call.1} parent=5 // pred_check_branch
        %221 = sbr.rel (%p218) target = $region36
      $region35: #{tpu_custom_call.1} parent=5 // pred_region
        %s222 = ssub.s32 %s15, 1
        %s223 = smul.u32 2, %s20
        %p224 = scmp.lt.s32.totalorder %s223, 3
        %s225 = scalar_select %p224, %s223, 3
        %s226 = smul.addr %s225, 16
        %s227 = smul.addr %s226, 8
        %s228 = scalar_lea.vmem %s0, %s227
        %p229 = pneg %p41
        %p230 = pneg %p38
        %s231 = smul.u32 2, %s20
        %p232 = scmp.lt.s32.totalorder %s231, 3
        %s233 = scalar_select %p232, %s231, 3
        %s234 = smul.addr %s233, 4
        %s235 = scalar_lea.vmem %s1, %s234
        %p236 = pneg %p67
        %p237 = pneg %p64
        %p238 = pneg %p88
        %p239 = pneg %p85
        %s240 = smul.u32 2, %s20
        %p241 = scmp.lt.s32.totalorder %s240, 3
        %s242 = scalar_select %p241, %s240, 3
        %s243 = smul.addr %s242, 8
        %s244 = scalar_lea.vmem %s3, %s243
        %p245 = pneg %p114
        %p246 = pneg %p111
        %p247 = pneg %p140
        %p248 = pneg %p137
        %s249 = smul.u32 2, %s20
        %p250 = scmp.lt.s32.totalorder %s249, 3
        %s251 = scalar_select %p250, %s249, 3
        %s252 = smul.addr %s251, 16
        %s253 = smul.addr %s252, 8
        %s254 = scalar_lea.vmem %s4, %s253
        %p255 = pneg %p166
        %p256 = pneg %p163
        %s257 = sand.u32 %s153, 1
        %s258 = scalar_lea.sflag [#allocation3], %s257
        %s259 = sand.u32 %s153, 1
        %s260 = smul.addr %s259, 16
        %s261 = scalar_lea.vmem [#allocation2], %s260
        %s262 = smul.u32 2, %s20
        %p263 = scmp.lt.s32.totalorder %s262, 3
        %s264 = scalar_select %p263, %s262, 3
        %s265 = smul.addr %s264, 16
        %s266 = smul.addr %s265, 8
        %s267 = scalar_lea.vmem %s0, %s266
        %s268 = smul.u32 2, %s20
        %s269 = smul.u32 2, %s20
        %p270 = scmp.lt.s32.totalorder %s269, 3
        %s271 = scalar_select %p270, %s269, 3
        %s272 = smul.addr %s271, 4
        %s273 = scalar_lea.vmem %s1, %s272
        %s274 = smul.u32 2, %s20
        %s275 = smul.u32 2, %s20
        %p276 = scmp.lt.s32.totalorder %s275, 3
        %s277 = scalar_select %p276, %s275, 3
        %s278 = smul.addr %s277, 8
        %s279 = scalar_lea.vmem %s3, %s278
        %s280 = smul.u32 2, %s20
        %s281 = smul.u32 2, %s20
        %p282 = scmp.lt.s32.totalorder %s281, 3
        %s283 = scalar_select %p282, %s281, 3
        %s284 = smul.addr %s283, 16
        %s285 = smul.addr %s284, 8
        %s286 = scalar_lea.vmem %s4, %s285
        %s287 = smul.u32 2, %s20
        %s288 = smul.u32 2, %s20
        %v289 = vld [vmem:[%s267] sm:$0xff]
        %v290 = vld [vmem:[%s267 + $0x8] sm:$0xff]
        %v291 = vld [vmem:[%s267 + $0x10] sm:$0xff]
        %v292 = vld [vmem:[%s267 + $0x18] sm:$0xff]
        %v293 = vld [vmem:[%s267 + $0x20] sm:$0xff]
        %v294 = vld [vmem:[%s267 + $0x28] sm:$0xff]
        %v295 = vld [vmem:[%s267 + $0x30] sm:$0xff]
        %v296 = vld [vmem:[%s267 + $0x38] sm:$0xff]
        %v297 = vld [vmem:[%s267 + $0x40] sm:$0xff]
        %v298 = vld [vmem:[%s267 + $0x48] sm:$0xff]
        %v299 = vld [vmem:[%s267 + $0x50] sm:$0xff]
        %v300 = vld [vmem:[%s267 + $0x58] sm:$0xff]
        %v301 = vld [vmem:[%s267 + $0x60] sm:$0xff]
        %v302 = vld [vmem:[%s267 + $0x68] sm:$0xff]
        %v303 = vld [vmem:[%s267 + $0x70] sm:$0xff]
        %v304 = vld [vmem:[%s267 + $0x78] sm:$0xff]
        %v305 = vld [vmem:[%s267 + $0x80] sm:$0xff]
        %v306 = vld [vmem:[%s267 + $0x88] sm:$0xff]
        %v307 = vld [vmem:[%s267 + $0x90] sm:$0xff]
        %v308 = vld [vmem:[%s267 + $0x98] sm:$0xff]
        %v309 = vld [vmem:[%s267 + $0xa0] sm:$0xff]
        %v310 = vld [vmem:[%s267 + $0xa8] sm:$0xff]
        %v311 = vld [vmem:[%s267 + $0xb0] sm:$0xff]
        %v312 = vld [vmem:[%s267 + $0xb8] sm:$0xff]
        %v313 = vld [vmem:[%s267 + $0xc0] sm:$0xff]
        %v314 = vld [vmem:[%s267 + $0xc8] sm:$0xff]
        %v315 = vld [vmem:[%s267 + $0xd0] sm:$0xff]
        %v316 = vld [vmem:[%s267 + $0xd8] sm:$0xff]
        %v317 = vld [vmem:[%s267 + $0xe0] sm:$0xff]
        %v318 = vld [vmem:[%s267 + $0xe8] sm:$0xff]
        %v319 = vld [vmem:[%s267 + $0xf0] sm:$0xff]
        %v320 = vld [vmem:[%s267 + $0xf8] sm:$0xff]
        %v321 = vld [vmem:[%s273] sm:$0xf]
        %v322 = vld [vmem:[%s273 + $0x4] sm:$0xf]
        %v323 = vld [vmem:[%s2] sm:$0x3]
        %v324 = vld [vmem:[%s279] sm:$0xff]
        %v325 = vld [vmem:[%s279 + $0x8] sm:$0xff]
        %v326 = vcvt.f32.s32.to.zero.pseudo %v324
        %v327 = vcvt.f32.s32.to.zero.pseudo %v325
        %v328 = vlaneseq
        %v329 = vand.u32 %v328, 127
        %v330 = vlaneseq
        %v331 = vshrl.u32 %v330, 7
        %v332 = vlaneseq
        %v333 = vshrl.u32 %v332, 7
        %v334 = vsub.s32 0, %v333
        %v335 = vrot.slane %v323, %v334
        %337 = vset.pattern.permute.xlu0 0
        %338 = vperm.xlu0 %337, %v324
        %v339 = vpop.permute.xlu0 %338
        %342 = vset.pattern.permute.xlu0 0
        %343 = vperm.xlu0 %342, %v325
        %v344 = vpop.permute.xlu0 %343
        %v346 = vsub.f32 %v335, %v339
        %v347 = vsub.f32 %v335, %v344
        %v348 = vlaneseq
        %v349 = vshrl.u32 %v348, 7
        %v350 = vsub.s32 1, %v349
        %v351 = vrot.slane %v323, %v350
        %352 = vset.pattern.permute.xlu0 1
        %353 = vperm.xlu0 %352, %v324
        %v354 = vpop.permute.xlu0 %353
        %356 = vset.pattern.permute.xlu0 1
        %357 = vperm.xlu0 %356, %v325
        %v358 = vpop.permute.xlu0 %357
        %v360 = vsub.f32 %v351, %v354
        %v361 = vsub.f32 %v351, %v358
        %v362 = vmin.f32 %v346, %v360
        %v363 = vmin.f32 %v347, %v361
        %364 = vset.pattern.permute.xlu0 2
        %365 = vperm.xlu0 %364, %v324
        %v366 = vpop.permute.xlu0 %365
        %368 = vset.pattern.permute.xlu0 2
        %369 = vperm.xlu0 %368, %v325
        %v370 = vpop.permute.xlu0 %369
        %v372 = vsub.f32 %v366, %v335
        %v373 = vsub.f32 %v370, %v335
        %374 = vset.pattern.permute.xlu0 3
        %375 = vperm.xlu0 %374, %v324
        %v376 = vpop.permute.xlu0 %375
        %378 = vset.pattern.permute.xlu0 3
        %379 = vperm.xlu0 %378, %v325
        %v380 = vpop.permute.xlu0 %379
        %v382 = vsub.f32 %v376, %v351
        %v383 = vsub.f32 %v380, %v351
        %v384 = vmin.f32 %v372, %v382
        %v385 = vmin.f32 %v373, %v383
        %v386 = vmin.f32 %v362, %v384
        %v387 = vmin.f32 %v363, %v385
        %vm388 = vcmp.gt.f32.partialorder %v386, 1e-09
        %vm389 = vcmp.gt.f32.partialorder %v387, 1e-09
        %vm390 = vcmp.gt.f32.partialorder %v324, 0.5
        %vm391 = vcmp.gt.f32.partialorder %v325, 0.5
        %v392 = vsel %vm390, 1, 0
        %v393 = vsel %vm391, 1, 0
        %394 = vset.pattern.permute.xlu0 5
        %395 = vperm.xlu0 %394, %v392
        %v396 = vpop.permute.xlu0 %395
        %397 = vset.pattern.permute.xlu0 5
        %398 = vperm.xlu0 %397, %v393
        %v399 = vpop.permute.xlu0 %398
        %vm400 = vcmp.eq.s32.totalorder %v396, 1
        %vm401 = vcmp.eq.s32.totalorder %v399, 1
        %vm402 = vmand %vm388, %vm400
        %vm403 = vmand %vm389, %vm401
        %404 = vset.pattern.permute.xlu0 4
        %405 = vperm.xlu0 %404, %v326
        %v406 = vpop.permute.xlu0 %405
        %407 = vset.pattern.permute.xlu0 4
        %408 = vperm.xlu0 %407, %v327
        %v409 = vpop.permute.xlu0 %408
        %vm410 = vcmp.eq.s32.totalorder %v329, %v406
        %vm411 = vcmp.eq.s32.totalorder %v329, %v409
        %v412 = vsel %vm410, 1, 0
        %v413 = vsel %vm411, 1, 0
        %v414 = vcvt.s32.f32 %v412
        %v415 = vcvt.s32.f32 %v413
        %vm416 = vcmask 162816
        %v418 = vsel %vm416, %v414, 0
        %v421 = vsel %vm416, %v289, 0
        %v424 = vsel %vm416, %v290, 0
        %v427 = vsel %vm416, %v291, 0
        %v430 = vsel %vm416, %v292, 0
        %v433 = vsel %vm416, %v293, 0
        %v436 = vsel %vm416, %v294, 0
        %v439 = vsel %vm416, %v295, 0
        %v442 = vsel %vm416, %v296, 0
        %v445 = vsel %vm416, %v297, 0
        %v448 = vsel %vm416, %v298, 0
        %v451 = vsel %vm416, %v299, 0
        %v454 = vsel %vm416, %v300, 0
        %v457 = vsel %vm416, %v301, 0
        %v460 = vsel %vm416, %v302, 0
        %v463 = vsel %vm416, %v303, 0
        %v466 = vsel %vm416, %v304, 0
        %468 = vmatprep.subr.mxu0 0.0
        %v469 = vand.u32 %v466, 4294901760
        %470 = vmatpush1.xpose.msra.mxu0 %v469
        %471 = vmatprep.subr.mxu0 0.0
        %v472 = vand.u32 %v463, 4294901760
        %473 = vmatpush1.xpose.msra.mxu0 %v472
        %474 = vmatprep.subr.mxu0 0.0
        %v475 = vand.u32 %v460, 4294901760
        %476 = vmatpush1.xpose.msra.mxu0 %v475
        %477 = vmatprep.subr.mxu0 0.0
        %v478 = vand.u32 %v457, 4294901760
        %479 = vmatpush1.xpose.msra.mxu0 %v478
        %480 = vmatprep.subr.mxu0 0.0
        %v481 = vand.u32 %v454, 4294901760
        %482 = vmatpush1.xpose.msra.mxu0 %v481
        %483 = vmatprep.subr.mxu0 0.0
        %v484 = vand.u32 %v451, 4294901760
        %485 = vmatpush1.xpose.msra.mxu0 %v484
        %486 = vmatprep.subr.mxu0 0.0
        %v487 = vand.u32 %v448, 4294901760
        %488 = vmatpush1.xpose.msra.mxu0 %v487
        %489 = vmatprep.subr.mxu0 0.0
        %v490 = vand.u32 %v445, 4294901760
        %491 = vmatpush1.xpose.msra.mxu0 %v490
        %492 = vmatprep.subr.mxu0 0.0
        %v493 = vand.u32 %v442, 4294901760
        %494 = vmatpush1.xpose.msra.mxu0 %v493
        %495 = vmatprep.subr.mxu0 0.0
        %v496 = vand.u32 %v439, 4294901760
        %497 = vmatpush1.xpose.msra.mxu0 %v496
        %498 = vmatprep.subr.mxu0 0.0
        %v499 = vand.u32 %v436, 4294901760
        %500 = vmatpush1.xpose.msra.mxu0 %v499
        %501 = vmatprep.subr.mxu0 0.0
        %v502 = vand.u32 %v433, 4294901760
        %503 = vmatpush1.xpose.msra.mxu0 %v502
        %504 = vmatprep.subr.mxu0 0.0
        %v505 = vand.u32 %v430, 4294901760
        %506 = vmatpush1.xpose.msra.mxu0 %v505
        %507 = vmatprep.subr.mxu0 0.0
        %v508 = vand.u32 %v427, 4294901760
        %509 = vmatpush1.xpose.msra.mxu0 %v508
        %510 = vmatprep.subr.mxu0 0.0
        %v511 = vand.u32 %v424, 4294901760
        %512 = vmatpush1.xpose.msra.mxu0 %v511
        %513 = vmatprep.subr.mxu0 0.0
        %v514 = vand.u32 %v421, 4294901760
        %515 = vmatpush1.xpose.msra.mxu0 %v514
        %516 = vmatprep.subr.mxu0 0.0
        %517 = vmatpush2.xpose.msra.mxu0 0.0
        %518 = vmatprep.subr.mxu0 0.0
        %519 = vmatpush2.xpose.msra.mxu0 0.0
        %520 = vmatprep.subr.mxu0 0.0
        %521 = vmatpush2.xpose.msra.mxu0 0.0
        %522 = vmatprep.subr.mxu0 0.0
        %523 = vmatpush2.xpose.msra.mxu0 0.0
        %524 = vmatprep.subr.mxu0 0.0
        %525 = vmatpush2.xpose.msra.mxu0 0.0
        %526 = vmatprep.subr.mxu0 0.0
        %527 = vmatpush2.xpose.msra.mxu0 0.0
        %528 = vmatprep.subr.mxu0 0.0
        %529 = vmatpush2.xpose.msra.mxu0 0.0
        %530 = vmatprep.subr.mxu0 0.0
        %531 = vmatpush2.xpose.msra.mxu0 0.0
        %532 = vmatprep.subr.mxu0 0.0
        %533 = vmatpush2.xpose.msra.mxu0 0.0
        %534 = vmatprep.subr.mxu0 0.0
        %535 = vmatpush2.xpose.msra.mxu0 0.0
        %536 = vmatprep.subr.mxu0 0.0
        %537 = vmatpush2.xpose.msra.mxu0 0.0
        %538 = vmatprep.subr.mxu0 0.0
        %539 = vmatpush2.xpose.msra.mxu0 0.0
        %540 = vmatprep.subr.mxu0 0.0
        %541 = vmatpush2.xpose.msra.mxu0 0.0
        %542 = vmatprep.subr.mxu0 0.0
        %543 = vmatpush2.xpose.msra.mxu0 0.0
        %544 = vmatprep.subr.mxu0 0.0
        %545 = vmatpush2.xpose.msra.mxu0 0.0
        %546 = vmatprep.subr.mxu0 0.0
        %547 = vmatpush2.xpose.msra.mxu0 0.0
        %548 = vmatprep.mubr.f32.mxu0 0.0
        %v549 = vand.u32 %v418, 4294901760
        %v550 = vsub.f32 %v418, %v549
        %v551 = vand.u32 %v550, 4294901760
        %v552 = vsub.f32 %v550, %v551
        %v553 = vand.u32 %v552, 4294901760
        %554 = vmatmul.mubr.f32.gmra.mxu0 %v553
        %v555 = vpop.f32.mrf.mxu0
        %v556 = vadd.f32 0.0, %v555
        %v557 = vpop.f32.mrf.mxu0
        %558 = vdwg.mxu0
        %559 = vmatprep.subr.mxu0 0.0
        %v560 = vand.u32 %v466, 4294901760
        %v561 = vsub.f32 %v466, %v560
        %v562 = vand.u32 %v561, 4294901760
        %v563 = vsub.f32 %v561, %v562
        %v564 = vand.u32 %v563, 4294901760
        %565 = vmatpush1.xpose.msra.mxu0 %v564
        %566 = vmatprep.subr.mxu0 0.0
        %v567 = vand.u32 %v463, 4294901760
        %v568 = vsub.f32 %v463, %v567
        %v569 = vand.u32 %v568, 4294901760
        %v570 = vsub.f32 %v568, %v569
        %v571 = vand.u32 %v570, 4294901760
        %572 = vmatpush1.xpose.msra.mxu0 %v571
        %573 = vmatprep.subr.mxu0 0.0
        %v574 = vand.u32 %v460, 4294901760
        %v575 = vsub.f32 %v460, %v574
        %v576 = vand.u32 %v575, 4294901760
        %v577 = vsub.f32 %v575, %v576
        %v578 = vand.u32 %v577, 4294901760
        %579 = vmatpush1.xpose.msra.mxu0 %v578
        %580 = vmatprep.subr.mxu0 0.0
        %v581 = vand.u32 %v457, 4294901760
        %v582 = vsub.f32 %v457, %v581
        %v583 = vand.u32 %v582, 4294901760
        %v584 = vsub.f32 %v582, %v583
        %v585 = vand.u32 %v584, 4294901760
        %586 = vmatpush1.xpose.msra.mxu0 %v585
        %587 = vmatprep.subr.mxu0 0.0
        %v588 = vand.u32 %v454, 4294901760
        %v589 = vsub.f32 %v454, %v588
        %v590 = vand.u32 %v589, 4294901760
        %v591 = vsub.f32 %v589, %v590
        %v592 = vand.u32 %v591, 4294901760
        %593 = vmatpush1.xpose.msra.mxu0 %v592
        %594 = vmatprep.subr.mxu0 0.0
        %v595 = vand.u32 %v451, 4294901760
        %v596 = vsub.f32 %v451, %v595
        %v597 = vand.u32 %v596, 4294901760
        %v598 = vsub.f32 %v596, %v597
        %v599 = vand.u32 %v598, 4294901760
        %600 = vmatpush1.xpose.msra.mxu0 %v599
        %601 = vmatprep.subr.mxu0 0.0
        %v602 = vand.u32 %v448, 4294901760
        %v603 = vsub.f32 %v448, %v602
        %v604 = vand.u32 %v603, 4294901760
        %v605 = vsub.f32 %v603, %v604
        %v606 = vand.u32 %v605, 4294901760
        %607 = vmatpush1.xpose.msra.mxu0 %v606
        %608 = vmatprep.subr.mxu0 0.0
        %v609 = vand.u32 %v445, 4294901760
        %v610 = vsub.f32 %v445, %v609
        %v611 = vand.u32 %v610, 4294901760
        %v612 = vsub.f32 %v610, %v611
        %v613 = vand.u32 %v612, 4294901760
        %614 = vmatpush1.xpose.msra.mxu0 %v613
        %615 = vmatprep.subr.mxu0 0.0
        %v616 = vand.u32 %v442, 4294901760
        %v617 = vsub.f32 %v442, %v616
        %v618 = vand.u32 %v617, 4294901760
        %v619 = vsub.f32 %v617, %v618
        %v620 = vand.u32 %v619, 4294901760
        %621 = vmatpush1.xpose.msra.mxu0 %v620
        %622 = vmatprep.subr.mxu0 0.0
        %v623 = vand.u32 %v439, 4294901760
        %v624 = vsub.f32 %v439, %v623
        %v625 = vand.u32 %v624, 4294901760
        %v626 = vsub.f32 %v624, %v625
        %v627 = vand.u32 %v626, 4294901760
        %628 = vmatpush1.xpose.msra.mxu0 %v627
        %629 = vmatprep.subr.mxu0 0.0
        %v630 = vand.u32 %v436, 4294901760
        %v631 = vsub.f32 %v436, %v630
        %v632 = vand.u32 %v631, 4294901760
        %v633 = vsub.f32 %v631, %v632
        %v634 = vand.u32 %v633, 4294901760
        %635 = vmatpush1.xpose.msra.mxu0 %v634
        %636 = vmatprep.subr.mxu0 0.0
        %v637 = vand.u32 %v433, 4294901760
        %v638 = vsub.f32 %v433, %v637
        %v639 = vand.u32 %v638, 4294901760
        %v640 = vsub.f32 %v638, %v639
        %v641 = vand.u32 %v640, 4294901760
        %642 = vmatpush1.xpose.msra.mxu0 %v641
        %643 = vmatprep.subr.mxu0 0.0
        %v644 = vand.u32 %v430, 4294901760
        %v645 = vsub.f32 %v430, %v644
        %v646 = vand.u32 %v645, 4294901760
        %v647 = vsub.f32 %v645, %v646
        %v648 = vand.u32 %v647, 4294901760
        %649 = vmatpush1.xpose.msra.mxu0 %v648
        %650 = vmatprep.subr.mxu0 0.0
        %v651 = vand.u32 %v427, 4294901760
        %v652 = vsub.f32 %v427, %v651
        %v653 = vand.u32 %v652, 4294901760
        %v654 = vsub.f32 %v652, %v653
        %v655 = vand.u32 %v654, 4294901760
        %656 = vmatpush1.xpose.msra.mxu0 %v655
        %657 = vmatprep.subr.mxu0 0.0
        %v658 = vand.u32 %v424, 4294901760
        %v659 = vsub.f32 %v424, %v658
        %v660 = vand.u32 %v659, 4294901760
        %v661 = vsub.f32 %v659, %v660
        %v662 = vand.u32 %v661, 4294901760
        %663 = vmatpush1.xpose.msra.mxu0 %v662
        %664 = vmatprep.subr.mxu0 0.0
        %v665 = vand.u32 %v421, 4294901760
        %v666 = vsub.f32 %v421, %v665
        %v667 = vand.u32 %v666, 4294901760
        %v668 = vsub.f32 %v666, %v667
        %v669 = vand.u32 %v668, 4294901760
        %670 = vmatpush1.xpose.msra.mxu0 %v669
        %671 = vmatprep.subr.mxu0 0.0
        %672 = vmatpush2.xpose.msra.mxu0 0.0
        %673 = vmatprep.subr.mxu0 0.0
        %674 = vmatpush2.xpose.msra.mxu0 0.0
        %675 = vmatprep.subr.mxu0 0.0
        %676 = vmatpush2.xpose.msra.mxu0 0.0
        %677 = vmatprep.subr.mxu0 0.0
        %678 = vmatpush2.xpose.msra.mxu0 0.0
        %679 = vmatprep.subr.mxu0 0.0
        %680 = vmatpush2.xpose.msra.mxu0 0.0
        %681 = vmatprep.subr.mxu0 0.0
        %682 = vmatpush2.xpose.msra.mxu0 0.0
        %683 = vmatprep.subr.mxu0 0.0
        %684 = vmatpush2.xpose.msra.mxu0 0.0
        %685 = vmatprep.subr.mxu0 0.0
        %686 = vmatpush2.xpose.msra.mxu0 0.0
        %687 = vmatprep.subr.mxu0 0.0
        %688 = vmatpush2.xpose.msra.mxu0 0.0
        %689 = vmatprep.subr.mxu0 0.0
        %690 = vmatpush2.xpose.msra.mxu0 0.0
        %691 = vmatprep.subr.mxu0 0.0
        %692 = vmatpush2.xpose.msra.mxu0 0.0
        %693 = vmatprep.subr.mxu0 0.0
        %694 = vmatpush2.xpose.msra.mxu0 0.0
        %695 = vmatprep.subr.mxu0 0.0
        %696 = vmatpush2.xpose.msra.mxu0 0.0
        %697 = vmatprep.subr.mxu0 0.0
        %698 = vmatpush2.xpose.msra.mxu0 0.0
        %699 = vmatprep.subr.mxu0 0.0
        %700 = vmatpush2.xpose.msra.mxu0 0.0
        %701 = vmatprep.subr.mxu0 0.0
        %702 = vmatpush2.xpose.msra.mxu0 0.0
        %703 = vmatprep.mubr.f32.mxu0 0.0
        %v704 = vand.u32 %v418, 4294901760
        %705 = vmatmul.mubr.f32.gmra.mxu0 %v704
        %v706 = vpop.f32.mrf.mxu0
        %v707 = vadd.f32 %v556, %v706
        %v708 = vpop.f32.mrf.mxu0
        %709 = vdwg.mxu0
        %710 = vmatprep.subr.mxu0 0.0
        %v711 = vand.u32 %v466, 4294901760
        %v712 = vsub.f32 %v466, %v711
        %713 = vmatpush1.xpose.msra.mxu0 %v712
        %714 = vmatprep.subr.mxu0 0.0
        %v715 = vand.u32 %v463, 4294901760
        %v716 = vsub.f32 %v463, %v715
        %717 = vmatpush1.xpose.msra.mxu0 %v716
        %718 = vmatprep.subr.mxu0 0.0
        %v719 = vand.u32 %v460, 4294901760
        %v720 = vsub.f32 %v460, %v719
        %721 = vmatpush1.xpose.msra.mxu0 %v720
        %722 = vmatprep.subr.mxu0 0.0
        %v723 = vand.u32 %v457, 4294901760
        %v724 = vsub.f32 %v457, %v723
        %725 = vmatpush1.xpose.msra.mxu0 %v724
        %726 = vmatprep.subr.mxu0 0.0
        %v727 = vand.u32 %v454, 4294901760
        %v728 = vsub.f32 %v454, %v727
        %729 = vmatpush1.xpose.msra.mxu0 %v728
        %730 = vmatprep.subr.mxu0 0.0
        %v731 = vand.u32 %v451, 4294901760
        %v732 = vsub.f32 %v451, %v731
        %733 = vmatpush1.xpose.msra.mxu0 %v732
        %734 = vmatprep.subr.mxu0 0.0
        %v735 = vand.u32 %v448, 4294901760
        %v736 = vsub.f32 %v448, %v735
        %737 = vmatpush1.xpose.msra.mxu0 %v736
        %738 = vmatprep.subr.mxu0 0.0
        %v739 = vand.u32 %v445, 4294901760
        %v740 = vsub.f32 %v445, %v739
        %741 = vmatpush1.xpose.msra.mxu0 %v740
        %742 = vmatprep.subr.mxu0 0.0
        %v743 = vand.u32 %v442, 4294901760
        %v744 = vsub.f32 %v442, %v743
        %745 = vmatpush1.xpose.msra.mxu0 %v744
        %746 = vmatprep.subr.mxu0 0.0
        %v747 = vand.u32 %v439, 4294901760
        %v748 = vsub.f32 %v439, %v747
        %749 = vmatpush1.xpose.msra.mxu0 %v748
        %750 = vmatprep.subr.mxu0 0.0
        %v751 = vand.u32 %v436, 4294901760
        %v752 = vsub.f32 %v436, %v751
        %753 = vmatpush1.xpose.msra.mxu0 %v752
        %754 = vmatprep.subr.mxu0 0.0
        %v755 = vand.u32 %v433, 4294901760
        %v756 = vsub.f32 %v433, %v755
        %757 = vmatpush1.xpose.msra.mxu0 %v756
        %758 = vmatprep.subr.mxu0 0.0
        %v759 = vand.u32 %v430, 4294901760
        %v760 = vsub.f32 %v430, %v759
        %761 = vmatpush1.xpose.msra.mxu0 %v760
        %762 = vmatprep.subr.mxu0 0.0
        %v763 = vand.u32 %v427, 4294901760
        %v764 = vsub.f32 %v427, %v763
        %765 = vmatpush1.xpose.msra.mxu0 %v764
        %766 = vmatprep.subr.mxu0 0.0
        %v767 = vand.u32 %v424, 4294901760
        %v768 = vsub.f32 %v424, %v767
        %769 = vmatpush1.xpose.msra.mxu0 %v768
        %770 = vmatprep.subr.mxu0 0.0
        %v771 = vand.u32 %v421, 4294901760
        %v772 = vsub.f32 %v421, %v771
        %773 = vmatpush1.xpose.msra.mxu0 %v772
        %774 = vmatprep.subr.mxu0 0.0
        %775 = vmatpush2.xpose.msra.mxu0 0.0
        %776 = vmatprep.subr.mxu0 0.0
        %777 = vmatpush2.xpose.msra.mxu0 0.0
        %778 = vmatprep.subr.mxu0 0.0
        %779 = vmatpush2.xpose.msra.mxu0 0.0
        %780 = vmatprep.subr.mxu0 0.0
        %781 = vmatpush2.xpose.msra.mxu0 0.0
        %782 = vmatprep.subr.mxu0 0.0
        %783 = vmatpush2.xpose.msra.mxu0 0.0
        %784 = vmatprep.subr.mxu0 0.0
        %785 = vmatpush2.xpose.msra.mxu0 0.0
        %786 = vmatprep.subr.mxu0 0.0
        %787 = vmatpush2.xpose.msra.mxu0 0.0
        %788 = vmatprep.subr.mxu0 0.0
        %789 = vmatpush2.xpose.msra.mxu0 0.0
        %790 = vmatprep.subr.mxu0 0.0
        %791 = vmatpush2.xpose.msra.mxu0 0.0
        %792 = vmatprep.subr.mxu0 0.0
        %793 = vmatpush2.xpose.msra.mxu0 0.0
        %794 = vmatprep.subr.mxu0 0.0
        %795 = vmatpush2.xpose.msra.mxu0 0.0
        %796 = vmatprep.subr.mxu0 0.0
        %797 = vmatpush2.xpose.msra.mxu0 0.0
        %798 = vmatprep.subr.mxu0 0.0
        %799 = vmatpush2.xpose.msra.mxu0 0.0
        %800 = vmatprep.subr.mxu0 0.0
        %801 = vmatpush2.xpose.msra.mxu0 0.0
        %802 = vmatprep.subr.mxu0 0.0
        %803 = vmatpush2.xpose.msra.mxu0 0.0
        %804 = vmatprep.subr.mxu0 0.0
        %805 = vmatpush2.xpose.msra.mxu0 0.0
        %806 = vmatprep.mubr.f32.mxu0 0.0
        %v807 = vand.u32 %v418, 4294901760
        %v808 = vsub.f32 %v418, %v807
        %809 = vmatmul.mubr.f32.gmra.mxu0 %v808
        %v810 = vpop.f32.mrf.mxu0
        %v811 = vadd.f32 %v707, %v810
        %v812 = vpop.f32.mrf.mxu0
        %813 = vdwg.mxu0
        %814 = vmatprep.subr.mxu0 0.0
        %v815 = vand.u32 %v466, 4294901760
        %816 = vmatpush1.xpose.msra.mxu0 %v815
        %817 = vmatprep.subr.mxu0 0.0
        %v818 = vand.u32 %v463, 4294901760
        %819 = vmatpush1.xpose.msra.mxu0 %v818
        %820 = vmatprep.subr.mxu0 0.0
        %v821 = vand.u32 %v460, 4294901760
        %822 = vmatpush1.xpose.msra.mxu0 %v821
        %823 = vmatprep.subr.mxu0 0.0
        %v824 = vand.u32 %v457, 4294901760
        %825 = vmatpush1.xpose.msra.mxu0 %v824
        %826 = vmatprep.subr.mxu0 0.0
        %v827 = vand.u32 %v454, 4294901760
        %828 = vmatpush1.xpose.msra.mxu0 %v827
        %829 = vmatprep.subr.mxu0 0.0
        %v830 = vand.u32 %v451, 4294901760
        %831 = vmatpush1.xpose.msra.mxu0 %v830
        %832 = vmatprep.subr.mxu0 0.0
        %v833 = vand.u32 %v448, 4294901760
        %834 = vmatpush1.xpose.msra.mxu0 %v833
        %835 = vmatprep.subr.mxu0 0.0
        %v836 = vand.u32 %v445, 4294901760
        %837 = vmatpush1.xpose.msra.mxu0 %v836
        %838 = vmatprep.subr.mxu0 0.0
        %v839 = vand.u32 %v442, 4294901760
        %840 = vmatpush1.xpose.msra.mxu0 %v839
        %841 = vmatprep.subr.mxu0 0.0
        %v842 = vand.u32 %v439, 4294901760
        %843 = vmatpush1.xpose.msra.mxu0 %v842
        %844 = vmatprep.subr.mxu0 0.0
        %v845 = vand.u32 %v436, 4294901760
        %846 = vmatpush1.xpose.msra.mxu0 %v845
        %847 = vmatprep.subr.mxu0 0.0
        %v848 = vand.u32 %v433, 4294901760
        %849 = vmatpush1.xpose.msra.mxu0 %v848
        %850 = vmatprep.subr.mxu0 0.0
        %v851 = vand.u32 %v430, 4294901760
        %852 = vmatpush1.xpose.msra.mxu0 %v851
        %853 = vmatprep.subr.mxu0 0.0
        %v854 = vand.u32 %v427, 4294901760
        %855 = vmatpush1.xpose.msra.mxu0 %v854
        %856 = vmatprep.subr.mxu0 0.0
        %v857 = vand.u32 %v424, 4294901760
        %858 = vmatpush1.xpose.msra.mxu0 %v857
        %859 = vmatprep.subr.mxu0 0.0
        %v860 = vand.u32 %v421, 4294901760
        %861 = vmatpush1.xpose.msra.mxu0 %v860
        %862 = vmatprep.subr.mxu0 0.0
        %863 = vmatpush2.xpose.msra.mxu0 0.0
        %864 = vmatprep.subr.mxu0 0.0
        %865 = vmatpush2.xpose.msra.mxu0 0.0
        %866 = vmatprep.subr.mxu0 0.0
        %867 = vmatpush2.xpose.msra.mxu0 0.0
        %868 = vmatprep.subr.mxu0 0.0
        %869 = vmatpush2.xpose.msra.mxu0 0.0
        %870 = vmatprep.subr.mxu0 0.0
        %871 = vmatpush2.xpose.msra.mxu0 0.0
        %872 = vmatprep.subr.mxu0 0.0
        %873 = vmatpush2.xpose.msra.mxu0 0.0
        %874 = vmatprep.subr.mxu0 0.0
        %875 = vmatpush2.xpose.msra.mxu0 0.0
        %876 = vmatprep.subr.mxu0 0.0
        %877 = vmatpush2.xpose.msra.mxu0 0.0
        %878 = vmatprep.subr.mxu0 0.0
        %879 = vmatpush2.xpose.msra.mxu0 0.0
        %880 = vmatprep.subr.mxu0 0.0
        %881 = vmatpush2.xpose.msra.mxu0 0.0
        %882 = vmatprep.subr.mxu0 0.0
        %883 = vmatpush2.xpose.msra.mxu0 0.0
        %884 = vmatprep.subr.mxu0 0.0
        %885 = vmatpush2.xpose.msra.mxu0 0.0
        %886 = vmatprep.subr.mxu0 0.0
        %887 = vmatpush2.xpose.msra.mxu0 0.0
        %888 = vmatprep.subr.mxu0 0.0
        %889 = vmatpush2.xpose.msra.mxu0 0.0
        %890 = vmatprep.subr.mxu0 0.0
        %891 = vmatpush2.xpose.msra.mxu0 0.0
        %892 = vmatprep.subr.mxu0 0.0
        %893 = vmatpush2.xpose.msra.mxu0 0.0
        %894 = vmatprep.mubr.f32.mxu0 0.0
        %v895 = vand.u32 %v418, 4294901760
        %v896 = vsub.f32 %v418, %v895
        %v897 = vand.u32 %v896, 4294901760
        %898 = vmatmul.mubr.f32.gmra.mxu0 %v897
        %v899 = vpop.f32.mrf.mxu0
        %v900 = vadd.f32 %v811, %v899
        %v901 = vpop.f32.mrf.mxu0
        %902 = vdwg.mxu0
        %903 = vmatprep.subr.mxu0 0.0
        %v904 = vand.u32 %v466, 4294901760
        %v905 = vsub.f32 %v466, %v904
        %v906 = vand.u32 %v905, 4294901760
        %907 = vmatpush1.xpose.msra.mxu0 %v906
        %908 = vmatprep.subr.mxu0 0.0
        %v909 = vand.u32 %v463, 4294901760
        %v910 = vsub.f32 %v463, %v909
        %v911 = vand.u32 %v910, 4294901760
        %912 = vmatpush1.xpose.msra.mxu0 %v911
        %913 = vmatprep.subr.mxu0 0.0
        %v914 = vand.u32 %v460, 4294901760
        %v915 = vsub.f32 %v460, %v914
        %v916 = vand.u32 %v915, 4294901760
        %917 = vmatpush1.xpose.msra.mxu0 %v916
        %918 = vmatprep.subr.mxu0 0.0
        %v919 = vand.u32 %v457, 4294901760
        %v920 = vsub.f32 %v457, %v919
        %v921 = vand.u32 %v920, 4294901760
        %922 = vmatpush1.xpose.msra.mxu0 %v921
        %923 = vmatprep.subr.mxu0 0.0
        %v924 = vand.u32 %v454, 4294901760
        %v925 = vsub.f32 %v454, %v924
        %v926 = vand.u32 %v925, 4294901760
        %927 = vmatpush1.xpose.msra.mxu0 %v926
        %928 = vmatprep.subr.mxu0 0.0
        %v929 = vand.u32 %v451, 4294901760
        %v930 = vsub.f32 %v451, %v929
        %v931 = vand.u32 %v930, 4294901760
        %932 = vmatpush1.xpose.msra.mxu0 %v931
        %933 = vmatprep.subr.mxu0 0.0
        %v934 = vand.u32 %v448, 4294901760
        %v935 = vsub.f32 %v448, %v934
        %v936 = vand.u32 %v935, 4294901760
        %937 = vmatpush1.xpose.msra.mxu0 %v936
        %938 = vmatprep.subr.mxu0 0.0
        %v939 = vand.u32 %v445, 4294901760
        %v940 = vsub.f32 %v445, %v939
        %v941 = vand.u32 %v940, 4294901760
        %942 = vmatpush1.xpose.msra.mxu0 %v941
        %943 = vmatprep.subr.mxu0 0.0
        %v944 = vand.u32 %v442, 4294901760
        %v945 = vsub.f32 %v442, %v944
        %v946 = vand.u32 %v945, 4294901760
        %947 = vmatpush1.xpose.msra.mxu0 %v946
        %948 = vmatprep.subr.mxu0 0.0
        %v949 = vand.u32 %v439, 4294901760
        %v950 = vsub.f32 %v439, %v949
        %v951 = vand.u32 %v950, 4294901760
        %952 = vmatpush1.xpose.msra.mxu0 %v951
        %953 = vmatprep.subr.mxu0 0.0
        %v954 = vand.u32 %v436, 4294901760
        %v955 = vsub.f32 %v436, %v954
        %v956 = vand.u32 %v955, 4294901760
        %957 = vmatpush1.xpose.msra.mxu0 %v956
        %958 = vmatprep.subr.mxu0 0.0
        %v959 = vand.u32 %v433, 4294901760
        %v960 = vsub.f32 %v433, %v959
        %v961 = vand.u32 %v960, 4294901760
        %962 = vmatpush1.xpose.msra.mxu0 %v961
        %963 = vmatprep.subr.mxu0 0.0
        %v964 = vand.u32 %v430, 4294901760
        %v965 = vsub.f32 %v430, %v964
        %v966 = vand.u32 %v965, 4294901760
        %967 = vmatpush1.xpose.msra.mxu0 %v966
        %968 = vmatprep.subr.mxu0 0.0
        %v969 = vand.u32 %v427, 4294901760
        %v970 = vsub.f32 %v427, %v969
        %v971 = vand.u32 %v970, 4294901760
        %972 = vmatpush1.xpose.msra.mxu0 %v971
        %973 = vmatprep.subr.mxu0 0.0
        %v974 = vand.u32 %v424, 4294901760
        %v975 = vsub.f32 %v424, %v974
        %v976 = vand.u32 %v975, 4294901760
        %977 = vmatpush1.xpose.msra.mxu0 %v976
        %978 = vmatprep.subr.mxu0 0.0
        %v979 = vand.u32 %v421, 4294901760
        %v980 = vsub.f32 %v421, %v979
        %v981 = vand.u32 %v980, 4294901760
        %982 = vmatpush1.xpose.msra.mxu0 %v981
        %983 = vmatprep.subr.mxu0 0.0
        %984 = vmatpush2.xpose.msra.mxu0 0.0
        %985 = vmatprep.subr.mxu0 0.0
        %986 = vmatpush2.xpose.msra.mxu0 0.0
        %987 = vmatprep.subr.mxu0 0.0
        %988 = vmatpush2.xpose.msra.mxu0 0.0
        %989 = vmatprep.subr.mxu0 0.0
        %990 = vmatpush2.xpose.msra.mxu0 0.0
        %991 = vmatprep.subr.mxu0 0.0
        %992 = vmatpush2.xpose.msra.mxu0 0.0
        %993 = vmatprep.subr.mxu0 0.0
        %994 = vmatpush2.xpose.msra.mxu0 0.0
        %995 = vmatprep.subr.mxu0 0.0
        %996 = vmatpush2.xpose.msra.mxu0 0.0
        %997 = vmatprep.subr.mxu0 0.0
        %998 = vmatpush2.xpose.msra.mxu0 0.0
        %999 = vmatprep.subr.mxu0 0.0
        %1000 = vmatpush2.xpose.msra.mxu0 0.0
        %1001 = vmatprep.subr.mxu0 0.0
        %1002 = vmatpush2.xpose.msra.mxu0 0.0
        %1003 = vmatprep.subr.mxu0 0.0
        %1004 = vmatpush2.xpose.msra.mxu0 0.0
        %1005 = vmatprep.subr.mxu0 0.0
        %1006 = vmatpush2.xpose.msra.mxu0 0.0
        %1007 = vmatprep.subr.mxu0 0.0
        %1008 = vmatpush2.xpose.msra.mxu0 0.0
        %1009 = vmatprep.subr.mxu0 0.0
        %1010 = vmatpush2.xpose.msra.mxu0 0.0
        %1011 = vmatprep.subr.mxu0 0.0
        %1012 = vmatpush2.xpose.msra.mxu0 0.0
        %1013 = vmatprep.subr.mxu0 0.0
        %1014 = vmatpush2.xpose.msra.mxu0 0.0
        %1015 = vmatprep.mubr.f32.mxu0 0.0
        %v1016 = vand.u32 %v418, 4294901760
        %1017 = vmatmul.mubr.f32.gmra.mxu0 %v1016
        %v1018 = vpop.f32.mrf.mxu0
        %v1019 = vadd.f32 %v900, %v1018
        %v1020 = vpop.f32.mrf.mxu0
        %1021 = vdwg.mxu0
        %1022 = vmatprep.subr.mxu0 0.0
        %v1023 = vand.u32 %v466, 4294901760
        %1024 = vmatpush1.xpose.msra.mxu0 %v1023
        %1025 = vmatprep.subr.mxu0 0.0
        %v1026 = vand.u32 %v463, 4294901760
        %1027 = vmatpush1.xpose.msra.mxu0 %v1026
        %1028 = vmatprep.subr.mxu0 0.0
        %v1029 = vand.u32 %v460, 4294901760
        %1030 = vmatpush1.xpose.msra.mxu0 %v1029
        %1031 = vmatprep.subr.mxu0 0.0
        %v1032 = vand.u32 %v457, 4294901760
        %1033 = vmatpush1.xpose.msra.mxu0 %v1032
        %1034 = vmatprep.subr.mxu0 0.0
        %v1035 = vand.u32 %v454, 4294901760
        %1036 = vmatpush1.xpose.msra.mxu0 %v1035
        %1037 = vmatprep.subr.mxu0 0.0
        %v1038 = vand.u32 %v451, 4294901760
        %1039 = vmatpush1.xpose.msra.mxu0 %v1038
        %1040 = vmatprep.subr.mxu0 0.0
        %v1041 = vand.u32 %v448, 4294901760
        %1042 = vmatpush1.xpose.msra.mxu0 %v1041
        %1043 = vmatprep.subr.mxu0 0.0
        %v1044 = vand.u32 %v445, 4294901760
        %1045 = vmatpush1.xpose.msra.mxu0 %v1044
        %1046 = vmatprep.subr.mxu0 0.0
        %v1047 = vand.u32 %v442, 4294901760
        %1048 = vmatpush1.xpose.msra.mxu0 %v1047
        %1049 = vmatprep.subr.mxu0 0.0
        %v1050 = vand.u32 %v439, 4294901760
        %1051 = vmatpush1.xpose.msra.mxu0 %v1050
        %1052 = vmatprep.subr.mxu0 0.0
        %v1053 = vand.u32 %v436, 4294901760
        %1054 = vmatpush1.xpose.msra.mxu0 %v1053
        %1055 = vmatprep.subr.mxu0 0.0
        %v1056 = vand.u32 %v433, 4294901760
        %1057 = vmatpush1.xpose.msra.mxu0 %v1056
        %1058 = vmatprep.subr.mxu0 0.0
        %v1059 = vand.u32 %v430, 4294901760
        %1060 = vmatpush1.xpose.msra.mxu0 %v1059
        %1061 = vmatprep.subr.mxu0 0.0
        %v1062 = vand.u32 %v427, 4294901760
        %1063 = vmatpush1.xpose.msra.mxu0 %v1062
        %1064 = vmatprep.subr.mxu0 0.0
        %v1065 = vand.u32 %v424, 4294901760
        %1066 = vmatpush1.xpose.msra.mxu0 %v1065
        %1067 = vmatprep.subr.mxu0 0.0
        %v1068 = vand.u32 %v421, 4294901760
        %1069 = vmatpush1.xpose.msra.mxu0 %v1068
        %1070 = vmatprep.subr.mxu0 0.0
        %1071 = vmatpush2.xpose.msra.mxu0 0.0
        %1072 = vmatprep.subr.mxu0 0.0
        %1073 = vmatpush2.xpose.msra.mxu0 0.0
        %1074 = vmatprep.subr.mxu0 0.0
        %1075 = vmatpush2.xpose.msra.mxu0 0.0
        %1076 = vmatprep.subr.mxu0 0.0
        %1077 = vmatpush2.xpose.msra.mxu0 0.0
        %1078 = vmatprep.subr.mxu0 0.0
        %1079 = vmatpush2.xpose.msra.mxu0 0.0
        %1080 = vmatprep.subr.mxu0 0.0
        %1081 = vmatpush2.xpose.msra.mxu0 0.0
        %1082 = vmatprep.subr.mxu0 0.0
        %1083 = vmatpush2.xpose.msra.mxu0 0.0
        %1084 = vmatprep.subr.mxu0 0.0
        %1085 = vmatpush2.xpose.msra.mxu0 0.0
        %1086 = vmatprep.subr.mxu0 0.0
        %1087 = vmatpush2.xpose.msra.mxu0 0.0
        %1088 = vmatprep.subr.mxu0 0.0
        %1089 = vmatpush2.xpose.msra.mxu0 0.0
        %1090 = vmatprep.subr.mxu0 0.0
        %1091 = vmatpush2.xpose.msra.mxu0 0.0
        %1092 = vmatprep.subr.mxu0 0.0
        %1093 = vmatpush2.xpose.msra.mxu0 0.0
        %1094 = vmatprep.subr.mxu0 0.0
        %1095 = vmatpush2.xpose.msra.mxu0 0.0
        %1096 = vmatprep.subr.mxu0 0.0
        %1097 = vmatpush2.xpose.msra.mxu0 0.0
        %1098 = vmatprep.subr.mxu0 0.0
        %1099 = vmatpush2.xpose.msra.mxu0 0.0
        %1100 = vmatprep.subr.mxu0 0.0
        %1101 = vmatpush2.xpose.msra.mxu0 0.0
        %1102 = vmatprep.mubr.f32.mxu0 0.0
        %v1103 = vand.u32 %v418, 4294901760
        %1104 = vmatmul.mubr.f32.gmra.mxu0 %v1103
        %v1105 = vpop.f32.mrf.mxu0
        %v1106 = vadd.f32 %v1019, %v1105
        %v1107 = vpop.f32.mrf.mxu0
        %1108 = vdwg.mxu0
        %v1110 = vsel %vm416, %v415, 0
        %v1113 = vsel %vm416, %v305, 0
        %v1116 = vsel %vm416, %v306, 0
        %v1119 = vsel %vm416, %v307, 0
        %v1122 = vsel %vm416, %v308, 0
        %v1125 = vsel %vm416, %v309, 0
        %v1128 = vsel %vm416, %v310, 0
        %v1131 = vsel %vm416, %v311, 0
        %v1134 = vsel %vm416, %v312, 0
        %v1137 = vsel %vm416, %v313, 0
        %v1140 = vsel %vm416, %v314, 0
        %v1143 = vsel %vm416, %v315, 0
        %v1146 = vsel %vm416, %v316, 0
        %v1149 = vsel %vm416, %v317, 0
        %v1152 = vsel %vm416, %v318, 0
        %v1155 = vsel %vm416, %v319, 0
        %v1158 = vsel %vm416, %v320, 0
        %1160 = vmatprep.subr.mxu0 0.0
        %v1161 = vand.u32 %v1158, 4294901760
        %1162 = vmatpush1.xpose.msra.mxu0 %v1161
        %1163 = vmatprep.subr.mxu0 0.0
        %v1164 = vand.u32 %v1155, 4294901760
        %1165 = vmatpush1.xpose.msra.mxu0 %v1164
        %1166 = vmatprep.subr.mxu0 0.0
        %v1167 = vand.u32 %v1152, 4294901760
        %1168 = vmatpush1.xpose.msra.mxu0 %v1167
        %1169 = vmatprep.subr.mxu0 0.0
        %v1170 = vand.u32 %v1149, 4294901760
        %1171 = vmatpush1.xpose.msra.mxu0 %v1170
        %1172 = vmatprep.subr.mxu0 0.0
        %v1173 = vand.u32 %v1146, 4294901760
        %1174 = vmatpush1.xpose.msra.mxu0 %v1173
        %1175 = vmatprep.subr.mxu0 0.0
        %v1176 = vand.u32 %v1143, 4294901760
        %1177 = vmatpush1.xpose.msra.mxu0 %v1176
        %1178 = vmatprep.subr.mxu0 0.0
        %v1179 = vand.u32 %v1140, 4294901760
        %1180 = vmatpush1.xpose.msra.mxu0 %v1179
        %1181 = vmatprep.subr.mxu0 0.0
        %v1182 = vand.u32 %v1137, 4294901760
        %1183 = vmatpush1.xpose.msra.mxu0 %v1182
        %1184 = vmatprep.subr.mxu0 0.0
        %v1185 = vand.u32 %v1134, 4294901760
        %1186 = vmatpush1.xpose.msra.mxu0 %v1185
        %1187 = vmatprep.subr.mxu0 0.0
        %v1188 = vand.u32 %v1131, 4294901760
        %1189 = vmatpush1.xpose.msra.mxu0 %v1188
        %1190 = vmatprep.subr.mxu0 0.0
        %v1191 = vand.u32 %v1128, 4294901760
        %1192 = vmatpush1.xpose.msra.mxu0 %v1191
        %1193 = vmatprep.subr.mxu0 0.0
        %v1194 = vand.u32 %v1125, 4294901760
        %1195 = vmatpush1.xpose.msra.mxu0 %v1194
        %1196 = vmatprep.subr.mxu0 0.0
        %v1197 = vand.u32 %v1122, 4294901760
        %1198 = vmatpush1.xpose.msra.mxu0 %v1197
        %1199 = vmatprep.subr.mxu0 0.0
        %v1200 = vand.u32 %v1119, 4294901760
        %1201 = vmatpush1.xpose.msra.mxu0 %v1200
        %1202 = vmatprep.subr.mxu0 0.0
        %v1203 = vand.u32 %v1116, 4294901760
        %1204 = vmatpush1.xpose.msra.mxu0 %v1203
        %1205 = vmatprep.subr.mxu0 0.0
        %v1206 = vand.u32 %v1113, 4294901760
        %1207 = vmatpush1.xpose.msra.mxu0 %v1206
        %1208 = vmatprep.subr.mxu0 0.0
        %1209 = vmatpush2.xpose.msra.mxu0 0.0
        %1210 = vmatprep.subr.mxu0 0.0
        %1211 = vmatpush2.xpose.msra.mxu0 0.0
        %1212 = vmatprep.subr.mxu0 0.0
        %1213 = vmatpush2.xpose.msra.mxu0 0.0
        %1214 = vmatprep.subr.mxu0 0.0
        %1215 = vmatpush2.xpose.msra.mxu0 0.0
        %1216 = vmatprep.subr.mxu0 0.0
        %1217 = vmatpush2.xpose.msra.mxu0 0.0
        %1218 = vmatprep.subr.mxu0 0.0
        %1219 = vmatpush2.xpose.msra.mxu0 0.0
        %1220 = vmatprep.subr.mxu0 0.0
        %1221 = vmatpush2.xpose.msra.mxu0 0.0
        %1222 = vmatprep.subr.mxu0 0.0
        %1223 = vmatpush2.xpose.msra.mxu0 0.0
        %1224 = vmatprep.subr.mxu0 0.0
        %1225 = vmatpush2.xpose.msra.mxu0 0.0
        %1226 = vmatprep.subr.mxu0 0.0
        %1227 = vmatpush2.xpose.msra.mxu0 0.0
        %1228 = vmatprep.subr.mxu0 0.0
        %1229 = vmatpush2.xpose.msra.mxu0 0.0
        %1230 = vmatprep.subr.mxu0 0.0
        %1231 = vmatpush2.xpose.msra.mxu0 0.0
        %1232 = vmatprep.subr.mxu0 0.0
        %1233 = vmatpush2.xpose.msra.mxu0 0.0
        %1234 = vmatprep.subr.mxu0 0.0
        %1235 = vmatpush2.xpose.msra.mxu0 0.0
        %1236 = vmatprep.subr.mxu0 0.0
        %1237 = vmatpush2.xpose.msra.mxu0 0.0
        %1238 = vmatprep.subr.mxu0 0.0
        %1239 = vmatpush2.xpose.msra.mxu0 0.0
        %1240 = vmatprep.mubr.f32.mxu0 0.0
        %v1241 = vand.u32 %v1110, 4294901760
        %v1242 = vsub.f32 %v1110, %v1241
        %v1243 = vand.u32 %v1242, 4294901760
        %v1244 = vsub.f32 %v1242, %v1243
        %v1245 = vand.u32 %v1244, 4294901760
        %1246 = vmatmul.mubr.f32.gmra.mxu0 %v1245
        %v1247 = vpop.f32.mrf.mxu0
        %v1248 = vadd.f32 0.0, %v1247
        %v1249 = vpop.f32.mrf.mxu0
        %1250 = vdwg.mxu0
        %1251 = vmatprep.subr.mxu0 0.0
        %v1252 = vand.u32 %v1158, 4294901760
        %v1253 = vsub.f32 %v1158, %v1252
        %v1254 = vand.u32 %v1253, 4294901760
        %v1255 = vsub.f32 %v1253, %v1254
        %v1256 = vand.u32 %v1255, 4294901760
        %1257 = vmatpush1.xpose.msra.mxu0 %v1256
        %1258 = vmatprep.subr.mxu0 0.0
        %v1259 = vand.u32 %v1155, 4294901760
        %v1260 = vsub.f32 %v1155, %v1259
        %v1261 = vand.u32 %v1260, 4294901760
        %v1262 = vsub.f32 %v1260, %v1261
        %v1263 = vand.u32 %v1262, 4294901760
        %1264 = vmatpush1.xpose.msra.mxu0 %v1263
        %1265 = vmatprep.subr.mxu0 0.0
        %v1266 = vand.u32 %v1152, 4294901760
        %v1267 = vsub.f32 %v1152, %v1266
        %v1268 = vand.u32 %v1267, 4294901760
        %v1269 = vsub.f32 %v1267, %v1268
        %v1270 = vand.u32 %v1269, 4294901760
        %1271 = vmatpush1.xpose.msra.mxu0 %v1270
        %1272 = vmatprep.subr.mxu0 0.0
        %v1273 = vand.u32 %v1149, 4294901760
        %v1274 = vsub.f32 %v1149, %v1273
        %v1275 = vand.u32 %v1274, 4294901760
        %v1276 = vsub.f32 %v1274, %v1275
        %v1277 = vand.u32 %v1276, 4294901760
        %1278 = vmatpush1.xpose.msra.mxu0 %v1277
        %1279 = vmatprep.subr.mxu0 0.0
        %v1280 = vand.u32 %v1146, 4294901760
        %v1281 = vsub.f32 %v1146, %v1280
        %v1282 = vand.u32 %v1281, 4294901760
        %v1283 = vsub.f32 %v1281, %v1282
        %v1284 = vand.u32 %v1283, 4294901760
        %1285 = vmatpush1.xpose.msra.mxu0 %v1284
        %1286 = vmatprep.subr.mxu0 0.0
        %v1287 = vand.u32 %v1143, 4294901760
        %v1288 = vsub.f32 %v1143, %v1287
        %v1289 = vand.u32 %v1288, 4294901760
        %v1290 = vsub.f32 %v1288, %v1289
        %v1291 = vand.u32 %v1290, 4294901760
        %1292 = vmatpush1.xpose.msra.mxu0 %v1291
        %1293 = vmatprep.subr.mxu0 0.0
        %v1294 = vand.u32 %v1140, 4294901760
        %v1295 = vsub.f32 %v1140, %v1294
        %v1296 = vand.u32 %v1295, 4294901760
        %v1297 = vsub.f32 %v1295, %v1296
        %v1298 = vand.u32 %v1297, 4294901760
        %1299 = vmatpush1.xpose.msra.mxu0 %v1298
        %1300 = vmatprep.subr.mxu0 0.0
        %v1301 = vand.u32 %v1137, 4294901760
        %v1302 = vsub.f32 %v1137, %v1301
        %v1303 = vand.u32 %v1302, 4294901760
        %v1304 = vsub.f32 %v1302, %v1303
        %v1305 = vand.u32 %v1304, 4294901760
        %1306 = vmatpush1.xpose.msra.mxu0 %v1305
        %1307 = vmatprep.subr.mxu0 0.0
        %v1308 = vand.u32 %v1134, 4294901760
        %v1309 = vsub.f32 %v1134, %v1308
        %v1310 = vand.u32 %v1309, 4294901760
        %v1311 = vsub.f32 %v1309, %v1310
        %v1312 = vand.u32 %v1311, 4294901760
        %1313 = vmatpush1.xpose.msra.mxu0 %v1312
        %1314 = vmatprep.subr.mxu0 0.0
        %v1315 = vand.u32 %v1131, 4294901760
        %v1316 = vsub.f32 %v1131, %v1315
        %v1317 = vand.u32 %v1316, 4294901760
        %v1318 = vsub.f32 %v1316, %v1317
        %v1319 = vand.u32 %v1318, 4294901760
        %1320 = vmatpush1.xpose.msra.mxu0 %v1319
        %1321 = vmatprep.subr.mxu0 0.0
        %v1322 = vand.u32 %v1128, 4294901760
        %v1323 = vsub.f32 %v1128, %v1322
        %v1324 = vand.u32 %v1323, 4294901760
        %v1325 = vsub.f32 %v1323, %v1324
        %v1326 = vand.u32 %v1325, 4294901760
        %1327 = vmatpush1.xpose.msra.mxu0 %v1326
        %1328 = vmatprep.subr.mxu0 0.0
        %v1329 = vand.u32 %v1125, 4294901760
        %v1330 = vsub.f32 %v1125, %v1329
        %v1331 = vand.u32 %v1330, 4294901760
        %v1332 = vsub.f32 %v1330, %v1331
        %v1333 = vand.u32 %v1332, 4294901760
        %1334 = vmatpush1.xpose.msra.mxu0 %v1333
        %1335 = vmatprep.subr.mxu0 0.0
        %v1336 = vand.u32 %v1122, 4294901760
        %v1337 = vsub.f32 %v1122, %v1336
        %v1338 = vand.u32 %v1337, 4294901760
        %v1339 = vsub.f32 %v1337, %v1338
        %v1340 = vand.u32 %v1339, 4294901760
        %1341 = vmatpush1.xpose.msra.mxu0 %v1340
        %1342 = vmatprep.subr.mxu0 0.0
        %v1343 = vand.u32 %v1119, 4294901760
        %v1344 = vsub.f32 %v1119, %v1343
        %v1345 = vand.u32 %v1344, 4294901760
        %v1346 = vsub.f32 %v1344, %v1345
        %v1347 = vand.u32 %v1346, 4294901760
        %1348 = vmatpush1.xpose.msra.mxu0 %v1347
        %1349 = vmatprep.subr.mxu0 0.0
        %v1350 = vand.u32 %v1116, 4294901760
        %v1351 = vsub.f32 %v1116, %v1350
        %v1352 = vand.u32 %v1351, 4294901760
        %v1353 = vsub.f32 %v1351, %v1352
        %v1354 = vand.u32 %v1353, 4294901760
        %1355 = vmatpush1.xpose.msra.mxu0 %v1354
        %1356 = vmatprep.subr.mxu0 0.0
        %v1357 = vand.u32 %v1113, 4294901760
        %v1358 = vsub.f32 %v1113, %v1357
        %v1359 = vand.u32 %v1358, 4294901760
        %v1360 = vsub.f32 %v1358, %v1359
        %v1361 = vand.u32 %v1360, 4294901760
        %1362 = vmatpush1.xpose.msra.mxu0 %v1361
        %1363 = vmatprep.subr.mxu0 0.0
        %1364 = vmatpush2.xpose.msra.mxu0 0.0
        %1365 = vmatprep.subr.mxu0 0.0
        %1366 = vmatpush2.xpose.msra.mxu0 0.0
        %1367 = vmatprep.subr.mxu0 0.0
        %1368 = vmatpush2.xpose.msra.mxu0 0.0
        %1369 = vmatprep.subr.mxu0 0.0
        %1370 = vmatpush2.xpose.msra.mxu0 0.0
        %1371 = vmatprep.subr.mxu0 0.0
        %1372 = vmatpush2.xpose.msra.mxu0 0.0
        %1373 = vmatprep.subr.mxu0 0.0
        %1374 = vmatpush2.xpose.msra.mxu0 0.0
        %1375 = vmatprep.subr.mxu0 0.0
        %1376 = vmatpush2.xpose.msra.mxu0 0.0
        %1377 = vmatprep.subr.mxu0 0.0
        %1378 = vmatpush2.xpose.msra.mxu0 0.0
        %1379 = vmatprep.subr.mxu0 0.0
        %1380 = vmatpush2.xpose.msra.mxu0 0.0
        %1381 = vmatprep.subr.mxu0 0.0
        %1382 = vmatpush2.xpose.msra.mxu0 0.0
        %1383 = vmatprep.subr.mxu0 0.0
        %1384 = vmatpush2.xpose.msra.mxu0 0.0
        %1385 = vmatprep.subr.mxu0 0.0
        %1386 = vmatpush2.xpose.msra.mxu0 0.0
        %1387 = vmatprep.subr.mxu0 0.0
        %1388 = vmatpush2.xpose.msra.mxu0 0.0
        %1389 = vmatprep.subr.mxu0 0.0
        %1390 = vmatpush2.xpose.msra.mxu0 0.0
        %1391 = vmatprep.subr.mxu0 0.0
        %1392 = vmatpush2.xpose.msra.mxu0 0.0
        %1393 = vmatprep.subr.mxu0 0.0
        %1394 = vmatpush2.xpose.msra.mxu0 0.0
        %1395 = vmatprep.mubr.f32.mxu0 0.0
        %v1396 = vand.u32 %v1110, 4294901760
        %1397 = vmatmul.mubr.f32.gmra.mxu0 %v1396
        %v1398 = vpop.f32.mrf.mxu0
        %v1399 = vadd.f32 %v1248, %v1398
        %v1400 = vpop.f32.mrf.mxu0
        %1401 = vdwg.mxu0
        %1402 = vmatprep.subr.mxu0 0.0
        %v1403 = vand.u32 %v1158, 4294901760
        %v1404 = vsub.f32 %v1158, %v1403
        %1405 = vmatpush1.xpose.msra.mxu0 %v1404
        %1406 = vmatprep.subr.mxu0 0.0
        %v1407 = vand.u32 %v1155, 4294901760
        %v1408 = vsub.f32 %v1155, %v1407
        %1409 = vmatpush1.xpose.msra.mxu0 %v1408
        %1410 = vmatprep.subr.mxu0 0.0
        %v1411 = vand.u32 %v1152, 4294901760
        %v1412 = vsub.f32 %v1152, %v1411
        %1413 = vmatpush1.xpose.msra.mxu0 %v1412
        %1414 = vmatprep.subr.mxu0 0.0
        %v1415 = vand.u32 %v1149, 4294901760
        %v1416 = vsub.f32 %v1149, %v1415
        %1417 = vmatpush1.xpose.msra.mxu0 %v1416
        %1418 = vmatprep.subr.mxu0 0.0
        %v1419 = vand.u32 %v1146, 4294901760
        %v1420 = vsub.f32 %v1146, %v1419
        %1421 = vmatpush1.xpose.msra.mxu0 %v1420
        %1422 = vmatprep.subr.mxu0 0.0
        %v1423 = vand.u32 %v1143, 4294901760
        %v1424 = vsub.f32 %v1143, %v1423
        %1425 = vmatpush1.xpose.msra.mxu0 %v1424
        %1426 = vmatprep.subr.mxu0 0.0
        %v1427 = vand.u32 %v1140, 4294901760
        %v1428 = vsub.f32 %v1140, %v1427
        %1429 = vmatpush1.xpose.msra.mxu0 %v1428
        %1430 = vmatprep.subr.mxu0 0.0
        %v1431 = vand.u32 %v1137, 4294901760
        %v1432 = vsub.f32 %v1137, %v1431
        %1433 = vmatpush1.xpose.msra.mxu0 %v1432
        %1434 = vmatprep.subr.mxu0 0.0
        %v1435 = vand.u32 %v1134, 4294901760
        %v1436 = vsub.f32 %v1134, %v1435
        %1437 = vmatpush1.xpose.msra.mxu0 %v1436
        %1438 = vmatprep.subr.mxu0 0.0
        %v1439 = vand.u32 %v1131, 4294901760
        %v1440 = vsub.f32 %v1131, %v1439
        %1441 = vmatpush1.xpose.msra.mxu0 %v1440
        %1442 = vmatprep.subr.mxu0 0.0
        %v1443 = vand.u32 %v1128, 4294901760
        %v1444 = vsub.f32 %v1128, %v1443
        %1445 = vmatpush1.xpose.msra.mxu0 %v1444
        %1446 = vmatprep.subr.mxu0 0.0
        %v1447 = vand.u32 %v1125, 4294901760
        %v1448 = vsub.f32 %v1125, %v1447
        %1449 = vmatpush1.xpose.msra.mxu0 %v1448
        %1450 = vmatprep.subr.mxu0 0.0
        %v1451 = vand.u32 %v1122, 4294901760
        %v1452 = vsub.f32 %v1122, %v1451
        %1453 = vmatpush1.xpose.msra.mxu0 %v1452
        %1454 = vmatprep.subr.mxu0 0.0
        %v1455 = vand.u32 %v1119, 4294901760
        %v1456 = vsub.f32 %v1119, %v1455
        %1457 = vmatpush1.xpose.msra.mxu0 %v1456
        %1458 = vmatprep.subr.mxu0 0.0
        %v1459 = vand.u32 %v1116, 4294901760
        %v1460 = vsub.f32 %v1116, %v1459
        %1461 = vmatpush1.xpose.msra.mxu0 %v1460
        %1462 = vmatprep.subr.mxu0 0.0
        %v1463 = vand.u32 %v1113, 4294901760
        %v1464 = vsub.f32 %v1113, %v1463
        %1465 = vmatpush1.xpose.msra.mxu0 %v1464
        %1466 = vmatprep.subr.mxu0 0.0
        %1467 = vmatpush2.xpose.msra.mxu0 0.0
        %1468 = vmatprep.subr.mxu0 0.0
        %1469 = vmatpush2.xpose.msra.mxu0 0.0
        %1470 = vmatprep.subr.mxu0 0.0
        %1471 = vmatpush2.xpose.msra.mxu0 0.0
        %1472 = vmatprep.subr.mxu0 0.0
        %1473 = vmatpush2.xpose.msra.mxu0 0.0
        %1474 = vmatprep.subr.mxu0 0.0
        %1475 = vmatpush2.xpose.msra.mxu0 0.0
        %1476 = vmatprep.subr.mxu0 0.0
        %1477 = vmatpush2.xpose.msra.mxu0 0.0
        %1478 = vmatprep.subr.mxu0 0.0
        %1479 = vmatpush2.xpose.msra.mxu0 0.0
        %1480 = vmatprep.subr.mxu0 0.0
        %1481 = vmatpush2.xpose.msra.mxu0 0.0
        %1482 = vmatprep.subr.mxu0 0.0
        %1483 = vmatpush2.xpose.msra.mxu0 0.0
        %1484 = vmatprep.subr.mxu0 0.0
        %1485 = vmatpush2.xpose.msra.mxu0 0.0
        %1486 = vmatprep.subr.mxu0 0.0
        %1487 = vmatpush2.xpose.msra.mxu0 0.0
        %1488 = vmatprep.subr.mxu0 0.0
        %1489 = vmatpush2.xpose.msra.mxu0 0.0
        %1490 = vmatprep.subr.mxu0 0.0
        %1491 = vmatpush2.xpose.msra.mxu0 0.0
        %1492 = vmatprep.subr.mxu0 0.0
        %1493 = vmatpush2.xpose.msra.mxu0 0.0
        %1494 = vmatprep.subr.mxu0 0.0
        %1495 = vmatpush2.xpose.msra.mxu0 0.0
        %1496 = vmatprep.subr.mxu0 0.0
        %1497 = vmatpush2.xpose.msra.mxu0 0.0
        %1498 = vmatprep.mubr.f32.mxu0 0.0
        %v1499 = vand.u32 %v1110, 4294901760
        %v1500 = vsub.f32 %v1110, %v1499
        %1501 = vmatmul.mubr.f32.gmra.mxu0 %v1500
        %v1502 = vpop.f32.mrf.mxu0
        %v1503 = vadd.f32 %v1399, %v1502
        %v1504 = vpop.f32.mrf.mxu0
        %1505 = vdwg.mxu0
        %1506 = vmatprep.subr.mxu0 0.0
        %v1507 = vand.u32 %v1158, 4294901760
        %1508 = vmatpush1.xpose.msra.mxu0 %v1507
        %1509 = vmatprep.subr.mxu0 0.0
        %v1510 = vand.u32 %v1155, 4294901760
        %1511 = vmatpush1.xpose.msra.mxu0 %v1510
        %1512 = vmatprep.subr.mxu0 0.0
        %v1513 = vand.u32 %v1152, 4294901760
        %1514 = vmatpush1.xpose.msra.mxu0 %v1513
        %1515 = vmatprep.subr.mxu0 0.0
        %v1516 = vand.u32 %v1149, 4294901760
        %1517 = vmatpush1.xpose.msra.mxu0 %v1516
        %1518 = vmatprep.subr.mxu0 0.0
        %v1519 = vand.u32 %v1146, 4294901760
        %1520 = vmatpush1.xpose.msra.mxu0 %v1519
        %1521 = vmatprep.subr.mxu0 0.0
        %v1522 = vand.u32 %v1143, 4294901760
        %1523 = vmatpush1.xpose.msra.mxu0 %v1522
        %1524 = vmatprep.subr.mxu0 0.0
        %v1525 = vand.u32 %v1140, 4294901760
        %1526 = vmatpush1.xpose.msra.mxu0 %v1525
        %1527 = vmatprep.subr.mxu0 0.0
        %v1528 = vand.u32 %v1137, 4294901760
        %1529 = vmatpush1.xpose.msra.mxu0 %v1528
        %1530 = vmatprep.subr.mxu0 0.0
        %v1531 = vand.u32 %v1134, 4294901760
        %1532 = vmatpush1.xpose.msra.mxu0 %v1531
        %1533 = vmatprep.subr.mxu0 0.0
        %v1534 = vand.u32 %v1131, 4294901760
        %1535 = vmatpush1.xpose.msra.mxu0 %v1534
        %1536 = vmatprep.subr.mxu0 0.0
        %v1537 = vand.u32 %v1128, 4294901760
        %1538 = vmatpush1.xpose.msra.mxu0 %v1537
        %1539 = vmatprep.subr.mxu0 0.0
        %v1540 = vand.u32 %v1125, 4294901760
        %1541 = vmatpush1.xpose.msra.mxu0 %v1540
        %1542 = vmatprep.subr.mxu0 0.0
        %v1543 = vand.u32 %v1122, 4294901760
        %1544 = vmatpush1.xpose.msra.mxu0 %v1543
        %1545 = vmatprep.subr.mxu0 0.0
        %v1546 = vand.u32 %v1119, 4294901760
        %1547 = vmatpush1.xpose.msra.mxu0 %v1546
        %1548 = vmatprep.subr.mxu0 0.0
        %v1549 = vand.u32 %v1116, 4294901760
        %1550 = vmatpush1.xpose.msra.mxu0 %v1549
        %1551 = vmatprep.subr.mxu0 0.0
        %v1552 = vand.u32 %v1113, 4294901760
        %1553 = vmatpush1.xpose.msra.mxu0 %v1552
        %1554 = vmatprep.subr.mxu0 0.0
        %1555 = vmatpush2.xpose.msra.mxu0 0.0
        %1556 = vmatprep.subr.mxu0 0.0
        %1557 = vmatpush2.xpose.msra.mxu0 0.0
        %1558 = vmatprep.subr.mxu0 0.0
        %1559 = vmatpush2.xpose.msra.mxu0 0.0
        %1560 = vmatprep.subr.mxu0 0.0
        %1561 = vmatpush2.xpose.msra.mxu0 0.0
        %1562 = vmatprep.subr.mxu0 0.0
        %1563 = vmatpush2.xpose.msra.mxu0 0.0
        %1564 = vmatprep.subr.mxu0 0.0
        %1565 = vmatpush2.xpose.msra.mxu0 0.0
        %1566 = vmatprep.subr.mxu0 0.0
        %1567 = vmatpush2.xpose.msra.mxu0 0.0
        %1568 = vmatprep.subr.mxu0 0.0
        %1569 = vmatpush2.xpose.msra.mxu0 0.0
        %1570 = vmatprep.subr.mxu0 0.0
        %1571 = vmatpush2.xpose.msra.mxu0 0.0
        %1572 = vmatprep.subr.mxu0 0.0
        %1573 = vmatpush2.xpose.msra.mxu0 0.0
        %1574 = vmatprep.subr.mxu0 0.0
        %1575 = vmatpush2.xpose.msra.mxu0 0.0
        %1576 = vmatprep.subr.mxu0 0.0
        %1577 = vmatpush2.xpose.msra.mxu0 0.0
        %1578 = vmatprep.subr.mxu0 0.0
        %1579 = vmatpush2.xpose.msra.mxu0 0.0
        %1580 = vmatprep.subr.mxu0 0.0
        %1581 = vmatpush2.xpose.msra.mxu0 0.0
        %1582 = vmatprep.subr.mxu0 0.0
        %1583 = vmatpush2.xpose.msra.mxu0 0.0
        %1584 = vmatprep.subr.mxu0 0.0
        %1585 = vmatpush2.xpose.msra.mxu0 0.0
        %1586 = vmatprep.mubr.f32.mxu0 0.0
        %v1587 = vand.u32 %v1110, 4294901760
        %v1588 = vsub.f32 %v1110, %v1587
        %v1589 = vand.u32 %v1588, 4294901760
        %1590 = vmatmul.mubr.f32.gmra.mxu0 %v1589
        %v1591 = vpop.f32.mrf.mxu0
        %v1592 = vadd.f32 %v1503, %v1591
        %v1593 = vpop.f32.mrf.mxu0
        %1594 = vdwg.mxu0
        %1595 = vmatprep.subr.mxu0 0.0
        %v1596 = vand.u32 %v1158, 4294901760
        %v1597 = vsub.f32 %v1158, %v1596
        %v1598 = vand.u32 %v1597, 4294901760
        %1599 = vmatpush1.xpose.msra.mxu0 %v1598
        %1600 = vmatprep.subr.mxu0 0.0
        %v1601 = vand.u32 %v1155, 4294901760
        %v1602 = vsub.f32 %v1155, %v1601
        %v1603 = vand.u32 %v1602, 4294901760
        %1604 = vmatpush1.xpose.msra.mxu0 %v1603
        %1605 = vmatprep.subr.mxu0 0.0
        %v1606 = vand.u32 %v1152, 4294901760
        %v1607 = vsub.f32 %v1152, %v1606
        %v1608 = vand.u32 %v1607, 4294901760
        %1609 = vmatpush1.xpose.msra.mxu0 %v1608
        %1610 = vmatprep.subr.mxu0 0.0
        %v1611 = vand.u32 %v1149, 4294901760
        %v1612 = vsub.f32 %v1149, %v1611
        %v1613 = vand.u32 %v1612, 4294901760
        %1614 = vmatpush1.xpose.msra.mxu0 %v1613
        %1615 = vmatprep.subr.mxu0 0.0
        %v1616 = vand.u32 %v1146, 4294901760
        %v1617 = vsub.f32 %v1146, %v1616
        %v1618 = vand.u32 %v1617, 4294901760
        %1619 = vmatpush1.xpose.msra.mxu0 %v1618
        %1620 = vmatprep.subr.mxu0 0.0
        %v1621 = vand.u32 %v1143, 4294901760
        %v1622 = vsub.f32 %v1143, %v1621
        %v1623 = vand.u32 %v1622, 4294901760
        %1624 = vmatpush1.xpose.msra.mxu0 %v1623
        %1625 = vmatprep.subr.mxu0 0.0
        %v1626 = vand.u32 %v1140, 4294901760
        %v1627 = vsub.f32 %v1140, %v1626
        %v1628 = vand.u32 %v1627, 4294901760
        %1629 = vmatpush1.xpose.msra.mxu0 %v1628
        %1630 = vmatprep.subr.mxu0 0.0
        %v1631 = vand.u32 %v1137, 4294901760
        %v1632 = vsub.f32 %v1137, %v1631
        %v1633 = vand.u32 %v1632, 4294901760
        %1634 = vmatpush1.xpose.msra.mxu0 %v1633
        %1635 = vmatprep.subr.mxu0 0.0
        %v1636 = vand.u32 %v1134, 4294901760
        %v1637 = vsub.f32 %v1134, %v1636
        %v1638 = vand.u32 %v1637, 4294901760
        %1639 = vmatpush1.xpose.msra.mxu0 %v1638
        %1640 = vmatprep.subr.mxu0 0.0
        %v1641 = vand.u32 %v1131, 4294901760
        %v1642 = vsub.f32 %v1131, %v1641
        %v1643 = vand.u32 %v1642, 4294901760
        %1644 = vmatpush1.xpose.msra.mxu0 %v1643
        %1645 = vmatprep.subr.mxu0 0.0
        %v1646 = vand.u32 %v1128, 4294901760
        %v1647 = vsub.f32 %v1128, %v1646
        %v1648 = vand.u32 %v1647, 4294901760
        %1649 = vmatpush1.xpose.msra.mxu0 %v1648
        %1650 = vmatprep.subr.mxu0 0.0
        %v1651 = vand.u32 %v1125, 4294901760
        %v1652 = vsub.f32 %v1125, %v1651
        %v1653 = vand.u32 %v1652, 4294901760
        %1654 = vmatpush1.xpose.msra.mxu0 %v1653
        %1655 = vmatprep.subr.mxu0 0.0
        %v1656 = vand.u32 %v1122, 4294901760
        %v1657 = vsub.f32 %v1122, %v1656
        %v1658 = vand.u32 %v1657, 4294901760
        %1659 = vmatpush1.xpose.msra.mxu0 %v1658
        %1660 = vmatprep.subr.mxu0 0.0
        %v1661 = vand.u32 %v1119, 4294901760
        %v1662 = vsub.f32 %v1119, %v1661
        %v1663 = vand.u32 %v1662, 4294901760
        %1664 = vmatpush1.xpose.msra.mxu0 %v1663
        %1665 = vmatprep.subr.mxu0 0.0
        %v1666 = vand.u32 %v1116, 4294901760
        %v1667 = vsub.f32 %v1116, %v1666
        %v1668 = vand.u32 %v1667, 4294901760
        %1669 = vmatpush1.xpose.msra.mxu0 %v1668
        %1670 = vmatprep.subr.mxu0 0.0
        %v1671 = vand.u32 %v1113, 4294901760
        %v1672 = vsub.f32 %v1113, %v1671
        %v1673 = vand.u32 %v1672, 4294901760
        %1674 = vmatpush1.xpose.msra.mxu0 %v1673
        %1675 = vmatprep.subr.mxu0 0.0
        %1676 = vmatpush2.xpose.msra.mxu0 0.0
        %1677 = vmatprep.subr.mxu0 0.0
        %1678 = vmatpush2.xpose.msra.mxu0 0.0
        %1679 = vmatprep.subr.mxu0 0.0
        %1680 = vmatpush2.xpose.msra.mxu0 0.0
        %1681 = vmatprep.subr.mxu0 0.0
        %1682 = vmatpush2.xpose.msra.mxu0 0.0
        %1683 = vmatprep.subr.mxu0 0.0
        %1684 = vmatpush2.xpose.msra.mxu0 0.0
        %1685 = vmatprep.subr.mxu0 0.0
        %1686 = vmatpush2.xpose.msra.mxu0 0.0
        %1687 = vmatprep.subr.mxu0 0.0
        %1688 = vmatpush2.xpose.msra.mxu0 0.0
        %1689 = vmatprep.subr.mxu0 0.0
        %1690 = vmatpush2.xpose.msra.mxu0 0.0
        %1691 = vmatprep.subr.mxu0 0.0
        %1692 = vmatpush2.xpose.msra.mxu0 0.0
        %1693 = vmatprep.subr.mxu0 0.0
        %1694 = vmatpush2.xpose.msra.mxu0 0.0
        %1695 = vmatprep.subr.mxu0 0.0
        %1696 = vmatpush2.xpose.msra.mxu0 0.0
        %1697 = vmatprep.subr.mxu0 0.0
        %1698 = vmatpush2.xpose.msra.mxu0 0.0
        %1699 = vmatprep.subr.mxu0 0.0
        %1700 = vmatpush2.xpose.msra.mxu0 0.0
        %1701 = vmatprep.subr.mxu0 0.0
        %1702 = vmatpush2.xpose.msra.mxu0 0.0
        %1703 = vmatprep.subr.mxu0 0.0
        %1704 = vmatpush2.xpose.msra.mxu0 0.0
        %1705 = vmatprep.subr.mxu0 0.0
        %1706 = vmatpush2.xpose.msra.mxu0 0.0
        %1707 = vmatprep.mubr.f32.mxu0 0.0
        %v1708 = vand.u32 %v1110, 4294901760
        %1709 = vmatmul.mubr.f32.gmra.mxu0 %v1708
        %v1710 = vpop.f32.mrf.mxu0
        %v1711 = vadd.f32 %v1592, %v1710
        %v1712 = vpop.f32.mrf.mxu0
        %1713 = vdwg.mxu0
        %1714 = vmatprep.subr.mxu0 0.0
        %v1715 = vand.u32 %v1158, 4294901760
        %1716 = vmatpush1.xpose.msra.mxu0 %v1715
        %1717 = vmatprep.subr.mxu0 0.0
        %v1718 = vand.u32 %v1155, 4294901760
        %1719 = vmatpush1.xpose.msra.mxu0 %v1718
        %1720 = vmatprep.subr.mxu0 0.0
        %v1721 = vand.u32 %v1152, 4294901760
        %1722 = vmatpush1.xpose.msra.mxu0 %v1721
        %1723 = vmatprep.subr.mxu0 0.0
        %v1724 = vand.u32 %v1149, 4294901760
        %1725 = vmatpush1.xpose.msra.mxu0 %v1724
        %1726 = vmatprep.subr.mxu0 0.0
        %v1727 = vand.u32 %v1146, 4294901760
        %1728 = vmatpush1.xpose.msra.mxu0 %v1727
        %1729 = vmatprep.subr.mxu0 0.0
        %v1730 = vand.u32 %v1143, 4294901760
        %1731 = vmatpush1.xpose.msra.mxu0 %v1730
        %1732 = vmatprep.subr.mxu0 0.0
        %v1733 = vand.u32 %v1140, 4294901760
        %1734 = vmatpush1.xpose.msra.mxu0 %v1733
        %1735 = vmatprep.subr.mxu0 0.0
        %v1736 = vand.u32 %v1137, 4294901760
        %1737 = vmatpush1.xpose.msra.mxu0 %v1736
        %1738 = vmatprep.subr.mxu0 0.0
        %v1739 = vand.u32 %v1134, 4294901760
        %1740 = vmatpush1.xpose.msra.mxu0 %v1739
        %1741 = vmatprep.subr.mxu0 0.0
        %v1742 = vand.u32 %v1131, 4294901760
        %1743 = vmatpush1.xpose.msra.mxu0 %v1742
        %1744 = vmatprep.subr.mxu0 0.0
        %v1745 = vand.u32 %v1128, 4294901760
        %1746 = vmatpush1.xpose.msra.mxu0 %v1745
        %1747 = vmatprep.subr.mxu0 0.0
        %v1748 = vand.u32 %v1125, 4294901760
        %1749 = vmatpush1.xpose.msra.mxu0 %v1748
        %1750 = vmatprep.subr.mxu0 0.0
        %v1751 = vand.u32 %v1122, 4294901760
        %1752 = vmatpush1.xpose.msra.mxu0 %v1751
        %1753 = vmatprep.subr.mxu0 0.0
        %v1754 = vand.u32 %v1119, 4294901760
        %1755 = vmatpush1.xpose.msra.mxu0 %v1754
        %1756 = vmatprep.subr.mxu0 0.0
        %v1757 = vand.u32 %v1116, 4294901760
        %1758 = vmatpush1.xpose.msra.mxu0 %v1757
        %1759 = vmatprep.subr.mxu0 0.0
        %v1760 = vand.u32 %v1113, 4294901760
        %1761 = vmatpush1.xpose.msra.mxu0 %v1760
        %1762 = vmatprep.subr.mxu0 0.0
        %1763 = vmatpush2.xpose.msra.mxu0 0.0
        %1764 = vmatprep.subr.mxu0 0.0
        %1765 = vmatpush2.xpose.msra.mxu0 0.0
        %1766 = vmatprep.subr.mxu0 0.0
        %1767 = vmatpush2.xpose.msra.mxu0 0.0
        %1768 = vmatprep.subr.mxu0 0.0
        %1769 = vmatpush2.xpose.msra.mxu0 0.0
        %1770 = vmatprep.subr.mxu0 0.0
        %1771 = vmatpush2.xpose.msra.mxu0 0.0
        %1772 = vmatprep.subr.mxu0 0.0
        %1773 = vmatpush2.xpose.msra.mxu0 0.0
        %1774 = vmatprep.subr.mxu0 0.0
        %1775 = vmatpush2.xpose.msra.mxu0 0.0
        %1776 = vmatprep.subr.mxu0 0.0
        %1777 = vmatpush2.xpose.msra.mxu0 0.0
        %1778 = vmatprep.subr.mxu0 0.0
        %1779 = vmatpush2.xpose.msra.mxu0 0.0
        %1780 = vmatprep.subr.mxu0 0.0
        %1781 = vmatpush2.xpose.msra.mxu0 0.0
        %1782 = vmatprep.subr.mxu0 0.0
        %1783 = vmatpush2.xpose.msra.mxu0 0.0
        %1784 = vmatprep.subr.mxu0 0.0
        %1785 = vmatpush2.xpose.msra.mxu0 0.0
        %1786 = vmatprep.subr.mxu0 0.0
        %1787 = vmatpush2.xpose.msra.mxu0 0.0
        %1788 = vmatprep.subr.mxu0 0.0
        %1789 = vmatpush2.xpose.msra.mxu0 0.0
        %1790 = vmatprep.subr.mxu0 0.0
        %1791 = vmatpush2.xpose.msra.mxu0 0.0
        %1792 = vmatprep.subr.mxu0 0.0
        %1793 = vmatpush2.xpose.msra.mxu0 0.0
        %1794 = vmatprep.mubr.f32.mxu0 0.0
        %v1795 = vand.u32 %v1110, 4294901760
        %1796 = vmatmul.mubr.f32.gmra.mxu0 %v1795
        %v1797 = vpop.f32.mrf.mxu0
        %v1798 = vadd.f32 %v1711, %v1797
        %v1799 = vpop.f32.mrf.mxu0
        %1800 = vdwg.mxu0
        %v1801 = vsel %vm402, %v1106, 0.0
        %v1802 = vsel %vm403, %v1798, 0.0
        %1803 = vrot.lane.b32.xlu0 %v324, 2
        %v1804 = vpop.permute.xlu0 %1803
        %1805 = vrot.lane.b32.xlu0 %v325, 2
        %v1806 = vpop.permute.xlu0 %1805
        %v1809 = vsub.f32 %v324, %v1804
        %v1810 = vsub.f32 %v325, %v1806
        %v1811 = vadd.f32 %v1809, 1e-07
        %v1812 = vadd.f32 %v1810, 1e-07
        %v1815 = vrot.slane %v321, 6
        %v1816 = vrot.slane %v322, 6
        %v1819 = vsub.f32 %v321, %v1815
        %v1820 = vsub.f32 %v322, %v1816
        %v1821 = vadd.f32 %v1819, 1e-07
        %v1822 = vadd.f32 %v1820, 1e-07
        %v1823 = vlaneseq
        %v1824 = vshrl.u32 %v1823, 7
        %v1825 = vsub.s32 2, %v1824
        %v1826 = vrot.slane %v321, %v1825
        %v1827 = vlaneseq
        %v1828 = vshrl.u32 %v1827, 7
        %v1829 = vsub.s32 2, %v1828
        %v1830 = vrot.slane %v322, %v1829
        %v1831 = vmin.f32 %v366, %v1826
        %v1832 = vmin.f32 %v370, %v1830
        %v1833 = vlaneseq
        %v1834 = vshrl.u32 %v1833, 7
        %v1835 = vsub.s32 0, %v1834
        %v1836 = vrot.slane %v321, %v1835
        %v1837 = vlaneseq
        %v1838 = vshrl.u32 %v1837, 7
        %v1839 = vsub.s32 0, %v1838
        %v1840 = vrot.slane %v322, %v1839
        %v1841 = vmax.f32 %v339, %v1836
        %v1842 = vmax.f32 %v344, %v1840
        %v1843 = vsub.f32 %v1831, %v1841
        %v1844 = vsub.f32 %v1832, %v1842
        %v1845 = vmax.f32 %v1843, 0.0
        %v1846 = vmax.f32 %v1844, 0.0
        %v1847 = vlaneseq
        %v1848 = vshrl.u32 %v1847, 7
        %v1849 = vsub.s32 3, %v1848
        %v1850 = vrot.slane %v321, %v1849
        %v1851 = vlaneseq
        %v1852 = vshrl.u32 %v1851, 7
        %v1853 = vsub.s32 3, %v1852
        %v1854 = vrot.slane %v322, %v1853
        %v1855 = vmin.f32 %v376, %v1850
        %v1856 = vmin.f32 %v380, %v1854
        %v1857 = vlaneseq
        %v1858 = vshrl.u32 %v1857, 7
        %v1859 = vsub.s32 1, %v1858
        %v1860 = vrot.slane %v321, %v1859
        %v1861 = vlaneseq
        %v1862 = vshrl.u32 %v1861, 7
        %v1863 = vsub.s32 1, %v1862
        %v1864 = vrot.slane %v322, %v1863
        %v1865 = vmax.f32 %v354, %v1860
        %v1866 = vmax.f32 %v358, %v1864
        %v1867 = vsub.f32 %v1855, %v1865
        %v1868 = vsub.f32 %v1856, %v1866
        %v1869 = vmax.f32 %v1867, 0.0
        %v1870 = vmax.f32 %v1868, 0.0
        %v1871 = vmul.f32 %v1845, %v1869
        %v1872 = vmul.f32 %v1846, %v1870
        %1875 = vrot.lane.b32.xlu0 %v1811, 127
        %v1876 = vpop.permute.xlu0 %1875
        %1877 = vrot.lane.b32.xlu0 %v1812, 127
        %v1878 = vpop.permute.xlu0 %1877
        %v1881 = vmul.f32 %v1809, %v1876
        %v1882 = vmul.f32 %v1810, %v1878
        %v1885 = vrot.slane %v1821, 1
        %v1886 = vrot.slane %v1822, 1
        %v1889 = vmul.f32 %v1819, %v1885
        %v1890 = vmul.f32 %v1820, %v1886
        %1892 = vset.pattern.permute.xlu0 2
        %1893 = vperm.xlu0 %1892, %v1881
        %v1894 = vpop.permute.xlu0 %1893
        %1897 = vset.pattern.permute.xlu0 2
        %1898 = vperm.xlu0 %1897, %v1882
        %v1899 = vpop.permute.xlu0 %1898
        %v1901 = vlaneseq
        %v1902 = vshrl.u32 %v1901, 7
        %v1903 = vsub.s32 2, %v1902
        %v1904 = vrot.slane %v1889, %v1903
        %v1905 = vlaneseq
        %v1906 = vshrl.u32 %v1905, 7
        %v1907 = vsub.s32 2, %v1906
        %v1908 = vrot.slane %v1890, %v1907
        %v1909 = vadd.f32 %v1894, %v1904
        %v1910 = vadd.f32 %v1899, %v1908
        %v1911 = vsub.f32 %v1909, %v1871
        %v1912 = vsub.f32 %v1910, %v1872
        %v1913 = vadd.f32 %v1911, 1e-07
        %v1914 = vadd.f32 %v1912, 1e-07
        %v1915 = vrcp.pop %v1913
        %v1916 = vrcp.pop %v1914
        %v1917 = vmul.f32 %v1871, %v1915
        %v1918 = vmul.f32 %v1872, %v1916
        %v1919 = vmax.f32 %v366, %v1826
        %v1920 = vmax.f32 %v370, %v1830
        %v1921 = vmin.f32 %v339, %v1836
        %v1922 = vmin.f32 %v344, %v1840
        %v1923 = vsub.f32 %v1919, %v1921
        %v1924 = vsub.f32 %v1920, %v1922
        %v1925 = vmax.f32 %v376, %v1850
        %v1926 = vmax.f32 %v380, %v1854
        %v1927 = vmin.f32 %v354, %v1860
        %v1928 = vmin.f32 %v358, %v1864
        %v1929 = vsub.f32 %v1925, %v1927
        %v1930 = vsub.f32 %v1926, %v1928
        %v1931 = vmul.f32 %v1923, %v1923
        %v1932 = vmul.f32 %v1924, %v1924
        %v1933 = vmul.f32 %v1929, %v1929
        %v1934 = vmul.f32 %v1930, %v1930
        %v1935 = vadd.f32 %v1931, %v1933
        %v1936 = vadd.f32 %v1932, %v1934
        %v1937 = vadd.f32 %v1935, 1e-07
        %v1938 = vadd.f32 %v1936, 1e-07
        %v1939 = vrot.slane %v321, 2
        %v1940 = vrot.slane %v322, 2
        %v1943 = vadd.f32 %v321, %v1939
        %v1944 = vadd.f32 %v322, %v1940
        %v1945 = vlaneseq
        %v1946 = vshrl.u32 %v1945, 7
        %v1947 = vsub.s32 0, %v1946
        %v1948 = vrot.slane %v1943, %v1947
        %v1949 = vlaneseq
        %v1950 = vshrl.u32 %v1949, 7
        %v1951 = vsub.s32 0, %v1950
        %v1952 = vrot.slane %v1944, %v1951
        %v1953 = vsub.f32 %v1948, %v339
        %v1954 = vsub.f32 %v1952, %v344
        %v1955 = vsub.f32 %v1953, %v366
        %v1956 = vsub.f32 %v1954, %v370
        %v1957 = vmul.f32 %v1955, %v1955
        %v1958 = vmul.f32 %v1956, %v1956
        %v1959 = vlaneseq
        %v1960 = vshrl.u32 %v1959, 7
        %v1961 = vsub.s32 1, %v1960
        %v1962 = vrot.slane %v1943, %v1961
        %v1963 = vlaneseq
        %v1964 = vshrl.u32 %v1963, 7
        %v1965 = vsub.s32 1, %v1964
        %v1966 = vrot.slane %v1944, %v1965
        %v1967 = vsub.f32 %v1962, %v354
        %v1968 = vsub.f32 %v1966, %v358
        %v1969 = vsub.f32 %v1967, %v376
        %v1970 = vsub.f32 %v1968, %v380
        %v1971 = vmul.f32 %v1969, %v1969
        %v1972 = vmul.f32 %v1970, %v1970
        %v1973 = vadd.f32 %v1957, %v1971
        %v1974 = vadd.f32 %v1958, %v1972
        %v1975 = vmul.f32 %v1973, 0.25
        %v1976 = vmul.f32 %v1974, 0.25
        %v1977 = vrcp.pop %v1821
        %v1978 = vrcp.pop %v1822
        %v1981 = vrot.slane %v1977, 1
        %v1982 = vrot.slane %v1978, 1
        %v1985 = vmul.f32 %v1819, %v1981
        %v1986 = vmul.f32 %v1820, %v1982
        %vm1987 = vcmp.lt.f32.partialorder %v1985, 0.0
        %vm1988 = vcmp.lt.f32.partialorder %v1986, 0.0
        %v1989 = vsel %vm1987, -1.0, 1.0
        %v1990 = vsel %vm1988, -1.0, 1.0
        %v1991 = vand.u32 2147483647, %v1985
        %v1992 = vand.u32 2147483647, %v1986
        %vm1993 = vcmp.gt.f32.partialorder %v1991, 2.4142137
        %vm1994 = vcmp.gt.f32.partialorder %v1992, 2.4142137
        %vm1995 = vcmp.gt.f32.partialorder %v1991, 0.41421357
        %vm1996 = vcmp.gt.f32.partialorder %v1992, 0.41421357
        %vm1997 = vmxor %vm1993, 1
        %vm1998 = vmxor %vm1994, 1
        %vm1999 = vmand %vm1995, %vm1997
        %vm2000 = vmand %vm1996, %vm1998
        %v2001 = vsel %vm1999, 0.7853982, 0.0
        %v2002 = vsel %vm2000, 0.7853982, 0.0
        %v2003 = vsel %vm1993, 1.5707964, %v2001
        %v2004 = vsel %vm1994, 1.5707964, %v2002
        %v2005 = vmax.f32 %v1991, 1e-20
        %v2006 = vmax.f32 %v1992, 1e-20
        %v2007 = vrcp.pop %v2005
        %v2008 = vrcp.pop %v2006
        %v2009 = vsub.f32 0.0, %v2007
        %v2010 = vsub.f32 0.0, %v2008
        %v2011 = vsub.f32 %v1991, 1.0
        %v2012 = vsub.f32 %v1992, 1.0
        %v2013 = vadd.f32 %v1991, 1.0
        %v2014 = vadd.f32 %v1992, 1.0
        %v2015 = vrcp.pop %v2013
        %v2016 = vrcp.pop %v2014
        %v2017 = vmul.f32 %v2011, %v2015
        %v2018 = vmul.f32 %v2012, %v2016
        %v2019 = vsel %vm1999, %v2017, %v1991
        %v2020 = vsel %vm2000, %v2018, %v1992
        %v2021 = vsel %vm1993, %v2009, %v2019
        %v2022 = vsel %vm1994, %v2010, %v2020
        %v2023 = vmul.f32 %v2021, %v2021
        %v2024 = vmul.f32 %v2022, %v2022
        %v2025 = vmul.f32 %v2023, 0.080537446
        %v2026 = vmul.f32 %v2024, 0.080537446
        %v2027 = vsub.f32 %v2025, 0.13877685
        %v2028 = vsub.f32 %v2026, 0.13877685
        %v2029 = vmul.f32 %v2027, %v2023
        %v2030 = vmul.f32 %v2028, %v2024
        %v2031 = vadd.f32 %v2029, 0.19977711
        %v2032 = vadd.f32 %v2030, 0.19977711
        %v2033 = vmul.f32 %v2031, %v2023
        %v2034 = vmul.f32 %v2032, %v2024
        %v2035 = vsub.f32 %v2033, 0.3333295
        %v2036 = vsub.f32 %v2034, 0.3333295
        %v2037 = vmul.f32 %v2035, %v2023
        %v2038 = vmul.f32 %v2036, %v2024
        %v2039 = vmul.f32 %v2037, %v2021
        %v2040 = vmul.f32 %v2038, %v2022
        %v2041 = vadd.f32 %v2039, %v2021
        %v2042 = vadd.f32 %v2040, %v2022
        %v2043 = vadd.f32 %v2003, %v2041
        %v2044 = vadd.f32 %v2004, %v2042
        %v2045 = vmul.f32 %v1989, %v2043
        %v2046 = vmul.f32 %v1990, %v2044
        %v2047 = vrcp.pop %v1811
        %v2048 = vrcp.pop %v1812
        %2051 = vrot.lane.b32.xlu0 %v2047, 127
        %v2052 = vpop.permute.xlu0 %2051
        %2053 = vrot.lane.b32.xlu0 %v2048, 127
        %v2054 = vpop.permute.xlu0 %2053
        %v2057 = vmul.f32 %v1809, %v2052
        %v2058 = vmul.f32 %v1810, %v2054
        %vm2059 = vcmp.lt.f32.partialorder %v2057, 0.0
        %vm2060 = vcmp.lt.f32.partialorder %v2058, 0.0
        %v2061 = vsel %vm2059, -1.0, 1.0
        %v2062 = vsel %vm2060, -1.0, 1.0
        %v2063 = vand.u32 2147483647, %v2057
        %v2064 = vand.u32 2147483647, %v2058
        %vm2065 = vcmp.gt.f32.partialorder %v2063, 2.4142137
        %vm2066 = vcmp.gt.f32.partialorder %v2064, 2.4142137
        %vm2067 = vcmp.gt.f32.partialorder %v2063, 0.41421357
        %vm2068 = vcmp.gt.f32.partialorder %v2064, 0.41421357
        %vm2069 = vmxor %vm2065, 1
        %vm2070 = vmxor %vm2066, 1
        %vm2071 = vmand %vm2067, %vm2069
        %vm2072 = vmand %vm2068, %vm2070
        %v2073 = vsel %vm2071, 0.7853982, 0.0
        %v2074 = vsel %vm2072, 0.7853982, 0.0
        %v2075 = vsel %vm2065, 1.5707964, %v2073
        %v2076 = vsel %vm2066, 1.5707964, %v2074
        %v2077 = vmax.f32 %v2063, 1e-20
        %v2078 = vmax.f32 %v2064, 1e-20
        %v2079 = vrcp.pop %v2077
        %v2080 = vrcp.pop %v2078
        %v2081 = vsub.f32 0.0, %v2079
        %v2082 = vsub.f32 0.0, %v2080
        %v2083 = vsub.f32 %v2063, 1.0
        %v2084 = vsub.f32 %v2064, 1.0
        %v2085 = vadd.f32 %v2063, 1.0
        %v2086 = vadd.f32 %v2064, 1.0
        %v2087 = vrcp.pop %v2085
        %v2088 = vrcp.pop %v2086
        %v2089 = vmul.f32 %v2083, %v2087
        %v2090 = vmul.f32 %v2084, %v2088
        %v2091 = vsel %vm2071, %v2089, %v2063
        %v2092 = vsel %vm2072, %v2090, %v2064
        %v2093 = vsel %vm2065, %v2081, %v2091
        %v2094 = vsel %vm2066, %v2082, %v2092
        %v2095 = vmul.f32 %v2093, %v2093
        %v2096 = vmul.f32 %v2094, %v2094
        %v2097 = vmul.f32 %v2095, 0.080537446
        %v2098 = vmul.f32 %v2096, 0.080537446
        %v2099 = vsub.f32 %v2097, 0.13877685
        %v2100 = vsub.f32 %v2098, 0.13877685
        %v2101 = vmul.f32 %v2099, %v2095
        %v2102 = vmul.f32 %v2100, %v2096
        %v2103 = vadd.f32 %v2101, 0.19977711
        %v2104 = vadd.f32 %v2102, 0.19977711
        %v2105 = vmul.f32 %v2103, %v2095
        %v2106 = vmul.f32 %v2104, %v2096
        %v2107 = vsub.f32 %v2105, 0.3333295
        %v2108 = vsub.f32 %v2106, 0.3333295
        %v2109 = vmul.f32 %v2107, %v2095
        %v2110 = vmul.f32 %v2108, %v2096
        %v2111 = vmul.f32 %v2109, %v2093
        %v2112 = vmul.f32 %v2110, %v2094
        %v2113 = vadd.f32 %v2111, %v2093
        %v2114 = vadd.f32 %v2112, %v2094
        %v2115 = vadd.f32 %v2075, %v2113
        %v2116 = vadd.f32 %v2076, %v2114
        %v2117 = vmul.f32 %v2061, %v2115
        %v2118 = vmul.f32 %v2062, %v2116
        %v2119 = vlaneseq
        %v2120 = vshrl.u32 %v2119, 7
        %v2121 = vsub.s32 2, %v2120
        %v2122 = vrot.slane %v2045, %v2121
        %v2123 = vlaneseq
        %v2124 = vshrl.u32 %v2123, 7
        %v2125 = vsub.s32 2, %v2124
        %v2126 = vrot.slane %v2046, %v2125
        %2128 = vset.pattern.permute.xlu0 2
        %2129 = vperm.xlu0 %2128, %v2117
        %v2130 = vpop.permute.xlu0 %2129
        %2133 = vset.pattern.permute.xlu0 2
        %2134 = vperm.xlu0 %2133, %v2118
        %v2135 = vpop.permute.xlu0 %2134
        %v2137 = vsub.f32 %v2122, %v2130
        %v2138 = vsub.f32 %v2126, %v2135
        %v2139 = vmul.f32 %v2137, %v2137
        %v2140 = vmul.f32 %v2138, %v2138
        %v2141 = vmul.f32 %v2139, 0.40528473
        %v2142 = vmul.f32 %v2140, 0.40528473
        %v2143 = vsub.f32 %v2141, %v1917
        %v2144 = vsub.f32 %v2142, %v1918
        %v2145 = vadd.f32 %v2143, 1.0000001
        %v2146 = vadd.f32 %v2144, 1.0000001
        %v2147 = vrcp.pop %v2145
        %v2148 = vrcp.pop %v2146
        %v2149 = vmul.f32 %v2141, %v2147
        %v2150 = vmul.f32 %v2142, %v2148
        %v2151 = vrcp.pop %v1937
        %v2152 = vrcp.pop %v1938
        %v2153 = vmul.f32 %v1975, %v2151
        %v2154 = vmul.f32 %v1976, %v2152
        %v2155 = vmul.f32 %v2141, %v2149
        %v2156 = vmul.f32 %v2142, %v2150
        %v2157 = vadd.f32 %v2153, %v2155
        %v2158 = vadd.f32 %v2154, %v2156
        %v2159 = vsub.f32 %v1917, %v2157
        %v2160 = vsub.f32 %v1918, %v2158
        %v2161 = vmax.f32 %v2159, 0.0
        %v2162 = vmax.f32 %v2160, 0.0
        %v2163 = vsel %vm402, %v2161, 0.0
        %v2164 = vsel %vm403, %v2162, 0.0
        %v2165 = vmul.f32 %v2163, %v2163
        %v2166 = vmul.f32 %v2164, %v2164
        %v2167 = vmul.f32 %v2165, %v2165
        %v2168 = vmul.f32 %v2166, %v2166
        %v2169 = vmul.f32 %v2165, %v2167
        %v2170 = vmul.f32 %v2166, %v2168
        %v2171 = vmul.f32 %v1801, %v2169
        %v2172 = vmul.f32 %v1802, %v2170
        %v2173 = vsub.s32 127, %v329
        %v2176 = vshra.s32 %v2171, 7
        %v2177 = vshra.s32 %v2172, 7
        %v2178 = vshll.u32 %v2176, 7
        %v2179 = vshll.u32 %v2177, 7
        %v2180 = vor.u32 %v2178, %v2173
        %v2181 = vor.u32 %v2179, %v2173
        %v2182 = vand.u32 %v2180, 65535
        %v2183 = vshra.s32 %v2180, 16
        %v2184 = vcvt.s32.f32 %v2182
        %v2185 = vcvt.s32.f32 %v2183
        %2186 = vmax.xlane.f32.xlu0 %v2185
        %v2187 = vpop.xlane.xlu0 %2186
        %vm2188 = vcmp.eq.f32.partialorder %v2185, %v2187
        %v2189 = vsel %vm2188, %v2184, -inf
        %2190 = vmax.xlane.f32.xlu0 %v2189
        %v2191 = vpop.xlane.xlu0 %2190
        %v2192 = vcvt.f32.s32 %v2191
        %v2193 = vcvt.f32.s32 %v2187
        %v2194 = vshll.u32 %v2193, 16
        %v2195 = vadd.s32 %v2194, %v2192
        %v2196 = vand.u32 %v2181, 65535
        %v2197 = vshra.s32 %v2181, 16
        %v2198 = vcvt.s32.f32 %v2196
        %v2199 = vcvt.s32.f32 %v2197
        %2200 = vmax.xlane.f32.xlu0 %v2199
        %v2201 = vpop.xlane.xlu0 %2200
        %vm2202 = vcmp.eq.f32.partialorder %v2199, %v2201
        %v2203 = vsel %vm2202, %v2198, -inf
        %2204 = vmax.xlane.f32.xlu0 %v2203
        %v2205 = vpop.xlane.xlu0 %2204
        %v2206 = vcvt.f32.s32 %v2205
        %v2207 = vcvt.f32.s32 %v2201
        %v2208 = vshll.u32 %v2207, 16
        %v2209 = vadd.s32 %v2208, %v2206
        %v2210 = vshra.s32 %v2195, 7
        %v2211 = vshra.s32 %v2209, 7
        %v2212 = vshll.u32 %v2210, 7
        %v2213 = vshll.u32 %v2211, 7
        %vm2216 = vcmp.gt.f32.partialorder %v2212, 1e-09
        %vm2217 = vcmp.gt.f32.partialorder %v2213, 1e-09
        %vm2218 = vcmp.eq.s32.totalorder %v2180, %v2195
        %vm2219 = vcmp.eq.s32.totalorder %v2181, %v2209
        %v2220 = vsel %vm2218, 4294967295, %v2180
        %v2221 = vsel %vm2219, 4294967295, %v2181
        %v2222 = vand.u32 %v2220, 65535
        %v2223 = vshra.s32 %v2220, 16
        %v2224 = vcvt.s32.f32 %v2222
        %v2225 = vcvt.s32.f32 %v2223
        %2226 = vmax.xlane.f32.xlu0 %v2225
        %v2227 = vpop.xlane.xlu0 %2226
        %vm2228 = vcmp.eq.f32.partialorder %v2225, %v2227
        %v2229 = vsel %vm2228, %v2224, -inf
        %2230 = vmax.xlane.f32.xlu0 %v2229
        %v2231 = vpop.xlane.xlu0 %2230
        %v2232 = vcvt.f32.s32 %v2231
        %v2233 = vcvt.f32.s32 %v2227
        %v2234 = vshll.u32 %v2233, 16
        %v2235 = vadd.s32 %v2234, %v2232
        %v2236 = vand.u32 %v2221, 65535
        %v2237 = vshra.s32 %v2221, 16
        %v2238 = vcvt.s32.f32 %v2236
        %v2239 = vcvt.s32.f32 %v2237
        %2240 = vmax.xlane.f32.xlu0 %v2239
        %v2241 = vpop.xlane.xlu0 %2240
        %vm2242 = vcmp.eq.f32.partialorder %v2239, %v2241
        %v2243 = vsel %vm2242, %v2238, -inf
        %2244 = vmax.xlane.f32.xlu0 %v2243
        %v2245 = vpop.xlane.xlu0 %2244
        %v2246 = vcvt.f32.s32 %v2245
        %v2247 = vcvt.f32.s32 %v2241
        %v2248 = vshll.u32 %v2247, 16
        %v2249 = vadd.s32 %v2248, %v2246
        %vm2250 = vcmp.eq.s32.totalorder %v2220, %v2235
        %vm2251 = vcmp.eq.s32.totalorder %v2221, %v2249
        %vm2252 = vmor %vm2218, %vm2250
        %vm2253 = vmor %vm2219, %vm2251
        %v2254 = vsel %vm2250, 4294967295, %v2220
        %v2255 = vsel %vm2251, 4294967295, %v2221
        %v2256 = vand.u32 %v2254, 65535
        %v2257 = vshra.s32 %v2254, 16
        %v2258 = vcvt.s32.f32 %v2256
        %v2259 = vcvt.s32.f32 %v2257
        %2260 = vmax.xlane.f32.xlu0 %v2259
        %v2261 = vpop.xlane.xlu0 %2260
        %vm2262 = vcmp.eq.f32.partialorder %v2259, %v2261
        %v2263 = vsel %vm2262, %v2258, -inf
        %2264 = vmax.xlane.f32.xlu0 %v2263
        %v2265 = vpop.xlane.xlu0 %2264
        %v2266 = vcvt.f32.s32 %v2265
        %v2267 = vcvt.f32.s32 %v2261
        %v2268 = vshll.u32 %v2267, 16
        %v2269 = vadd.s32 %v2268, %v2266
        %v2270 = vand.u32 %v2255, 65535
        %v2271 = vshra.s32 %v2255, 16
        %v2272 = vcvt.s32.f32 %v2270
        %v2273 = vcvt.s32.f32 %v2271
        %2274 = vmax.xlane.f32.xlu0 %v2273
        %v2275 = vpop.xlane.xlu0 %2274
        %vm2276 = vcmp.eq.f32.partialorder %v2273, %v2275
        %v2277 = vsel %vm2276, %v2272, -inf
        %2278 = vmax.xlane.f32.xlu0 %v2277
        %v2279 = vpop.xlane.xlu0 %2278
        %v2280 = vcvt.f32.s32 %v2279
        %v2281 = vcvt.f32.s32 %v2275
        %v2282 = vshll.u32 %v2281, 16
        %v2283 = vadd.s32 %v2282, %v2280
        %vm2284 = vcmp.eq.s32.totalorder %v2254, %v2269
        %vm2285 = vcmp.eq.s32.totalorder %v2255, %v2283
        %vm2286 = vmor %vm2252, %vm2284
        %vm2287 = vmor %vm2253, %vm2285
        %v2288 = vsel %vm2284, 4294967295, %v2254
        %v2289 = vsel %vm2285, 4294967295, %v2255
        %v2290 = vand.u32 %v2288, 65535
        %v2291 = vshra.s32 %v2288, 16
        %v2292 = vcvt.s32.f32 %v2290
        %v2293 = vcvt.s32.f32 %v2291
        %2294 = vmax.xlane.f32.xlu0 %v2293
        %v2295 = vpop.xlane.xlu0 %2294
        %vm2296 = vcmp.eq.f32.partialorder %v2293, %v2295
        %v2297 = vsel %vm2296, %v2292, -inf
        %2298 = vmax.xlane.f32.xlu0 %v2297
        %v2299 = vpop.xlane.xlu0 %2298
        %v2300 = vcvt.f32.s32 %v2299
        %v2301 = vcvt.f32.s32 %v2295
        %v2302 = vshll.u32 %v2301, 16
        %v2303 = vadd.s32 %v2302, %v2300
        %v2304 = vand.u32 %v2289, 65535
        %v2305 = vshra.s32 %v2289, 16
        %v2306 = vcvt.s32.f32 %v2304
        %v2307 = vcvt.s32.f32 %v2305
        %2308 = vmax.xlane.f32.xlu0 %v2307
        %v2309 = vpop.xlane.xlu0 %2308
        %vm2310 = vcmp.eq.f32.partialorder %v2307, %v2309
        %v2311 = vsel %vm2310, %v2306, -inf
        %2312 = vmax.xlane.f32.xlu0 %v2311
        %v2313 = vpop.xlane.xlu0 %2312
        %v2314 = vcvt.f32.s32 %v2313
        %v2315 = vcvt.f32.s32 %v2309
        %v2316 = vshll.u32 %v2315, 16
        %v2317 = vadd.s32 %v2316, %v2314
        %vm2318 = vcmp.eq.s32.totalorder %v2288, %v2303
        %vm2319 = vcmp.eq.s32.totalorder %v2289, %v2317
        %vm2320 = vmor %vm2286, %vm2318
        %vm2321 = vmor %vm2287, %vm2319
        %v2322 = vsel %vm2318, 4294967295, %v2288
        %v2323 = vsel %vm2319, 4294967295, %v2289
        %v2324 = vand.u32 %v2322, 65535
        %v2325 = vshra.s32 %v2322, 16
        %v2326 = vcvt.s32.f32 %v2324
        %v2327 = vcvt.s32.f32 %v2325
        %2328 = vmax.xlane.f32.xlu0 %v2327
        %v2329 = vpop.xlane.xlu0 %2328
        %vm2330 = vcmp.eq.f32.partialorder %v2327, %v2329
        %v2331 = vsel %vm2330, %v2326, -inf
        %2332 = vmax.xlane.f32.xlu0 %v2331
        %v2333 = vpop.xlane.xlu0 %2332
        %v2334 = vcvt.f32.s32 %v2333
        %v2335 = vcvt.f32.s32 %v2329
        %v2336 = vshll.u32 %v2335, 16
        %v2337 = vadd.s32 %v2336, %v2334
        %v2338 = vand.u32 %v2323, 65535
        %v2339 = vshra.s32 %v2323, 16
        %v2340 = vcvt.s32.f32 %v2338
        %v2341 = vcvt.s32.f32 %v2339
        %2342 = vmax.xlane.f32.xlu0 %v2341
        %v2343 = vpop.xlane.xlu0 %2342
        %vm2344 = vcmp.eq.f32.partialorder %v2341, %v2343
        %v2345 = vsel %vm2344, %v2340, -inf
        %2346 = vmax.xlane.f32.xlu0 %v2345
        %v2347 = vpop.xlane.xlu0 %2346
        %v2348 = vcvt.f32.s32 %v2347
        %v2349 = vcvt.f32.s32 %v2343
        %v2350 = vshll.u32 %v2349, 16
        %v2351 = vadd.s32 %v2350, %v2348
        %vm2352 = vcmp.eq.s32.totalorder %v2322, %v2337
        %vm2353 = vcmp.eq.s32.totalorder %v2323, %v2351
        %vm2354 = vmor %vm2320, %vm2352
        %vm2355 = vmor %vm2321, %vm2353
        %v2356 = vsel %vm2352, 4294967295, %v2322
        %v2357 = vsel %vm2353, 4294967295, %v2323
        %v2358 = vand.u32 %v2356, 65535
        %v2359 = vshra.s32 %v2356, 16
        %v2360 = vcvt.s32.f32 %v2358
        %v2361 = vcvt.s32.f32 %v2359
        %2362 = vmax.xlane.f32.xlu0 %v2361
        %v2363 = vpop.xlane.xlu0 %2362
        %vm2364 = vcmp.eq.f32.partialorder %v2361, %v2363
        %v2365 = vsel %vm2364, %v2360, -inf
        %2366 = vmax.xlane.f32.xlu0 %v2365
        %v2367 = vpop.xlane.xlu0 %2366
        %v2368 = vcvt.f32.s32 %v2367
        %v2369 = vcvt.f32.s32 %v2363
        %v2370 = vshll.u32 %v2369, 16
        %v2371 = vadd.s32 %v2370, %v2368
        %v2372 = vand.u32 %v2357, 65535
        %v2373 = vshra.s32 %v2357, 16
        %v2374 = vcvt.s32.f32 %v2372
        %v2375 = vcvt.s32.f32 %v2373
        %2376 = vmax.xlane.f32.xlu0 %v2375
        %v2377 = vpop.xlane.xlu0 %2376
        %vm2378 = vcmp.eq.f32.partialorder %v2375, %v2377
        %v2379 = vsel %vm2378, %v2374, -inf
        %2380 = vmax.xlane.f32.xlu0 %v2379
        %v2381 = vpop.xlane.xlu0 %2380
        %v2382 = vcvt.f32.s32 %v2381
        %v2383 = vcvt.f32.s32 %v2377
        %v2384 = vshll.u32 %v2383, 16
        %v2385 = vadd.s32 %v2384, %v2382
        %vm2386 = vcmp.eq.s32.totalorder %v2356, %v2371
        %vm2387 = vcmp.eq.s32.totalorder %v2357, %v2385
        %vm2388 = vmor %vm2354, %vm2386
        %vm2389 = vmor %vm2355, %vm2387
        %v2390 = vsel %vm2386, 4294967295, %v2356
        %v2391 = vsel %vm2387, 4294967295, %v2357
        %v2392 = vand.u32 %v2390, 65535
        %v2393 = vshra.s32 %v2390, 16
        %v2394 = vcvt.s32.f32 %v2392
        %v2395 = vcvt.s32.f32 %v2393
        %2396 = vmax.xlane.f32.xlu0 %v2395
        %v2397 = vpop.xlane.xlu0 %2396
        %vm2398 = vcmp.eq.f32.partialorder %v2395, %v2397
        %v2399 = vsel %vm2398, %v2394, -inf
        %2400 = vmax.xlane.f32.xlu0 %v2399
        %v2401 = vpop.xlane.xlu0 %2400
        %v2402 = vcvt.f32.s32 %v2401
        %v2403 = vcvt.f32.s32 %v2397
        %v2404 = vshll.u32 %v2403, 16
        %v2405 = vadd.s32 %v2404, %v2402
        %v2406 = vand.u32 %v2391, 65535
        %v2407 = vshra.s32 %v2391, 16
        %v2408 = vcvt.s32.f32 %v2406
        %v2409 = vcvt.s32.f32 %v2407
        %2410 = vmax.xlane.f32.xlu0 %v2409
        %v2411 = vpop.xlane.xlu0 %2410
        %vm2412 = vcmp.eq.f32.partialorder %v2409, %v2411
        %v2413 = vsel %vm2412, %v2408, -inf
        %2414 = vmax.xlane.f32.xlu0 %v2413
        %v2415 = vpop.xlane.xlu0 %2414
        %v2416 = vcvt.f32.s32 %v2415
        %v2417 = vcvt.f32.s32 %v2411
        %v2418 = vshll.u32 %v2417, 16
        %v2419 = vadd.s32 %v2418, %v2416
        %vm2420 = vcmp.eq.s32.totalorder %v2390, %v2405
        %vm2421 = vcmp.eq.s32.totalorder %v2391, %v2419
        %vm2422 = vmor %vm2388, %vm2420
        %vm2423 = vmor %vm2389, %vm2421
        %v2424 = vsel %vm2420, 4294967295, %v2390
        %v2425 = vsel %vm2421, 4294967295, %v2391
        %v2426 = vand.u32 %v2424, 65535
        %v2427 = vshra.s32 %v2424, 16
        %v2428 = vcvt.s32.f32 %v2426
        %v2429 = vcvt.s32.f32 %v2427
        %2430 = vmax.xlane.f32.xlu0 %v2429
        %v2431 = vpop.xlane.xlu0 %2430
        %vm2432 = vcmp.eq.f32.partialorder %v2429, %v2431
        %v2433 = vsel %vm2432, %v2428, -inf
        %2434 = vmax.xlane.f32.xlu0 %v2433
        %v2435 = vpop.xlane.xlu0 %2434
        %v2436 = vcvt.f32.s32 %v2435
        %v2437 = vcvt.f32.s32 %v2431
        %v2438 = vshll.u32 %v2437, 16
        %v2439 = vadd.s32 %v2438, %v2436
        %v2440 = vand.u32 %v2425, 65535
        %v2441 = vshra.s32 %v2425, 16
        %v2442 = vcvt.s32.f32 %v2440
        %v2443 = vcvt.s32.f32 %v2441
        %2444 = vmax.xlane.f32.xlu0 %v2443
        %v2445 = vpop.xlane.xlu0 %2444
        %vm2446 = vcmp.eq.f32.partialorder %v2443, %v2445
        %v2447 = vsel %vm2446, %v2442, -inf
        %2448 = vmax.xlane.f32.xlu0 %v2447
        %v2449 = vpop.xlane.xlu0 %2448
        %v2450 = vcvt.f32.s32 %v2449
        %v2451 = vcvt.f32.s32 %v2445
        %v2452 = vshll.u32 %v2451, 16
        %v2453 = vadd.s32 %v2452, %v2450
        %vm2454 = vcmp.eq.s32.totalorder %v2424, %v2439
        %vm2455 = vcmp.eq.s32.totalorder %v2425, %v2453
        %vm2456 = vmor %vm2422, %vm2454
        %vm2457 = vmor %vm2423, %vm2455
        %v2458 = vsel %vm2454, 4294967295, %v2424
        %v2459 = vsel %vm2455, 4294967295, %v2425
        %v2460 = vand.u32 %v2458, 65535
        %v2461 = vshra.s32 %v2458, 16
        %v2462 = vcvt.s32.f32 %v2460
        %v2463 = vcvt.s32.f32 %v2461
        %2464 = vmax.xlane.f32.xlu0 %v2463
        %v2465 = vpop.xlane.xlu0 %2464
        %vm2466 = vcmp.eq.f32.partialorder %v2463, %v2465
        %v2467 = vsel %vm2466, %v2462, -inf
        %2468 = vmax.xlane.f32.xlu0 %v2467
        %v2469 = vpop.xlane.xlu0 %2468
        %v2470 = vcvt.f32.s32 %v2469
        %v2471 = vcvt.f32.s32 %v2465
        %v2472 = vshll.u32 %v2471, 16
        %v2473 = vadd.s32 %v2472, %v2470
        %v2474 = vand.u32 %v2459, 65535
        %v2475 = vshra.s32 %v2459, 16
        %v2476 = vcvt.s32.f32 %v2474
        %v2477 = vcvt.s32.f32 %v2475
        %2478 = vmax.xlane.f32.xlu0 %v2477
        %v2479 = vpop.xlane.xlu0 %2478
        %vm2480 = vcmp.eq.f32.partialorder %v2477, %v2479
        %v2481 = vsel %vm2480, %v2476, -inf
        %2482 = vmax.xlane.f32.xlu0 %v2481
        %v2483 = vpop.xlane.xlu0 %2482
        %v2484 = vcvt.f32.s32 %v2483
        %v2485 = vcvt.f32.s32 %v2479
        %v2486 = vshll.u32 %v2485, 16
        %v2487 = vadd.s32 %v2486, %v2484
        %vm2488 = vcmp.eq.s32.totalorder %v2458, %v2473
        %vm2489 = vcmp.eq.s32.totalorder %v2459, %v2487
        %vm2490 = vmor %vm2456, %vm2488
        %vm2491 = vmor %vm2457, %vm2489
        %v2492 = vsel %vm2488, 4294967295, %v2458
        %v2493 = vsel %vm2489, 4294967295, %v2459
        %v2494 = vand.u32 %v2492, 65535
        %v2495 = vshra.s32 %v2492, 16
        %v2496 = vcvt.s32.f32 %v2494
        %v2497 = vcvt.s32.f32 %v2495
        %2498 = vmax.xlane.f32.xlu0 %v2497
        %v2499 = vpop.xlane.xlu0 %2498
        %vm2500 = vcmp.eq.f32.partialorder %v2497, %v2499
        %v2501 = vsel %vm2500, %v2496, -inf
        %2502 = vmax.xlane.f32.xlu0 %v2501
        %v2503 = vpop.xlane.xlu0 %2502
        %v2504 = vcvt.f32.s32 %v2503
        %v2505 = vcvt.f32.s32 %v2499
        %v2506 = vshll.u32 %v2505, 16
        %v2507 = vadd.s32 %v2506, %v2504
        %v2508 = vand.u32 %v2493, 65535
        %v2509 = vshra.s32 %v2493, 16
        %v2510 = vcvt.s32.f32 %v2508
        %v2511 = vcvt.s32.f32 %v2509
        %2512 = vmax.xlane.f32.xlu0 %v2511
        %v2513 = vpop.xlane.xlu0 %2512
        %vm2514 = vcmp.eq.f32.partialorder %v2511, %v2513
        %v2515 = vsel %vm2514, %v2510, -inf
        %2516 = vmax.xlane.f32.xlu0 %v2515
        %v2517 = vpop.xlane.xlu0 %2516
        %v2518 = vcvt.f32.s32 %v2517
        %v2519 = vcvt.f32.s32 %v2513
        %v2520 = vshll.u32 %v2519, 16
        %v2521 = vadd.s32 %v2520, %v2518
        %vm2522 = vcmp.eq.s32.totalorder %v2492, %v2507
        %vm2523 = vcmp.eq.s32.totalorder %v2493, %v2521
        %vm2524 = vmor %vm2490, %vm2522
        %vm2525 = vmor %vm2491, %vm2523
        %v2526 = vsel %vm2522, 4294967295, %v2492
        %v2527 = vsel %vm2523, 4294967295, %v2493
        %v2528 = vand.u32 %v2526, 65535
        %v2529 = vshra.s32 %v2526, 16
        %v2530 = vcvt.s32.f32 %v2528
        %v2531 = vcvt.s32.f32 %v2529
        %2532 = vmax.xlane.f32.xlu0 %v2531
        %v2533 = vpop.xlane.xlu0 %2532
        %vm2534 = vcmp.eq.f32.partialorder %v2531, %v2533
        %v2535 = vsel %vm2534, %v2530, -inf
        %2536 = vmax.xlane.f32.xlu0 %v2535
        %v2537 = vpop.xlane.xlu0 %2536
        %v2538 = vcvt.f32.s32 %v2537
        %v2539 = vcvt.f32.s32 %v2533
        %v2540 = vshll.u32 %v2539, 16
        %v2541 = vadd.s32 %v2540, %v2538
        %v2542 = vand.u32 %v2527, 65535
        %v2543 = vshra.s32 %v2527, 16
        %v2544 = vcvt.s32.f32 %v2542
        %v2545 = vcvt.s32.f32 %v2543
        %2546 = vmax.xlane.f32.xlu0 %v2545
        %v2547 = vpop.xlane.xlu0 %2546
        %vm2548 = vcmp.eq.f32.partialorder %v2545, %v2547
        %v2549 = vsel %vm2548, %v2544, -inf
        %2550 = vmax.xlane.f32.xlu0 %v2549
        %v2551 = vpop.xlane.xlu0 %2550
        %v2552 = vcvt.f32.s32 %v2551
        %v2553 = vcvt.f32.s32 %v2547
        %v2554 = vshll.u32 %v2553, 16
        %v2555 = vadd.s32 %v2554, %v2552
        %vm2556 = vcmp.eq.s32.totalorder %v2526, %v2541
        %vm2557 = vcmp.eq.s32.totalorder %v2527, %v2555
        %vm2558 = vmor %vm2524, %vm2556
        %vm2559 = vmor %vm2525, %vm2557
        %v2560 = vsel %vm2556, 4294967295, %v2526
        %v2561 = vsel %vm2557, 4294967295, %v2527
        %v2562 = vand.u32 %v2560, 65535
        %v2563 = vshra.s32 %v2560, 16
        %v2564 = vcvt.s32.f32 %v2562
        %v2565 = vcvt.s32.f32 %v2563
        %2566 = vmax.xlane.f32.xlu0 %v2565
        %v2567 = vpop.xlane.xlu0 %2566
        %vm2568 = vcmp.eq.f32.partialorder %v2565, %v2567
        %v2569 = vsel %vm2568, %v2564, -inf
        %2570 = vmax.xlane.f32.xlu0 %v2569
        %v2571 = vpop.xlane.xlu0 %2570
        %v2572 = vcvt.f32.s32 %v2571
        %v2573 = vcvt.f32.s32 %v2567
        %v2574 = vshll.u32 %v2573, 16
        %v2575 = vadd.s32 %v2574, %v2572
        %v2576 = vand.u32 %v2561, 65535
        %v2577 = vshra.s32 %v2561, 16
        %v2578 = vcvt.s32.f32 %v2576
        %v2579 = vcvt.s32.f32 %v2577
        %2580 = vmax.xlane.f32.xlu0 %v2579
        %v2581 = vpop.xlane.xlu0 %2580
        %vm2582 = vcmp.eq.f32.partialorder %v2579, %v2581
        %v2583 = vsel %vm2582, %v2578, -inf
        %2584 = vmax.xlane.f32.xlu0 %v2583
        %v2585 = vpop.xlane.xlu0 %2584
        %v2586 = vcvt.f32.s32 %v2585
        %v2587 = vcvt.f32.s32 %v2581
        %v2588 = vshll.u32 %v2587, 16
        %v2589 = vadd.s32 %v2588, %v2586
        %vm2590 = vcmp.eq.s32.totalorder %v2560, %v2575
        %vm2591 = vcmp.eq.s32.totalorder %v2561, %v2589
        %vm2592 = vmor %vm2558, %vm2590
        %vm2593 = vmor %vm2559, %vm2591
        %v2594 = vsel %vm2590, 4294967295, %v2560
        %v2595 = vsel %vm2591, 4294967295, %v2561
        %v2596 = vand.u32 %v2594, 65535
        %v2597 = vshra.s32 %v2594, 16
        %v2598 = vcvt.s32.f32 %v2596
        %v2599 = vcvt.s32.f32 %v2597
        %2600 = vmax.xlane.f32.xlu0 %v2599
        %v2601 = vpop.xlane.xlu0 %2600
        %vm2602 = vcmp.eq.f32.partialorder %v2599, %v2601
        %v2603 = vsel %vm2602, %v2598, -inf
        %2604 = vmax.xlane.f32.xlu0 %v2603
        %v2605 = vpop.xlane.xlu0 %2604
        %v2606 = vcvt.f32.s32 %v2605
        %v2607 = vcvt.f32.s32 %v2601
        %v2608 = vshll.u32 %v2607, 16
        %v2609 = vadd.s32 %v2608, %v2606
        %v2610 = vand.u32 %v2595, 65535
        %v2611 = vshra.s32 %v2595, 16
        %v2612 = vcvt.s32.f32 %v2610
        %v2613 = vcvt.s32.f32 %v2611
        %2614 = vmax.xlane.f32.xlu0 %v2613
        %v2615 = vpop.xlane.xlu0 %2614
        %vm2616 = vcmp.eq.f32.partialorder %v2613, %v2615
        %v2617 = vsel %vm2616, %v2612, -inf
        %2618 = vmax.xlane.f32.xlu0 %v2617
        %v2619 = vpop.xlane.xlu0 %2618
        %v2620 = vcvt.f32.s32 %v2619
        %v2621 = vcvt.f32.s32 %v2615
        %v2622 = vshll.u32 %v2621, 16
        %v2623 = vadd.s32 %v2622, %v2620
        %vm2624 = vcmp.eq.s32.totalorder %v2594, %v2609
        %vm2625 = vcmp.eq.s32.totalorder %v2595, %v2623
        %vm2626 = vmor %vm2592, %vm2624
        %vm2627 = vmor %vm2593, %vm2625
        %v2628 = vsel %vm2216, 1, 0
        %v2629 = vsel %vm2217, 1, 0
        %vm2630 = vcmp.eq.s32.totalorder %v2628, 1
        %vm2631 = vcmp.eq.s32.totalorder %v2629, 1
        %vm2632 = vmand %vm2626, %vm2630
        %vm2633 = vmand %vm2627, %vm2631
        %vm2634 = vmand %vm2632, %vm402
        %vm2635 = vmand %vm2633, %vm403
        %v2636 = vsel %vm2634, 1, 0
        %v2637 = vsel %vm2635, 1, 0
        %v2638 = vcvt.s32.f32 %v2636
        %v2639 = vcvt.s32.f32 %v2637
        %v2640 = vrot.slane %v2638, 4
        %v2641 = vadd.f32 %v2638, %v2640
        %v2642 = vrot.slane %v2641, 2
        %v2643 = vadd.f32 %v2641, %v2642
        %v2644 = vrot.slane %v2643, 1
        %v2645 = vadd.f32 %v2643, %v2644
        %v2646 = vrot.slane %v2639, 4
        %v2647 = vadd.f32 %v2639, %v2646
        %v2648 = vrot.slane %v2647, 2
        %v2649 = vadd.f32 %v2647, %v2648
        %v2650 = vrot.slane %v2649, 1
        %v2651 = vadd.f32 %v2649, %v2650
        %vm2652 = vcmp.gt.f32.partialorder %v2645, 1.0
        %vm2653 = vcmp.gt.f32.partialorder %v2651, 1.0
        %v2654 = vsub.s32 7, %v331
        %v2657 = vshra.s32 %v2163, 3
        %v2658 = vshra.s32 %v2164, 3
        %v2659 = vshll.u32 %v2657, 3
        %v2660 = vshll.u32 %v2658, 3
        %v2661 = vor.u32 %v2659, %v2654
        %v2662 = vor.u32 %v2660, %v2654
        %v2663 = vrot.slane %v2661, 4
        %vm2664 = vcmp.gt.s32.totalorder %v2661, %v2663
        %v2665 = vsel %vm2664, %v2661, %v2663
        %v2666 = vrot.slane %v2665, 2
        %vm2667 = vcmp.gt.s32.totalorder %v2665, %v2666
        %v2668 = vsel %vm2667, %v2665, %v2666
        %v2669 = vrot.slane %v2668, 1
        %vm2670 = vcmp.gt.s32.totalorder %v2668, %v2669
        %v2671 = vsel %vm2670, %v2668, %v2669
        %v2672 = vrot.slane %v2662, 4
        %vm2673 = vcmp.gt.s32.totalorder %v2662, %v2672
        %v2674 = vsel %vm2673, %v2662, %v2672
        %v2675 = vrot.slane %v2674, 2
        %vm2676 = vcmp.gt.s32.totalorder %v2674, %v2675
        %v2677 = vsel %vm2676, %v2674, %v2675
        %v2678 = vrot.slane %v2677, 1
        %vm2679 = vcmp.gt.s32.totalorder %v2677, %v2678
        %v2680 = vsel %vm2679, %v2677, %v2678
        %v2681 = vand.u32 %v2671, 7
        %v2682 = vand.u32 %v2680, 7
        %v2683 = vsub.s32 7, %v2681
        %v2684 = vsub.s32 7, %v2682
        %vm2685 = vmxor %vm2652, 1
        %vm2686 = vmxor %vm2653, 1
        %vm2687 = vcmp.eq.s32.totalorder %v331, %v2683
        %vm2688 = vcmp.eq.s32.totalorder %v331, %v2684
        %v2689 = vsel %vm2685, 1, 0
        %v2690 = vsel %vm2686, 1, 0
        %vm2691 = vcmp.eq.s32.totalorder %v2689, 1
        %vm2692 = vcmp.eq.s32.totalorder %v2690, 1
        %vm2693 = vmor %vm2691, %vm2687
        %vm2694 = vmor %vm2692, %vm2688
        %vm2695 = vmand %vm2634, %vm2693
        %vm2696 = vmand %vm2635, %vm2694
        %v2697 = vsel %vm2695, 1, 0
        %v2698 = vsel %vm2696, 1, 0
        %v2699 = vcvt.s32.f32 %v2697
        %v2700 = vcvt.s32.f32 %v2698
        %vm2701 = vcmp.gt.s32.totalorder %v326, 0
        %v2702 = vsel %vm2701, %v326, 0
        %vm2703 = vcmp.gt.s32.totalorder %v327, 0
        %v2704 = vsel %vm2703, %v327, 0
        %vm2705 = vcmp.lt.s32.totalorder %v2702, 65535
        %v2706 = vsel %vm2705, %v2702, 65535
        %vm2707 = vcmp.lt.s32.totalorder %v2704, 65535
        %v2708 = vsel %vm2707, %v2704, 65535
        %v2709 = vshll.u32 %v2697, 19
        %v2710 = vshll.u32 %v2698, 19
        %v2711 = vshll.u32 %v2654, 16
        %v2712 = vor.u32 %v2709, %v2711
        %v2713 = vor.u32 %v2710, %v2711
        %2714 = vset.pattern.permute.xlu0 4
        %2715 = vperm.xlu0 %2714, %v2706
        %v2716 = vpop.permute.xlu0 %2715
        %2717 = vset.pattern.permute.xlu0 4
        %2718 = vperm.xlu0 %2717, %v2708
        %v2719 = vpop.permute.xlu0 %2718
        %v2720 = vor.u32 %v2712, %v2716
        %v2721 = vor.u32 %v2713, %v2719
        %v2722 = vrot.slane %v2720, 4
        %vm2723 = vcmp.gt.s32.totalorder %v2720, %v2722
        %v2724 = vsel %vm2723, %v2720, %v2722
        %v2725 = vrot.slane %v2724, 2
        %vm2726 = vcmp.gt.s32.totalorder %v2724, %v2725
        %v2727 = vsel %vm2726, %v2724, %v2725
        %v2728 = vrot.slane %v2727, 1
        %vm2729 = vcmp.gt.s32.totalorder %v2727, %v2728
        %v2730 = vsel %vm2729, %v2727, %v2728
        %v2731 = vrot.slane %v2721, 4
        %vm2732 = vcmp.gt.s32.totalorder %v2721, %v2731
        %v2733 = vsel %vm2732, %v2721, %v2731
        %v2734 = vrot.slane %v2733, 2
        %vm2735 = vcmp.gt.s32.totalorder %v2733, %v2734
        %v2736 = vsel %vm2735, %v2733, %v2734
        %v2737 = vrot.slane %v2736, 1
        %vm2738 = vcmp.gt.s32.totalorder %v2736, %v2737
        %v2739 = vsel %vm2738, %v2736, %v2737
        %v2740 = vand.u32 %v2730, 65535
        %v2741 = vand.u32 %v2739, 65535
        %v2742 = vshra.s32 %v2730, 16
        %v2743 = vshra.s32 %v2739, 16
        %v2744 = vand.u32 %v2742, 7
        %v2745 = vand.u32 %v2743, 7
        %v2746 = vsub.s32 7, %v2744
        %v2747 = vsub.s32 7, %v2745
        %v2748 = vshra.s32 %v2730, 19
        %v2749 = vshra.s32 %v2739, 19
        %vm2750 = vcmp.eq.s32.totalorder %v331, %v2746
        %vm2751 = vcmp.eq.s32.totalorder %v331, %v2747
        %v2752 = vsel %vm2750, 1, 0
        %v2753 = vsel %vm2751, 1, 0
        %v2754 = vcvt.s32.f32 %v2752
        %v2755 = vcvt.s32.f32 %v2753
        %v2756 = vmul.f32 %v339, %v2754
        %v2757 = vmul.f32 %v344, %v2755
        %v2758 = vrot.slane %v2756, 4
        %v2759 = vadd.f32 %v2756, %v2758
        %v2760 = vrot.slane %v2759, 2
        %v2761 = vadd.f32 %v2759, %v2760
        %v2762 = vrot.slane %v2761, 1
        %v2763 = vadd.f32 %v2761, %v2762
        %v2764 = vrot.slane %v2757, 4
        %v2765 = vadd.f32 %v2757, %v2764
        %v2766 = vrot.slane %v2765, 2
        %v2767 = vadd.f32 %v2765, %v2766
        %v2768 = vrot.slane %v2767, 1
        %v2769 = vadd.f32 %v2767, %v2768
        %v2770 = vmul.f32 %v354, %v2754
        %v2771 = vmul.f32 %v358, %v2755
        %v2772 = vrot.slane %v2770, 4
        %v2773 = vadd.f32 %v2770, %v2772
        %v2774 = vrot.slane %v2773, 2
        %v2775 = vadd.f32 %v2773, %v2774
        %v2776 = vrot.slane %v2775, 1
        %v2777 = vadd.f32 %v2775, %v2776
        %v2778 = vrot.slane %v2771, 4
        %v2779 = vadd.f32 %v2771, %v2778
        %v2780 = vrot.slane %v2779, 2
        %v2781 = vadd.f32 %v2779, %v2780
        %v2782 = vrot.slane %v2781, 1
        %v2783 = vadd.f32 %v2781, %v2782
        %v2784 = vmul.f32 %v366, %v2754
        %v2785 = vmul.f32 %v370, %v2755
        %v2786 = vrot.slane %v2784, 4
        %v2787 = vadd.f32 %v2784, %v2786
        %v2788 = vrot.slane %v2787, 2
        %v2789 = vadd.f32 %v2787, %v2788
        %v2790 = vrot.slane %v2789, 1
        %v2791 = vadd.f32 %v2789, %v2790
        %v2792 = vrot.slane %v2785, 4
        %v2793 = vadd.f32 %v2785, %v2792
        %v2794 = vrot.slane %v2793, 2
        %v2795 = vadd.f32 %v2793, %v2794
        %v2796 = vrot.slane %v2795, 1
        %v2797 = vadd.f32 %v2795, %v2796
        %v2798 = vmul.f32 %v376, %v2754
        %v2799 = vmul.f32 %v380, %v2755
        %v2800 = vrot.slane %v2798, 4
        %v2801 = vadd.f32 %v2798, %v2800
        %v2802 = vrot.slane %v2801, 2
        %v2803 = vadd.f32 %v2801, %v2802
        %v2804 = vrot.slane %v2803, 1
        %v2805 = vadd.f32 %v2803, %v2804
        %v2806 = vrot.slane %v2799, 4
        %v2807 = vadd.f32 %v2799, %v2806
        %v2808 = vrot.slane %v2807, 2
        %v2809 = vadd.f32 %v2807, %v2808
        %v2810 = vrot.slane %v2809, 1
        %v2811 = vadd.f32 %v2809, %v2810
        %vm2812 = vcmask 1040384
        %v2813 = vsel %vm2812, %v2763, %v2777
        %v2814 = vsel %vm2812, %v2769, %v2783
        %vm2815 = vcmask 1041408
        %v2816 = vsel %vm2815, %v2813, %v2791
        %v2817 = vsel %vm2815, %v2814, %v2797
        %vm2818 = vcmask 1042432
        %v2819 = vsel %vm2818, %v2816, %v2805
        %v2820 = vsel %vm2818, %v2817, %v2811
        %v2821 = vmul.f32 %v2171, %v2699
        %v2822 = vmul.f32 %v2172, %v2700
        %2823 = vmax.xlane.f32.xlu0 %v2821
        %v2824 = vpop.xlane.xlu0 %2823
        %2825 = vmax.xlane.f32.xlu0 %v2822
        %v2826 = vpop.xlane.xlu0 %2825
        %v2827 = vmul.f32 %v2163, %v2699
        %v2828 = vmul.f32 %v2164, %v2700
        %2829 = vmax.xlane.f32.xlu0 %v2827
        %v2830 = vpop.xlane.xlu0 %2829
        %2831 = vmax.xlane.f32.xlu0 %v2828
        %v2832 = vpop.xlane.xlu0 %2831
        %v2833 = vadd.f32 %v2824, 1e-09
        %v2834 = vadd.f32 %v2826, 1e-09
        %v2835 = vrcp.pop %v2833
        %v2836 = vmul.f32 %v2830, %v2835
        %v2837 = vrcp.pop %v2834
        %v2838 = vmul.f32 %v2832, %v2837
        %v2839 = vmul.f32 %v2821, %v2836
        %v2840 = vmul.f32 %v2822, %v2838
        %v2841 = vrot.slane %v2839, 4
        %v2842 = vmax.f32 %v2839, %v2841
        %v2843 = vrot.slane %v2842, 2
        %v2844 = vmax.f32 %v2842, %v2843
        %v2845 = vrot.slane %v2844, 1
        %v2846 = vmax.f32 %v2844, %v2845
        %v2847 = vrot.slane %v2840, 4
        %v2848 = vmax.f32 %v2840, %v2847
        %v2849 = vrot.slane %v2848, 2
        %v2850 = vmax.f32 %v2848, %v2849
        %v2851 = vrot.slane %v2850, 1
        %v2852 = vmax.f32 %v2850, %v2851
        %vm2853 = vcmp.gt.s32.totalorder %v2748, 0
        %vm2854 = vcmp.gt.s32.totalorder %v2749, 0
        %v2855 = vsel %vm2853, %v2846, 0.0
        %v2856 = vsel %vm2854, %v2852, 0.0
        %v2857 = vmul.f32 %v2754, %v2855
        %v2858 = vmul.f32 %v2755, %v2856
        %2859 = vxpose.xlu0.b32.start [1/16] %v2857, 128
        %2860 = vxpose.xlu0.b32.cont [2/16] 0.0, 128
        %2861 = vxpose.xlu0.b32.cont [3/16] 0.0, 128
        %2862 = vxpose.xlu0.b32.cont [4/16] 0.0, 128
        %2863 = vxpose.xlu0.b32.cont [5/16] 0.0, 128
        %2864 = vxpose.xlu0.b32.cont [6/16] 0.0, 128
        %2865 = vxpose.xlu0.b32.cont [7/16] 0.0, 128
        %2866 = vxpose.xlu0.b32.cont [8/16] 0.0, 128
        %2867 = vxpose.xlu0.b32.cont [9/16] 0.0, 128
        %2868 = vxpose.xlu0.b32.cont [10/16] 0.0, 128
        %2869 = vxpose.xlu0.b32.cont [11/16] 0.0, 128
        %2870 = vxpose.xlu0.b32.cont [12/16] 0.0, 128
        %2871 = vxpose.xlu0.b32.cont [13/16] 0.0, 128
        %2872 = vxpose.xlu0.b32.cont [14/16] 0.0, 128
        %2873 = vxpose.xlu0.b32.cont [15/16] 0.0, 128
        %2874 = vxpose.xlu0.b32.end [16/16] 0.0, 128
        %v2875 = vpop.trf.xlu0
        %v2876 = vpop.trf.xlu0
        %v2877 = vpop.trf.xlu0
        %v2878 = vpop.trf.xlu0
        %v2879 = vpop.trf.xlu0
        %v2880 = vpop.trf.xlu0
        %v2881 = vpop.trf.xlu0
        %v2882 = vpop.trf.xlu0
        %v2883 = vpop.trf.xlu0
        %v2884 = vpop.trf.xlu0
        %v2885 = vpop.trf.xlu0
        %v2886 = vpop.trf.xlu0
        %v2887 = vpop.trf.xlu0
        %v2888 = vpop.trf.xlu0
        %v2889 = vpop.trf.xlu0
        %v2890 = vpop.trf.xlu0
        %2891 = vxpose.xlu0.b32.start [1/16] %v2858, 128
        %2892 = vxpose.xlu0.b32.cont [2/16] 0.0, 128
        %2893 = vxpose.xlu0.b32.cont [3/16] 0.0, 128
        %2894 = vxpose.xlu0.b32.cont [4/16] 0.0, 128
        %2895 = vxpose.xlu0.b32.cont [5/16] 0.0, 128
        %2896 = vxpose.xlu0.b32.cont [6/16] 0.0, 128
        %2897 = vxpose.xlu0.b32.cont [7/16] 0.0, 128
        %2898 = vxpose.xlu0.b32.cont [8/16] 0.0, 128
        %2899 = vxpose.xlu0.b32.cont [9/16] 0.0, 128
        %2900 = vxpose.xlu0.b32.cont [10/16] 0.0, 128
        %2901 = vxpose.xlu0.b32.cont [11/16] 0.0, 128
        %2902 = vxpose.xlu0.b32.cont [12/16] 0.0, 128
        %2903 = vxpose.xlu0.b32.cont [13/16] 0.0, 128
        %2904 = vxpose.xlu0.b32.cont [14/16] 0.0, 128
        %2905 = vxpose.xlu0.b32.cont [15/16] 0.0, 128
        %2906 = vxpose.xlu0.b32.end [16/16] 0.0, 128
        %v2907 = vpop.trf.xlu0
        %v2908 = vpop.trf.xlu0
        %v2909 = vpop.trf.xlu0
        %v2910 = vpop.trf.xlu0
        %v2911 = vpop.trf.xlu0
        %v2912 = vpop.trf.xlu0
        %v2913 = vpop.trf.xlu0
        %v2914 = vpop.trf.xlu0
        %v2915 = vpop.trf.xlu0
        %v2916 = vpop.trf.xlu0
        %v2917 = vpop.trf.xlu0
        %v2918 = vpop.trf.xlu0
        %v2919 = vpop.trf.xlu0
        %v2920 = vpop.trf.xlu0
        %v2921 = vpop.trf.xlu0
        %v2922 = vpop.trf.xlu0
        %vm2923 = vcmask 64512
        %v2925 = vsel %vm2923, %v2875, 0
        %v2928 = vsel %vm2923, %v2876, 0
        %v2931 = vsel %vm2923, %v2877, 0
        %v2934 = vsel %vm2923, %v2878, 0
        %v2937 = vsel %vm2923, %v2879, 0
        %v2940 = vsel %vm2923, %v2880, 0
        %v2943 = vsel %vm2923, %v2881, 0
        %v2946 = vsel %vm2923, %v2882, 0
        %v2949 = vsel %vm2923, %v2883, 0
        %v2952 = vsel %vm2923, %v2884, 0
        %v2955 = vsel %vm2923, %v2885, 0
        %v2958 = vsel %vm2923, %v2886, 0
        %v2961 = vsel %vm2923, %v2887, 0
        %v2964 = vsel %vm2923, %v2888, 0
        %v2967 = vsel %vm2923, %v2889, 0
        %v2970 = vsel %vm2923, %v2890, 0
        %2972 = vmatprep.subr.mxu0 0.0
        %2973 = vmatpush1.msra.mxu0 0.0
        %2974 = vmatprep.subr.mxu0 0.0
        %2975 = vmatpush1.msra.mxu0 0.0
        %2976 = vmatprep.subr.mxu0 0.0
        %2977 = vmatpush1.msra.mxu0 0.0
        %2978 = vmatprep.subr.mxu0 0.0
        %2979 = vmatpush1.msra.mxu0 0.0
        %2980 = vmatprep.subr.mxu0 0.0
        %2981 = vmatpush1.msra.mxu0 0.0
        %2982 = vmatprep.subr.mxu0 0.0
        %2983 = vmatpush1.msra.mxu0 0.0
        %2984 = vmatprep.subr.mxu0 0.0
        %2985 = vmatpush1.msra.mxu0 0.0
        %2986 = vmatprep.subr.mxu0 0.0
        %2987 = vmatpush1.msra.mxu0 0.0
        %2988 = vmatprep.subr.mxu0 0.0
        %2989 = vmatpush1.msra.mxu0 0.0
        %2990 = vmatprep.subr.mxu0 0.0
        %2991 = vmatpush1.msra.mxu0 0.0
        %2992 = vmatprep.subr.mxu0 0.0
        %2993 = vmatpush1.msra.mxu0 0.0
        %2994 = vmatprep.subr.mxu0 0.0
        %2995 = vmatpush1.msra.mxu0 0.0
        %2996 = vmatprep.subr.mxu0 0.0
        %2997 = vmatpush1.msra.mxu0 0.0
        %2998 = vmatprep.subr.mxu0 0.0
        %2999 = vmatpush1.msra.mxu0 0.0
        %3000 = vmatprep.subr.mxu0 0.0
        %3001 = vmatpush1.msra.mxu0 0.0
        %3002 = vmatprep.subr.mxu0 0.0
        %v3003 = vand.u32 %v414, 4294901760
        %3004 = vmatpush1.msra.mxu0 %v3003
        %3005 = vmatprep.subr.mxu0 0.0
        %3006 = vmatpush2.msra.mxu0 0.0
        %3007 = vmatprep.subr.mxu0 0.0
        %3008 = vmatpush2.msra.mxu0 0.0
        %3009 = vmatprep.subr.mxu0 0.0
        %3010 = vmatpush2.msra.mxu0 0.0
        %3011 = vmatprep.subr.mxu0 0.0
        %3012 = vmatpush2.msra.mxu0 0.0
        %3013 = vmatprep.subr.mxu0 0.0
        %3014 = vmatpush2.msra.mxu0 0.0
        %3015 = vmatprep.subr.mxu0 0.0
        %3016 = vmatpush2.msra.mxu0 0.0
        %3017 = vmatprep.subr.mxu0 0.0
        %3018 = vmatpush2.msra.mxu0 0.0
        %3019 = vmatprep.subr.mxu0 0.0
        %3020 = vmatpush2.msra.mxu0 0.0
        %3021 = vmatprep.subr.mxu0 0.0
        %3022 = vmatpush2.msra.mxu0 0.0
        %3023 = vmatprep.subr.mxu0 0.0
        %3024 = vmatpush2.msra.mxu0 0.0
        %3025 = vmatprep.subr.mxu0 0.0
        %3026 = vmatpush2.msra.mxu0 0.0
        %3027 = vmatprep.subr.mxu0 0.0
        %3028 = vmatpush2.msra.mxu0 0.0
        %3029 = vmatprep.subr.mxu0 0.0
        %3030 = vmatpush2.msra.mxu0 0.0
        %3031 = vmatprep.subr.mxu0 0.0
        %3032 = vmatpush2.msra.mxu0 0.0
        %3033 = vmatprep.subr.mxu0 0.0
        %3034 = vmatpush2.msra.mxu0 0.0
        %3035 = vmatprep.subr.mxu0 0.0
        %3036 = vmatpush2.msra.mxu0 0.0
        %3037 = vmatprep.mubr.f32.mxu0 0.0
        %v3038 = vand.u32 %v2925, 4294901760
        %v3039 = vsub.f32 %v2925, %v3038
        %v3040 = vand.u32 %v3039, 4294901760
        %v3041 = vsub.f32 %v3039, %v3040
        %v3042 = vand.u32 %v3041, 4294901760
        %3043 = vmatmul.mubr.f32.gmra.mxu0 %v3042
        %v3044 = vpop.f32.mrf.mxu0
        %v3045 = vadd.f32 0.0, %v3044
        %v3046 = vpop.f32.mrf.mxu0
        %3047 = vmatprep.mubr.f32.mxu0 0.0
        %v3048 = vand.u32 %v2928, 4294901760
        %v3049 = vsub.f32 %v2928, %v3048
        %v3050 = vand.u32 %v3049, 4294901760
        %v3051 = vsub.f32 %v3049, %v3050
        %v3052 = vand.u32 %v3051, 4294901760
        %3053 = vmatmul.mubr.f32.gmra.mxu0 %v3052
        %v3054 = vpop.f32.mrf.mxu0
        %v3055 = vadd.f32 0.0, %v3054
        %v3056 = vpop.f32.mrf.mxu0
        %3057 = vmatprep.mubr.f32.mxu0 0.0
        %v3058 = vand.u32 %v2931, 4294901760
        %v3059 = vsub.f32 %v2931, %v3058
        %v3060 = vand.u32 %v3059, 4294901760
        %v3061 = vsub.f32 %v3059, %v3060
        %v3062 = vand.u32 %v3061, 4294901760
        %3063 = vmatmul.mubr.f32.gmra.mxu0 %v3062
        %v3064 = vpop.f32.mrf.mxu0
        %v3065 = vadd.f32 0.0, %v3064
        %v3066 = vpop.f32.mrf.mxu0
        %3067 = vmatprep.mubr.f32.mxu0 0.0
        %v3068 = vand.u32 %v2934, 4294901760
        %v3069 = vsub.f32 %v2934, %v3068
        %v3070 = vand.u32 %v3069, 4294901760
        %v3071 = vsub.f32 %v3069, %v3070
        %v3072 = vand.u32 %v3071, 4294901760
        %3073 = vmatmul.mubr.f32.gmra.mxu0 %v3072
        %v3074 = vpop.f32.mrf.mxu0
        %v3075 = vadd.f32 0.0, %v3074
        %v3076 = vpop.f32.mrf.mxu0
        %3077 = vmatprep.mubr.f32.mxu0 0.0
        %v3078 = vand.u32 %v2937, 4294901760
        %v3079 = vsub.f32 %v2937, %v3078
        %v3080 = vand.u32 %v3079, 4294901760
        %v3081 = vsub.f32 %v3079, %v3080
        %v3082 = vand.u32 %v3081, 4294901760
        %3083 = vmatmul.mubr.f32.gmra.mxu0 %v3082
        %v3084 = vpop.f32.mrf.mxu0
        %v3085 = vadd.f32 0.0, %v3084
        %v3086 = vpop.f32.mrf.mxu0
        %3087 = vmatprep.mubr.f32.mxu0 0.0
        %v3088 = vand.u32 %v2940, 4294901760
        %v3089 = vsub.f32 %v2940, %v3088
        %v3090 = vand.u32 %v3089, 4294901760
        %v3091 = vsub.f32 %v3089, %v3090
        %v3092 = vand.u32 %v3091, 4294901760
        %3093 = vmatmul.mubr.f32.gmra.mxu0 %v3092
        %v3094 = vpop.f32.mrf.mxu0
        %v3095 = vadd.f32 0.0, %v3094
        %v3096 = vpop.f32.mrf.mxu0
        %3097 = vmatprep.mubr.f32.mxu0 0.0
        %v3098 = vand.u32 %v2943, 4294901760
        %v3099 = vsub.f32 %v2943, %v3098
        %v3100 = vand.u32 %v3099, 4294901760
        %v3101 = vsub.f32 %v3099, %v3100
        %v3102 = vand.u32 %v3101, 4294901760
        %3103 = vmatmul.mubr.f32.gmra.mxu0 %v3102
        %v3104 = vpop.f32.mrf.mxu0
        %v3105 = vadd.f32 0.0, %v3104
        %v3106 = vpop.f32.mrf.mxu0
        %3107 = vmatprep.mubr.f32.mxu0 0.0
        %v3108 = vand.u32 %v2946, 4294901760
        %v3109 = vsub.f32 %v2946, %v3108
        %v3110 = vand.u32 %v3109, 4294901760
        %v3111 = vsub.f32 %v3109, %v3110
        %v3112 = vand.u32 %v3111, 4294901760
        %3113 = vmatmul.mubr.f32.gmra.mxu0 %v3112
        %v3114 = vpop.f32.mrf.mxu0
        %v3115 = vadd.f32 0.0, %v3114
        %v3116 = vpop.f32.mrf.mxu0
        %3117 = vmatprep.mubr.f32.mxu0 0.0
        %v3118 = vand.u32 %v2949, 4294901760
        %v3119 = vsub.f32 %v2949, %v3118
        %v3120 = vand.u32 %v3119, 4294901760
        %v3121 = vsub.f32 %v3119, %v3120
        %v3122 = vand.u32 %v3121, 4294901760
        %3123 = vmatmul.mubr.f32.gmra.mxu0 %v3122
        %v3124 = vpop.f32.mrf.mxu0
        %v3125 = vadd.f32 0.0, %v3124
        %v3126 = vpop.f32.mrf.mxu0
        %3127 = vmatprep.mubr.f32.mxu0 0.0
        %v3128 = vand.u32 %v2952, 4294901760
        %v3129 = vsub.f32 %v2952, %v3128
        %v3130 = vand.u32 %v3129, 4294901760
        %v3131 = vsub.f32 %v3129, %v3130
        %v3132 = vand.u32 %v3131, 4294901760
        %3133 = vmatmul.mubr.f32.gmra.mxu0 %v3132
        %v3134 = vpop.f32.mrf.mxu0
        %v3135 = vadd.f32 0.0, %v3134
        %v3136 = vpop.f32.mrf.mxu0
        %3137 = vmatprep.mubr.f32.mxu0 0.0
        %v3138 = vand.u32 %v2955, 4294901760
        %v3139 = vsub.f32 %v2955, %v3138
        %v3140 = vand.u32 %v3139, 4294901760
        %v3141 = vsub.f32 %v3139, %v3140
        %v3142 = vand.u32 %v3141, 4294901760
        %3143 = vmatmul.mubr.f32.gmra.mxu0 %v3142
        %v3144 = vpop.f32.mrf.mxu0
        %v3145 = vadd.f32 0.0, %v3144
        %v3146 = vpop.f32.mrf.mxu0
        %3147 = vmatprep.mubr.f32.mxu0 0.0
        %v3148 = vand.u32 %v2958, 4294901760
        %v3149 = vsub.f32 %v2958, %v3148
        %v3150 = vand.u32 %v3149, 4294901760
        %v3151 = vsub.f32 %v3149, %v3150
        %v3152 = vand.u32 %v3151, 4294901760
        %3153 = vmatmul.mubr.f32.gmra.mxu0 %v3152
        %v3154 = vpop.f32.mrf.mxu0
        %v3155 = vadd.f32 0.0, %v3154
        %v3156 = vpop.f32.mrf.mxu0
        %3157 = vmatprep.mubr.f32.mxu0 0.0
        %v3158 = vand.u32 %v2961, 4294901760
        %v3159 = vsub.f32 %v2961, %v3158
        %v3160 = vand.u32 %v3159, 4294901760
        %v3161 = vsub.f32 %v3159, %v3160
        %v3162 = vand.u32 %v3161, 4294901760
        %3163 = vmatmul.mubr.f32.gmra.mxu0 %v3162
        %v3164 = vpop.f32.mrf.mxu0
        %v3165 = vadd.f32 0.0, %v3164
        %v3166 = vpop.f32.mrf.mxu0
        %3167 = vmatprep.mubr.f32.mxu0 0.0
        %v3168 = vand.u32 %v2964, 4294901760
        %v3169 = vsub.f32 %v2964, %v3168
        %v3170 = vand.u32 %v3169, 4294901760
        %v3171 = vsub.f32 %v3169, %v3170
        %v3172 = vand.u32 %v3171, 4294901760
        %3173 = vmatmul.mubr.f32.gmra.mxu0 %v3172
        %v3174 = vpop.f32.mrf.mxu0
        %v3175 = vadd.f32 0.0, %v3174
        %v3176 = vpop.f32.mrf.mxu0
        %3177 = vmatprep.mubr.f32.mxu0 0.0
        %v3178 = vand.u32 %v2967, 4294901760
        %v3179 = vsub.f32 %v2967, %v3178
        %v3180 = vand.u32 %v3179, 4294901760
        %v3181 = vsub.f32 %v3179, %v3180
        %v3182 = vand.u32 %v3181, 4294901760
        %3183 = vmatmul.mubr.f32.gmra.mxu0 %v3182
        %v3184 = vpop.f32.mrf.mxu0
        %v3185 = vadd.f32 0.0, %v3184
        %v3186 = vpop.f32.mrf.mxu0
        %3187 = vmatprep.mubr.f32.mxu0 0.0
        %v3188 = vand.u32 %v2970, 4294901760
        %v3189 = vsub.f32 %v2970, %v3188
        %v3190 = vand.u32 %v3189, 4294901760
        %v3191 = vsub.f32 %v3189, %v3190
        %v3192 = vand.u32 %v3191, 4294901760
        %3193 = vmatmul.mubr.f32.gmra.mxu0 %v3192
        %v3194 = vpop.f32.mrf.mxu0
        %v3195 = vadd.f32 0.0, %v3194
        %v3196 = vpop.f32.mrf.mxu0
        %3197 = vdwg.mxu0
        %3198 = vmatprep.subr.mxu0 0.0
        %3199 = vmatpush1.msra.mxu0 0.0
        %3200 = vmatprep.subr.mxu0 0.0
        %3201 = vmatpush1.msra.mxu0 0.0
        %3202 = vmatprep.subr.mxu0 0.0
        %3203 = vmatpush1.msra.mxu0 0.0
        %3204 = vmatprep.subr.mxu0 0.0
        %3205 = vmatpush1.msra.mxu0 0.0
        %3206 = vmatprep.subr.mxu0 0.0
        %3207 = vmatpush1.msra.mxu0 0.0
        %3208 = vmatprep.subr.mxu0 0.0
        %3209 = vmatpush1.msra.mxu0 0.0
        %3210 = vmatprep.subr.mxu0 0.0
        %3211 = vmatpush1.msra.mxu0 0.0
        %3212 = vmatprep.subr.mxu0 0.0
        %3213 = vmatpush1.msra.mxu0 0.0
        %3214 = vmatprep.subr.mxu0 0.0
        %3215 = vmatpush1.msra.mxu0 0.0
        %3216 = vmatprep.subr.mxu0 0.0
        %3217 = vmatpush1.msra.mxu0 0.0
        %3218 = vmatprep.subr.mxu0 0.0
        %3219 = vmatpush1.msra.mxu0 0.0
        %3220 = vmatprep.subr.mxu0 0.0
        %3221 = vmatpush1.msra.mxu0 0.0
        %3222 = vmatprep.subr.mxu0 0.0
        %3223 = vmatpush1.msra.mxu0 0.0
        %3224 = vmatprep.subr.mxu0 0.0
        %3225 = vmatpush1.msra.mxu0 0.0
        %3226 = vmatprep.subr.mxu0 0.0
        %3227 = vmatpush1.msra.mxu0 0.0
        %3228 = vmatprep.subr.mxu0 0.0
        %v3229 = vand.u32 %v414, 4294901760
        %v3230 = vsub.f32 %v414, %v3229
        %v3231 = vand.u32 %v3230, 4294901760
        %v3232 = vsub.f32 %v3230, %v3231
        %v3233 = vand.u32 %v3232, 4294901760
        %3234 = vmatpush1.msra.mxu0 %v3233
        %3235 = vmatprep.subr.mxu0 0.0
        %3236 = vmatpush2.msra.mxu0 0.0
        %3237 = vmatprep.subr.mxu0 0.0
        %3238 = vmatpush2.msra.mxu0 0.0
        %3239 = vmatprep.subr.mxu0 0.0
        %3240 = vmatpush2.msra.mxu0 0.0
        %3241 = vmatprep.subr.mxu0 0.0
        %3242 = vmatpush2.msra.mxu0 0.0
        %3243 = vmatprep.subr.mxu0 0.0
        %3244 = vmatpush2.msra.mxu0 0.0
        %3245 = vmatprep.subr.mxu0 0.0
        %3246 = vmatpush2.msra.mxu0 0.0
        %3247 = vmatprep.subr.mxu0 0.0
        %3248 = vmatpush2.msra.mxu0 0.0
        %3249 = vmatprep.subr.mxu0 0.0
        %3250 = vmatpush2.msra.mxu0 0.0
        %3251 = vmatprep.subr.mxu0 0.0
        %3252 = vmatpush2.msra.mxu0 0.0
        %3253 = vmatprep.subr.mxu0 0.0
        %3254 = vmatpush2.msra.mxu0 0.0
        %3255 = vmatprep.subr.mxu0 0.0
        %3256 = vmatpush2.msra.mxu0 0.0
        %3257 = vmatprep.subr.mxu0 0.0
        %3258 = vmatpush2.msra.mxu0 0.0
        %3259 = vmatprep.subr.mxu0 0.0
        %3260 = vmatpush2.msra.mxu0 0.0
        %3261 = vmatprep.subr.mxu0 0.0
        %3262 = vmatpush2.msra.mxu0 0.0
        %3263 = vmatprep.subr.mxu0 0.0
        %3264 = vmatpush2.msra.mxu0 0.0
        %3265 = vmatprep.subr.mxu0 0.0
        %3266 = vmatpush2.msra.mxu0 0.0
        %3267 = vmatprep.mubr.f32.mxu0 0.0
        %v3268 = vand.u32 %v2925, 4294901760
        %3269 = vmatmul.mubr.f32.gmra.mxu0 %v3268
        %v3270 = vpop.f32.mrf.mxu0
        %v3271 = vadd.f32 %v3045, %v3270
        %v3272 = vpop.f32.mrf.mxu0
        %3273 = vmatprep.mubr.f32.mxu0 0.0
        %v3274 = vand.u32 %v2928, 4294901760
        %3275 = vmatmul.mubr.f32.gmra.mxu0 %v3274
        %v3276 = vpop.f32.mrf.mxu0
        %v3277 = vadd.f32 %v3055, %v3276
        %v3278 = vpop.f32.mrf.mxu0
        %3279 = vmatprep.mubr.f32.mxu0 0.0
        %v3280 = vand.u32 %v2931, 4294901760
        %3281 = vmatmul.mubr.f32.gmra.mxu0 %v3280
        %v3282 = vpop.f32.mrf.mxu0
        %v3283 = vadd.f32 %v3065, %v3282
        %v3284 = vpop.f32.mrf.mxu0
        %3285 = vmatprep.mubr.f32.mxu0 0.0
        %v3286 = vand.u32 %v2934, 4294901760
        %3287 = vmatmul.mubr.f32.gmra.mxu0 %v3286
        %v3288 = vpop.f32.mrf.mxu0
        %v3289 = vadd.f32 %v3075, %v3288
        %v3290 = vpop.f32.mrf.mxu0
        %3291 = vmatprep.mubr.f32.mxu0 0.0
        %v3292 = vand.u32 %v2937, 4294901760
        %3293 = vmatmul.mubr.f32.gmra.mxu0 %v3292
        %v3294 = vpop.f32.mrf.mxu0
        %v3295 = vadd.f32 %v3085, %v3294
        %v3296 = vpop.f32.mrf.mxu0
        %3297 = vmatprep.mubr.f32.mxu0 0.0
        %v3298 = vand.u32 %v2940, 4294901760
        %3299 = vmatmul.mubr.f32.gmra.mxu0 %v3298
        %v3300 = vpop.f32.mrf.mxu0
        %v3301 = vadd.f32 %v3095, %v3300
        %v3302 = vpop.f32.mrf.mxu0
        %3303 = vmatprep.mubr.f32.mxu0 0.0
        %v3304 = vand.u32 %v2943, 4294901760
        %3305 = vmatmul.mubr.f32.gmra.mxu0 %v3304
        %v3306 = vpop.f32.mrf.mxu0
        %v3307 = vadd.f32 %v3105, %v3306
        %v3308 = vpop.f32.mrf.mxu0
        %3309 = vmatprep.mubr.f32.mxu0 0.0
        %v3310 = vand.u32 %v2946, 4294901760
        %3311 = vmatmul.mubr.f32.gmra.mxu0 %v3310
        %v3312 = vpop.f32.mrf.mxu0
        %v3313 = vadd.f32 %v3115, %v3312
        %v3314 = vpop.f32.mrf.mxu0
        %3315 = vmatprep.mubr.f32.mxu0 0.0
        %v3316 = vand.u32 %v2949, 4294901760
        %3317 = vmatmul.mubr.f32.gmra.mxu0 %v3316
        %v3318 = vpop.f32.mrf.mxu0
        %v3319 = vadd.f32 %v3125, %v3318
        %v3320 = vpop.f32.mrf.mxu0
        %3321 = vmatprep.mubr.f32.mxu0 0.0
        %v3322 = vand.u32 %v2952, 4294901760
        %3323 = vmatmul.mubr.f32.gmra.mxu0 %v3322
        %v3324 = vpop.f32.mrf.mxu0
        %v3325 = vadd.f32 %v3135, %v3324
        %v3326 = vpop.f32.mrf.mxu0
        %3327 = vmatprep.mubr.f32.mxu0 0.0
        %v3328 = vand.u32 %v2955, 4294901760
        %3329 = vmatmul.mubr.f32.gmra.mxu0 %v3328
        %v3330 = vpop.f32.mrf.mxu0
        %v3331 = vadd.f32 %v3145, %v3330
        %v3332 = vpop.f32.mrf.mxu0
        %3333 = vmatprep.mubr.f32.mxu0 0.0
        %v3334 = vand.u32 %v2958, 4294901760
        %3335 = vmatmul.mubr.f32.gmra.mxu0 %v3334
        %v3336 = vpop.f32.mrf.mxu0
        %v3337 = vadd.f32 %v3155, %v3336
        %v3338 = vpop.f32.mrf.mxu0
        %3339 = vmatprep.mubr.f32.mxu0 0.0
        %v3340 = vand.u32 %v2961, 4294901760
        %3341 = vmatmul.mubr.f32.gmra.mxu0 %v3340
        %v3342 = vpop.f32.mrf.mxu0
        %v3343 = vadd.f32 %v3165, %v3342
        %v3344 = vpop.f32.mrf.mxu0
        %3345 = vmatprep.mubr.f32.mxu0 0.0
        %v3346 = vand.u32 %v2964, 4294901760
        %3347 = vmatmul.mubr.f32.gmra.mxu0 %v3346
        %v3348 = vpop.f32.mrf.mxu0
        %v3349 = vadd.f32 %v3175, %v3348
        %v3350 = vpop.f32.mrf.mxu0
        %3351 = vmatprep.mubr.f32.mxu0 0.0
        %v3352 = vand.u32 %v2967, 4294901760
        %3353 = vmatmul.mubr.f32.gmra.mxu0 %v3352
        %v3354 = vpop.f32.mrf.mxu0
        %v3355 = vadd.f32 %v3185, %v3354
        %v3356 = vpop.f32.mrf.mxu0
        %3357 = vmatprep.mubr.f32.mxu0 0.0
        %v3358 = vand.u32 %v2970, 4294901760
        %3359 = vmatmul.mubr.f32.gmra.mxu0 %v3358
        %v3360 = vpop.f32.mrf.mxu0
        %v3361 = vadd.f32 %v3195, %v3360
        %v3362 = vpop.f32.mrf.mxu0
        %3363 = vdwg.mxu0
        %3364 = vmatprep.subr.mxu0 0.0
        %3365 = vmatpush1.msra.mxu0 0.0
        %3366 = vmatprep.subr.mxu0 0.0
        %3367 = vmatpush1.msra.mxu0 0.0
        %3368 = vmatprep.subr.mxu0 0.0
        %3369 = vmatpush1.msra.mxu0 0.0
        %3370 = vmatprep.subr.mxu0 0.0
        %3371 = vmatpush1.msra.mxu0 0.0
        %3372 = vmatprep.subr.mxu0 0.0
        %3373 = vmatpush1.msra.mxu0 0.0
        %3374 = vmatprep.subr.mxu0 0.0
        %3375 = vmatpush1.msra.mxu0 0.0
        %3376 = vmatprep.subr.mxu0 0.0
        %3377 = vmatpush1.msra.mxu0 0.0
        %3378 = vmatprep.subr.mxu0 0.0
        %3379 = vmatpush1.msra.mxu0 0.0
        %3380 = vmatprep.subr.mxu0 0.0
        %3381 = vmatpush1.msra.mxu0 0.0
        %3382 = vmatprep.subr.mxu0 0.0
        %3383 = vmatpush1.msra.mxu0 0.0
        %3384 = vmatprep.subr.mxu0 0.0
        %3385 = vmatpush1.msra.mxu0 0.0
        %3386 = vmatprep.subr.mxu0 0.0
        %3387 = vmatpush1.msra.mxu0 0.0
        %3388 = vmatprep.subr.mxu0 0.0
        %3389 = vmatpush1.msra.mxu0 0.0
        %3390 = vmatprep.subr.mxu0 0.0
        %3391 = vmatpush1.msra.mxu0 0.0
        %3392 = vmatprep.subr.mxu0 0.0
        %3393 = vmatpush1.msra.mxu0 0.0
        %3394 = vmatprep.subr.mxu0 0.0
        %v3395 = vand.u32 %v414, 4294901760
        %v3396 = vsub.f32 %v414, %v3395
        %3397 = vmatpush1.msra.mxu0 %v3396
        %3398 = vmatprep.subr.mxu0 0.0
        %3399 = vmatpush2.msra.mxu0 0.0
        %3400 = vmatprep.subr.mxu0 0.0
        %3401 = vmatpush2.msra.mxu0 0.0
        %3402 = vmatprep.subr.mxu0 0.0
        %3403 = vmatpush2.msra.mxu0 0.0
        %3404 = vmatprep.subr.mxu0 0.0
        %3405 = vmatpush2.msra.mxu0 0.0
        %3406 = vmatprep.subr.mxu0 0.0
        %3407 = vmatpush2.msra.mxu0 0.0
        %3408 = vmatprep.subr.mxu0 0.0
        %3409 = vmatpush2.msra.mxu0 0.0
        %3410 = vmatprep.subr.mxu0 0.0
        %3411 = vmatpush2.msra.mxu0 0.0
        %3412 = vmatprep.subr.mxu0 0.0
        %3413 = vmatpush2.msra.mxu0 0.0
        %3414 = vmatprep.subr.mxu0 0.0
        %3415 = vmatpush2.msra.mxu0 0.0
        %3416 = vmatprep.subr.mxu0 0.0
        %3417 = vmatpush2.msra.mxu0 0.0
        %3418 = vmatprep.subr.mxu0 0.0
        %3419 = vmatpush2.msra.mxu0 0.0
        %3420 = vmatprep.subr.mxu0 0.0
        %3421 = vmatpush2.msra.mxu0 0.0
        %3422 = vmatprep.subr.mxu0 0.0
        %3423 = vmatpush2.msra.mxu0 0.0
        %3424 = vmatprep.subr.mxu0 0.0
        %3425 = vmatpush2.msra.mxu0 0.0
        %3426 = vmatprep.subr.mxu0 0.0
        %3427 = vmatpush2.msra.mxu0 0.0
        %3428 = vmatprep.subr.mxu0 0.0
        %3429 = vmatpush2.msra.mxu0 0.0
        %3430 = vmatprep.mubr.f32.mxu0 0.0
        %v3431 = vand.u32 %v2925, 4294901760
        %v3432 = vsub.f32 %v2925, %v3431
        %3433 = vmatmul.mubr.f32.gmra.mxu0 %v3432
        %v3434 = vpop.f32.mrf.mxu0
        %v3435 = vadd.f32 %v3271, %v3434
        %v3436 = vpop.f32.mrf.mxu0
        %3437 = vmatprep.mubr.f32.mxu0 0.0
        %v3438 = vand.u32 %v2928, 4294901760
        %v3439 = vsub.f32 %v2928, %v3438
        %3440 = vmatmul.mubr.f32.gmra.mxu0 %v3439
        %v3441 = vpop.f32.mrf.mxu0
        %v3442 = vadd.f32 %v3277, %v3441
        %v3443 = vpop.f32.mrf.mxu0
        %3444 = vmatprep.mubr.f32.mxu0 0.0
        %v3445 = vand.u32 %v2931, 4294901760
        %v3446 = vsub.f32 %v2931, %v3445
        %3447 = vmatmul.mubr.f32.gmra.mxu0 %v3446
        %v3448 = vpop.f32.mrf.mxu0
        %v3449 = vadd.f32 %v3283, %v3448
        %v3450 = vpop.f32.mrf.mxu0
        %3451 = vmatprep.mubr.f32.mxu0 0.0
        %v3452 = vand.u32 %v2934, 4294901760
        %v3453 = vsub.f32 %v2934, %v3452
        %3454 = vmatmul.mubr.f32.gmra.mxu0 %v3453
        %v3455 = vpop.f32.mrf.mxu0
        %v3456 = vadd.f32 %v3289, %v3455
        %v3457 = vpop.f32.mrf.mxu0
        %3458 = vmatprep.mubr.f32.mxu0 0.0
        %v3459 = vand.u32 %v2937, 4294901760
        %v3460 = vsub.f32 %v2937, %v3459
        %3461 = vmatmul.mubr.f32.gmra.mxu0 %v3460
        %v3462 = vpop.f32.mrf.mxu0
        %v3463 = vadd.f32 %v3295, %v3462
        %v3464 = vpop.f32.mrf.mxu0
        %3465 = vmatprep.mubr.f32.mxu0 0.0
        %v3466 = vand.u32 %v2940, 4294901760
        %v3467 = vsub.f32 %v2940, %v3466
        %3468 = vmatmul.mubr.f32.gmra.mxu0 %v3467
        %v3469 = vpop.f32.mrf.mxu0
        %v3470 = vadd.f32 %v3301, %v3469
        %v3471 = vpop.f32.mrf.mxu0
        %3472 = vmatprep.mubr.f32.mxu0 0.0
        %v3473 = vand.u32 %v2943, 4294901760
        %v3474 = vsub.f32 %v2943, %v3473
        %3475 = vmatmul.mubr.f32.gmra.mxu0 %v3474
        %v3476 = vpop.f32.mrf.mxu0
        %v3477 = vadd.f32 %v3307, %v3476
        %v3478 = vpop.f32.mrf.mxu0
        %3479 = vmatprep.mubr.f32.mxu0 0.0
        %v3480 = vand.u32 %v2946, 4294901760
        %v3481 = vsub.f32 %v2946, %v3480
        %3482 = vmatmul.mubr.f32.gmra.mxu0 %v3481
        %v3483 = vpop.f32.mrf.mxu0
        %v3484 = vadd.f32 %v3313, %v3483
        %v3485 = vpop.f32.mrf.mxu0
        %3486 = vmatprep.mubr.f32.mxu0 0.0
        %v3487 = vand.u32 %v2949, 4294901760
        %v3488 = vsub.f32 %v2949, %v3487
        %3489 = vmatmul.mubr.f32.gmra.mxu0 %v3488
        %v3490 = vpop.f32.mrf.mxu0
        %v3491 = vadd.f32 %v3319, %v3490
        %v3492 = vpop.f32.mrf.mxu0
        %3493 = vmatprep.mubr.f32.mxu0 0.0
        %v3494 = vand.u32 %v2952, 4294901760
        %v3495 = vsub.f32 %v2952, %v3494
        %3496 = vmatmul.mubr.f32.gmra.mxu0 %v3495
        %v3497 = vpop.f32.mrf.mxu0
        %v3498 = vadd.f32 %v3325, %v3497
        %v3499 = vpop.f32.mrf.mxu0
        %3500 = vmatprep.mubr.f32.mxu0 0.0
        %v3501 = vand.u32 %v2955, 4294901760
        %v3502 = vsub.f32 %v2955, %v3501
        %3503 = vmatmul.mubr.f32.gmra.mxu0 %v3502
        %v3504 = vpop.f32.mrf.mxu0
        %v3505 = vadd.f32 %v3331, %v3504
        %v3506 = vpop.f32.mrf.mxu0
        %3507 = vmatprep.mubr.f32.mxu0 0.0
        %v3508 = vand.u32 %v2958, 4294901760
        %v3509 = vsub.f32 %v2958, %v3508
        %3510 = vmatmul.mubr.f32.gmra.mxu0 %v3509
        %v3511 = vpop.f32.mrf.mxu0
        %v3512 = vadd.f32 %v3337, %v3511
        %v3513 = vpop.f32.mrf.mxu0
        %3514 = vmatprep.mubr.f32.mxu0 0.0
        %v3515 = vand.u32 %v2961, 4294901760
        %v3516 = vsub.f32 %v2961, %v3515
        %3517 = vmatmul.mubr.f32.gmra.mxu0 %v3516
        %v3518 = vpop.f32.mrf.mxu0
        %v3519 = vadd.f32 %v3343, %v3518
        %v3520 = vpop.f32.mrf.mxu0
        %3521 = vmatprep.mubr.f32.mxu0 0.0
        %v3522 = vand.u32 %v2964, 4294901760
        %v3523 = vsub.f32 %v2964, %v3522
        %3524 = vmatmul.mubr.f32.gmra.mxu0 %v3523
        %v3525 = vpop.f32.mrf.mxu0
        %v3526 = vadd.f32 %v3349, %v3525
        %v3527 = vpop.f32.mrf.mxu0
        %3528 = vmatprep.mubr.f32.mxu0 0.0
        %v3529 = vand.u32 %v2967, 4294901760
        %v3530 = vsub.f32 %v2967, %v3529
        %3531 = vmatmul.mubr.f32.gmra.mxu0 %v3530
        %v3532 = vpop.f32.mrf.mxu0
        %v3533 = vadd.f32 %v3355, %v3532
        %v3534 = vpop.f32.mrf.mxu0
        %3535 = vmatprep.mubr.f32.mxu0 0.0
        %v3536 = vand.u32 %v2970, 4294901760
        %v3537 = vsub.f32 %v2970, %v3536
        %3538 = vmatmul.mubr.f32.gmra.mxu0 %v3537
        %v3539 = vpop.f32.mrf.mxu0
        %v3540 = vadd.f32 %v3361, %v3539
        %v3541 = vpop.f32.mrf.mxu0
        %3542 = vdwg.mxu0
        %3543 = vmatprep.subr.mxu0 0.0
        %3544 = vmatpush1.msra.mxu0 0.0
        %3545 = vmatprep.subr.mxu0 0.0
        %3546 = vmatpush1.msra.mxu0 0.0
        %3547 = vmatprep.subr.mxu0 0.0
        %3548 = vmatpush1.msra.mxu0 0.0
        %3549 = vmatprep.subr.mxu0 0.0
        %3550 = vmatpush1.msra.mxu0 0.0
        %3551 = vmatprep.subr.mxu0 0.0
        %3552 = vmatpush1.msra.mxu0 0.0
        %3553 = vmatprep.subr.mxu0 0.0
        %3554 = vmatpush1.msra.mxu0 0.0
        %3555 = vmatprep.subr.mxu0 0.0
        %3556 = vmatpush1.msra.mxu0 0.0
        %3557 = vmatprep.subr.mxu0 0.0
        %3558 = vmatpush1.msra.mxu0 0.0
        %3559 = vmatprep.subr.mxu0 0.0
        %3560 = vmatpush1.msra.mxu0 0.0
        %3561 = vmatprep.subr.mxu0 0.0
        %3562 = vmatpush1.msra.mxu0 0.0
        %3563 = vmatprep.subr.mxu0 0.0
        %3564 = vmatpush1.msra.mxu0 0.0
        %3565 = vmatprep.subr.mxu0 0.0
        %3566 = vmatpush1.msra.mxu0 0.0
        %3567 = vmatprep.subr.mxu0 0.0
        %3568 = vmatpush1.msra.mxu0 0.0
        %3569 = vmatprep.subr.mxu0 0.0
        %3570 = vmatpush1.msra.mxu0 0.0
        %3571 = vmatprep.subr.mxu0 0.0
        %3572 = vmatpush1.msra.mxu0 0.0
        %3573 = vmatprep.subr.mxu0 0.0
        %v3574 = vand.u32 %v414, 4294901760
        %3575 = vmatpush1.msra.mxu0 %v3574
        %3576 = vmatprep.subr.mxu0 0.0
        %3577 = vmatpush2.msra.mxu0 0.0
        %3578 = vmatprep.subr.mxu0 0.0
        %3579 = vmatpush2.msra.mxu0 0.0
        %3580 = vmatprep.subr.mxu0 0.0
        %3581 = vmatpush2.msra.mxu0 0.0
        %3582 = vmatprep.subr.mxu0 0.0
        %3583 = vmatpush2.msra.mxu0 0.0
        %3584 = vmatprep.subr.mxu0 0.0
        %3585 = vmatpush2.msra.mxu0 0.0
        %3586 = vmatprep.subr.mxu0 0.0
        %3587 = vmatpush2.msra.mxu0 0.0
        %3588 = vmatprep.subr.mxu0 0.0
        %3589 = vmatpush2.msra.mxu0 0.0
        %3590 = vmatprep.subr.mxu0 0.0
        %3591 = vmatpush2.msra.mxu0 0.0
        %3592 = vmatprep.subr.mxu0 0.0
        %3593 = vmatpush2.msra.mxu0 0.0
        %3594 = vmatprep.subr.mxu0 0.0
        %3595 = vmatpush2.msra.mxu0 0.0
        %3596 = vmatprep.subr.mxu0 0.0
        %3597 = vmatpush2.msra.mxu0 0.0
        %3598 = vmatprep.subr.mxu0 0.0
        %3599 = vmatpush2.msra.mxu0 0.0
        %3600 = vmatprep.subr.mxu0 0.0
        %3601 = vmatpush2.msra.mxu0 0.0
        %3602 = vmatprep.subr.mxu0 0.0
        %3603 = vmatpush2.msra.mxu0 0.0
        %3604 = vmatprep.subr.mxu0 0.0
        %3605 = vmatpush2.msra.mxu0 0.0
        %3606 = vmatprep.subr.mxu0 0.0
        %3607 = vmatpush2.msra.mxu0 0.0
        %3608 = vmatprep.mubr.f32.mxu0 0.0
        %v3609 = vand.u32 %v2925, 4294901760
        %v3610 = vsub.f32 %v2925, %v3609
        %v3611 = vand.u32 %v3610, 4294901760
        %3612 = vmatmul.mubr.f32.gmra.mxu0 %v3611
        %v3613 = vpop.f32.mrf.mxu0
        %v3614 = vadd.f32 %v3435, %v3613
        %v3615 = vpop.f32.mrf.mxu0
        %3616 = vmatprep.mubr.f32.mxu0 0.0
        %v3617 = vand.u32 %v2928, 4294901760
        %v3618 = vsub.f32 %v2928, %v3617
        %v3619 = vand.u32 %v3618, 4294901760
        %3620 = vmatmul.mubr.f32.gmra.mxu0 %v3619
        %v3621 = vpop.f32.mrf.mxu0
        %v3622 = vadd.f32 %v3442, %v3621
        %v3623 = vpop.f32.mrf.mxu0
        %3624 = vmatprep.mubr.f32.mxu0 0.0
        %v3625 = vand.u32 %v2931, 4294901760
        %v3626 = vsub.f32 %v2931, %v3625
        %v3627 = vand.u32 %v3626, 4294901760
        %3628 = vmatmul.mubr.f32.gmra.mxu0 %v3627
        %v3629 = vpop.f32.mrf.mxu0
        %v3630 = vadd.f32 %v3449, %v3629
        %v3631 = vpop.f32.mrf.mxu0
        %3632 = vmatprep.mubr.f32.mxu0 0.0
        %v3633 = vand.u32 %v2934, 4294901760
        %v3634 = vsub.f32 %v2934, %v3633
        %v3635 = vand.u32 %v3634, 4294901760
        %3636 = vmatmul.mubr.f32.gmra.mxu0 %v3635
        %v3637 = vpop.f32.mrf.mxu0
        %v3638 = vadd.f32 %v3456, %v3637
        %v3639 = vpop.f32.mrf.mxu0
        %3640 = vmatprep.mubr.f32.mxu0 0.0
        %v3641 = vand.u32 %v2937, 4294901760
        %v3642 = vsub.f32 %v2937, %v3641
        %v3643 = vand.u32 %v3642, 4294901760
        %3644 = vmatmul.mubr.f32.gmra.mxu0 %v3643
        %v3645 = vpop.f32.mrf.mxu0
        %v3646 = vadd.f32 %v3463, %v3645
        %v3647 = vpop.f32.mrf.mxu0
        %3648 = vmatprep.mubr.f32.mxu0 0.0
        %v3649 = vand.u32 %v2940, 4294901760
        %v3650 = vsub.f32 %v2940, %v3649
        %v3651 = vand.u32 %v3650, 4294901760
        %3652 = vmatmul.mubr.f32.gmra.mxu0 %v3651
        %v3653 = vpop.f32.mrf.mxu0
        %v3654 = vadd.f32 %v3470, %v3653
        %v3655 = vpop.f32.mrf.mxu0
        %3656 = vmatprep.mubr.f32.mxu0 0.0
        %v3657 = vand.u32 %v2943, 4294901760
        %v3658 = vsub.f32 %v2943, %v3657
        %v3659 = vand.u32 %v3658, 4294901760
        %3660 = vmatmul.mubr.f32.gmra.mxu0 %v3659
        %v3661 = vpop.f32.mrf.mxu0
        %v3662 = vadd.f32 %v3477, %v3661
        %v3663 = vpop.f32.mrf.mxu0
        %3664 = vmatprep.mubr.f32.mxu0 0.0
        %v3665 = vand.u32 %v2946, 4294901760
        %v3666 = vsub.f32 %v2946, %v3665
        %v3667 = vand.u32 %v3666, 4294901760
        %3668 = vmatmul.mubr.f32.gmra.mxu0 %v3667
        %v3669 = vpop.f32.mrf.mxu0
        %v3670 = vadd.f32 %v3484, %v3669
        %v3671 = vpop.f32.mrf.mxu0
        %3672 = vmatprep.mubr.f32.mxu0 0.0
        %v3673 = vand.u32 %v2949, 4294901760
        %v3674 = vsub.f32 %v2949, %v3673
        %v3675 = vand.u32 %v3674, 4294901760
        %3676 = vmatmul.mubr.f32.gmra.mxu0 %v3675
        %v3677 = vpop.f32.mrf.mxu0
        %v3678 = vadd.f32 %v3491, %v3677
        %v3679 = vpop.f32.mrf.mxu0
        %3680 = vmatprep.mubr.f32.mxu0 0.0
        %v3681 = vand.u32 %v2952, 4294901760
        %v3682 = vsub.f32 %v2952, %v3681
        %v3683 = vand.u32 %v3682, 4294901760
        %3684 = vmatmul.mubr.f32.gmra.mxu0 %v3683
        %v3685 = vpop.f32.mrf.mxu0
        %v3686 = vadd.f32 %v3498, %v3685
        %v3687 = vpop.f32.mrf.mxu0
        %3688 = vmatprep.mubr.f32.mxu0 0.0
        %v3689 = vand.u32 %v2955, 4294901760
        %v3690 = vsub.f32 %v2955, %v3689
        %v3691 = vand.u32 %v3690, 4294901760
        %3692 = vmatmul.mubr.f32.gmra.mxu0 %v3691
        %v3693 = vpop.f32.mrf.mxu0
        %v3694 = vadd.f32 %v3505, %v3693
        %v3695 = vpop.f32.mrf.mxu0
        %3696 = vmatprep.mubr.f32.mxu0 0.0
        %v3697 = vand.u32 %v2958, 4294901760
        %v3698 = vsub.f32 %v2958, %v3697
        %v3699 = vand.u32 %v3698, 4294901760
        %3700 = vmatmul.mubr.f32.gmra.mxu0 %v3699
        %v3701 = vpop.f32.mrf.mxu0
        %v3702 = vadd.f32 %v3512, %v3701
        %v3703 = vpop.f32.mrf.mxu0
        %3704 = vmatprep.mubr.f32.mxu0 0.0
        %v3705 = vand.u32 %v2961, 4294901760
        %v3706 = vsub.f32 %v2961, %v3705
        %v3707 = vand.u32 %v3706, 4294901760
        %3708 = vmatmul.mubr.f32.gmra.mxu0 %v3707
        %v3709 = vpop.f32.mrf.mxu0
        %v3710 = vadd.f32 %v3519, %v3709
        %v3711 = vpop.f32.mrf.mxu0
        %3712 = vmatprep.mubr.f32.mxu0 0.0
        %v3713 = vand.u32 %v2964, 4294901760
        %v3714 = vsub.f32 %v2964, %v3713
        %v3715 = vand.u32 %v3714, 4294901760
        %3716 = vmatmul.mubr.f32.gmra.mxu0 %v3715
        %v3717 = vpop.f32.mrf.mxu0
        %v3718 = vadd.f32 %v3526, %v3717
        %v3719 = vpop.f32.mrf.mxu0
        %3720 = vmatprep.mubr.f32.mxu0 0.0
        %v3721 = vand.u32 %v2967, 4294901760
        %v3722 = vsub.f32 %v2967, %v3721
        %v3723 = vand.u32 %v3722, 4294901760
        %3724 = vmatmul.mubr.f32.gmra.mxu0 %v3723
        %v3725 = vpop.f32.mrf.mxu0
        %v3726 = vadd.f32 %v3533, %v3725
        %v3727 = vpop.f32.mrf.mxu0
        %3728 = vmatprep.mubr.f32.mxu0 0.0
        %v3729 = vand.u32 %v2970, 4294901760
        %v3730 = vsub.f32 %v2970, %v3729
        %v3731 = vand.u32 %v3730, 4294901760
        %3732 = vmatmul.mubr.f32.gmra.mxu0 %v3731
        %v3733 = vpop.f32.mrf.mxu0
        %v3734 = vadd.f32 %v3540, %v3733
        %v3735 = vpop.f32.mrf.mxu0
        %3736 = vdwg.mxu0
        %3737 = vmatprep.subr.mxu0 0.0
        %3738 = vmatpush1.msra.mxu0 0.0
        %3739 = vmatprep.subr.mxu0 0.0
        %3740 = vmatpush1.msra.mxu0 0.0
        %3741 = vmatprep.subr.mxu0 0.0
        %3742 = vmatpush1.msra.mxu0 0.0
        %3743 = vmatprep.subr.mxu0 0.0
        %3744 = vmatpush1.msra.mxu0 0.0
        %3745 = vmatprep.subr.mxu0 0.0
        %3746 = vmatpush1.msra.mxu0 0.0
        %3747 = vmatprep.subr.mxu0 0.0
        %3748 = vmatpush1.msra.mxu0 0.0
        %3749 = vmatprep.subr.mxu0 0.0
        %3750 = vmatpush1.msra.mxu0 0.0
        %3751 = vmatprep.subr.mxu0 0.0
        %3752 = vmatpush1.msra.mxu0 0.0
        %3753 = vmatprep.subr.mxu0 0.0
        %3754 = vmatpush1.msra.mxu0 0.0
        %3755 = vmatprep.subr.mxu0 0.0
        %3756 = vmatpush1.msra.mxu0 0.0
        %3757 = vmatprep.subr.mxu0 0.0
        %3758 = vmatpush1.msra.mxu0 0.0
        %3759 = vmatprep.subr.mxu0 0.0
        %3760 = vmatpush1.msra.mxu0 0.0
        %3761 = vmatprep.subr.mxu0 0.0
        %3762 = vmatpush1.msra.mxu0 0.0
        %3763 = vmatprep.subr.mxu0 0.0
        %3764 = vmatpush1.msra.mxu0 0.0
        %3765 = vmatprep.subr.mxu0 0.0
        %3766 = vmatpush1.msra.mxu0 0.0
        %3767 = vmatprep.subr.mxu0 0.0
        %v3768 = vand.u32 %v414, 4294901760
        %v3769 = vsub.f32 %v414, %v3768
        %v3770 = vand.u32 %v3769, 4294901760
        %3771 = vmatpush1.msra.mxu0 %v3770
        %3772 = vmatprep.subr.mxu0 0.0
        %3773 = vmatpush2.msra.mxu0 0.0
        %3774 = vmatprep.subr.mxu0 0.0
        %3775 = vmatpush2.msra.mxu0 0.0
        %3776 = vmatprep.subr.mxu0 0.0
        %3777 = vmatpush2.msra.mxu0 0.0
        %3778 = vmatprep.subr.mxu0 0.0
        %3779 = vmatpush2.msra.mxu0 0.0
        %3780 = vmatprep.subr.mxu0 0.0
        %3781 = vmatpush2.msra.mxu0 0.0
        %3782 = vmatprep.subr.mxu0 0.0
        %3783 = vmatpush2.msra.mxu0 0.0
        %3784 = vmatprep.subr.mxu0 0.0
        %3785 = vmatpush2.msra.mxu0 0.0
        %3786 = vmatprep.subr.mxu0 0.0
        %3787 = vmatpush2.msra.mxu0 0.0
        %3788 = vmatprep.subr.mxu0 0.0
        %3789 = vmatpush2.msra.mxu0 0.0
        %3790 = vmatprep.subr.mxu0 0.0
        %3791 = vmatpush2.msra.mxu0 0.0
        %3792 = vmatprep.subr.mxu0 0.0
        %3793 = vmatpush2.msra.mxu0 0.0
        %3794 = vmatprep.subr.mxu0 0.0
        %3795 = vmatpush2.msra.mxu0 0.0
        %3796 = vmatprep.subr.mxu0 0.0
        %3797 = vmatpush2.msra.mxu0 0.0
        %3798 = vmatprep.subr.mxu0 0.0
        %3799 = vmatpush2.msra.mxu0 0.0
        %3800 = vmatprep.subr.mxu0 0.0
        %3801 = vmatpush2.msra.mxu0 0.0
        %3802 = vmatprep.subr.mxu0 0.0
        %3803 = vmatpush2.msra.mxu0 0.0
        %3804 = vmatprep.mubr.f32.mxu0 0.0
        %v3805 = vand.u32 %v2925, 4294901760
        %3806 = vmatmul.mubr.f32.gmra.mxu0 %v3805
        %v3807 = vpop.f32.mrf.mxu0
        %v3808 = vadd.f32 %v3614, %v3807
        %v3809 = vpop.f32.mrf.mxu0
        %3810 = vmatprep.mubr.f32.mxu0 0.0
        %v3811 = vand.u32 %v2928, 4294901760
        %3812 = vmatmul.mubr.f32.gmra.mxu0 %v3811
        %v3813 = vpop.f32.mrf.mxu0
        %v3814 = vadd.f32 %v3622, %v3813
        %v3815 = vpop.f32.mrf.mxu0
        %3816 = vmatprep.mubr.f32.mxu0 0.0
        %v3817 = vand.u32 %v2931, 4294901760
        %3818 = vmatmul.mubr.f32.gmra.mxu0 %v3817
        %v3819 = vpop.f32.mrf.mxu0
        %v3820 = vadd.f32 %v3630, %v3819
        %v3821 = vpop.f32.mrf.mxu0
        %3822 = vmatprep.mubr.f32.mxu0 0.0
        %v3823 = vand.u32 %v2934, 4294901760
        %3824 = vmatmul.mubr.f32.gmra.mxu0 %v3823
        %v3825 = vpop.f32.mrf.mxu0
        %v3826 = vadd.f32 %v3638, %v3825
        %v3827 = vpop.f32.mrf.mxu0
        %3828 = vmatprep.mubr.f32.mxu0 0.0
        %v3829 = vand.u32 %v2937, 4294901760
        %3830 = vmatmul.mubr.f32.gmra.mxu0 %v3829
        %v3831 = vpop.f32.mrf.mxu0
        %v3832 = vadd.f32 %v3646, %v3831
        %v3833 = vpop.f32.mrf.mxu0
        %3834 = vmatprep.mubr.f32.mxu0 0.0
        %v3835 = vand.u32 %v2940, 4294901760
        %3836 = vmatmul.mubr.f32.gmra.mxu0 %v3835
        %v3837 = vpop.f32.mrf.mxu0
        %v3838 = vadd.f32 %v3654, %v3837
        %v3839 = vpop.f32.mrf.mxu0
        %3840 = vmatprep.mubr.f32.mxu0 0.0
        %v3841 = vand.u32 %v2943, 4294901760
        %3842 = vmatmul.mubr.f32.gmra.mxu0 %v3841
        %v3843 = vpop.f32.mrf.mxu0
        %v3844 = vadd.f32 %v3662, %v3843
        %v3845 = vpop.f32.mrf.mxu0
        %3846 = vmatprep.mubr.f32.mxu0 0.0
        %v3847 = vand.u32 %v2946, 4294901760
        %3848 = vmatmul.mubr.f32.gmra.mxu0 %v3847
        %v3849 = vpop.f32.mrf.mxu0
        %v3850 = vadd.f32 %v3670, %v3849
        %v3851 = vpop.f32.mrf.mxu0
        %3852 = vmatprep.mubr.f32.mxu0 0.0
        %v3853 = vand.u32 %v2949, 4294901760
        %3854 = vmatmul.mubr.f32.gmra.mxu0 %v3853
        %v3855 = vpop.f32.mrf.mxu0
        %v3856 = vadd.f32 %v3678, %v3855
        %v3857 = vpop.f32.mrf.mxu0
        %3858 = vmatprep.mubr.f32.mxu0 0.0
        %v3859 = vand.u32 %v2952, 4294901760
        %3860 = vmatmul.mubr.f32.gmra.mxu0 %v3859
        %v3861 = vpop.f32.mrf.mxu0
        %v3862 = vadd.f32 %v3686, %v3861
        %v3863 = vpop.f32.mrf.mxu0
        %3864 = vmatprep.mubr.f32.mxu0 0.0
        %v3865 = vand.u32 %v2955, 4294901760
        %3866 = vmatmul.mubr.f32.gmra.mxu0 %v3865
        %v3867 = vpop.f32.mrf.mxu0
        %v3868 = vadd.f32 %v3694, %v3867
        %v3869 = vpop.f32.mrf.mxu0
        %3870 = vmatprep.mubr.f32.mxu0 0.0
        %v3871 = vand.u32 %v2958, 4294901760
        %3872 = vmatmul.mubr.f32.gmra.mxu0 %v3871
        %v3873 = vpop.f32.mrf.mxu0
        %v3874 = vadd.f32 %v3702, %v3873
        %v3875 = vpop.f32.mrf.mxu0
        %3876 = vmatprep.mubr.f32.mxu0 0.0
        %v3877 = vand.u32 %v2961, 4294901760
        %3878 = vmatmul.mubr.f32.gmra.mxu0 %v3877
        %v3879 = vpop.f32.mrf.mxu0
        %v3880 = vadd.f32 %v3710, %v3879
        %v3881 = vpop.f32.mrf.mxu0
        %3882 = vmatprep.mubr.f32.mxu0 0.0
        %v3883 = vand.u32 %v2964, 4294901760
        %3884 = vmatmul.mubr.f32.gmra.mxu0 %v3883
        %v3885 = vpop.f32.mrf.mxu0
        %v3886 = vadd.f32 %v3718, %v3885
        %v3887 = vpop.f32.mrf.mxu0
        %3888 = vmatprep.mubr.f32.mxu0 0.0
        %v3889 = vand.u32 %v2967, 4294901760
        %3890 = vmatmul.mubr.f32.gmra.mxu0 %v3889
        %v3891 = vpop.f32.mrf.mxu0
        %v3892 = vadd.f32 %v3726, %v3891
        %v3893 = vpop.f32.mrf.mxu0
        %3894 = vmatprep.mubr.f32.mxu0 0.0
        %v3895 = vand.u32 %v2970, 4294901760
        %3896 = vmatmul.mubr.f32.gmra.mxu0 %v3895
        %v3897 = vpop.f32.mrf.mxu0
        %v3898 = vadd.f32 %v3734, %v3897
        %v3899 = vpop.f32.mrf.mxu0
        %3900 = vdwg.mxu0
        %3901 = vmatprep.subr.mxu0 0.0
        %3902 = vmatpush1.msra.mxu0 0.0
        %3903 = vmatprep.subr.mxu0 0.0
        %3904 = vmatpush1.msra.mxu0 0.0
        %3905 = vmatprep.subr.mxu0 0.0
        %3906 = vmatpush1.msra.mxu0 0.0
        %3907 = vmatprep.subr.mxu0 0.0
        %3908 = vmatpush1.msra.mxu0 0.0
        %3909 = vmatprep.subr.mxu0 0.0
        %3910 = vmatpush1.msra.mxu0 0.0
        %3911 = vmatprep.subr.mxu0 0.0
        %3912 = vmatpush1.msra.mxu0 0.0
        %3913 = vmatprep.subr.mxu0 0.0
        %3914 = vmatpush1.msra.mxu0 0.0
        %3915 = vmatprep.subr.mxu0 0.0
        %3916 = vmatpush1.msra.mxu0 0.0
        %3917 = vmatprep.subr.mxu0 0.0
        %3918 = vmatpush1.msra.mxu0 0.0
        %3919 = vmatprep.subr.mxu0 0.0
        %3920 = vmatpush1.msra.mxu0 0.0
        %3921 = vmatprep.subr.mxu0 0.0
        %3922 = vmatpush1.msra.mxu0 0.0
        %3923 = vmatprep.subr.mxu0 0.0
        %3924 = vmatpush1.msra.mxu0 0.0
        %3925 = vmatprep.subr.mxu0 0.0
        %3926 = vmatpush1.msra.mxu0 0.0
        %3927 = vmatprep.subr.mxu0 0.0
        %3928 = vmatpush1.msra.mxu0 0.0
        %3929 = vmatprep.subr.mxu0 0.0
        %3930 = vmatpush1.msra.mxu0 0.0
        %3931 = vmatprep.subr.mxu0 0.0
        %v3932 = vand.u32 %v414, 4294901760
        %3933 = vmatpush1.msra.mxu0 %v3932
        %3934 = vmatprep.subr.mxu0 0.0
        %3935 = vmatpush2.msra.mxu0 0.0
        %3936 = vmatprep.subr.mxu0 0.0
        %3937 = vmatpush2.msra.mxu0 0.0
        %3938 = vmatprep.subr.mxu0 0.0
        %3939 = vmatpush2.msra.mxu0 0.0
        %3940 = vmatprep.subr.mxu0 0.0
        %3941 = vmatpush2.msra.mxu0 0.0
        %3942 = vmatprep.subr.mxu0 0.0
        %3943 = vmatpush2.msra.mxu0 0.0
        %3944 = vmatprep.subr.mxu0 0.0
        %3945 = vmatpush2.msra.mxu0 0.0
        %3946 = vmatprep.subr.mxu0 0.0
        %3947 = vmatpush2.msra.mxu0 0.0
        %3948 = vmatprep.subr.mxu0 0.0
        %3949 = vmatpush2.msra.mxu0 0.0
        %3950 = vmatprep.subr.mxu0 0.0
        %3951 = vmatpush2.msra.mxu0 0.0
        %3952 = vmatprep.subr.mxu0 0.0
        %3953 = vmatpush2.msra.mxu0 0.0
        %3954 = vmatprep.subr.mxu0 0.0
        %3955 = vmatpush2.msra.mxu0 0.0
        %3956 = vmatprep.subr.mxu0 0.0
        %3957 = vmatpush2.msra.mxu0 0.0
        %3958 = vmatprep.subr.mxu0 0.0
        %3959 = vmatpush2.msra.mxu0 0.0
        %3960 = vmatprep.subr.mxu0 0.0
        %3961 = vmatpush2.msra.mxu0 0.0
        %3962 = vmatprep.subr.mxu0 0.0
        %3963 = vmatpush2.msra.mxu0 0.0
        %3964 = vmatprep.subr.mxu0 0.0
        %3965 = vmatpush2.msra.mxu0 0.0
        %3966 = vmatprep.mubr.f32.mxu0 0.0
        %v3967 = vand.u32 %v2925, 4294901760
        %3968 = vmatmul.mubr.f32.gmra.mxu0 %v3967
        %v3969 = vpop.f32.mrf.mxu0
        %v3970 = vadd.f32 %v3808, %v3969
        %v3971 = vpop.f32.mrf.mxu0
        %3972 = vmatprep.mubr.f32.mxu0 0.0
        %v3973 = vand.u32 %v2928, 4294901760
        %3974 = vmatmul.mubr.f32.gmra.mxu0 %v3973
        %v3975 = vpop.f32.mrf.mxu0
        %v3976 = vadd.f32 %v3814, %v3975
        %v3977 = vpop.f32.mrf.mxu0
        %3978 = vmatprep.mubr.f32.mxu0 0.0
        %v3979 = vand.u32 %v2931, 4294901760
        %3980 = vmatmul.mubr.f32.gmra.mxu0 %v3979
        %v3981 = vpop.f32.mrf.mxu0
        %v3982 = vadd.f32 %v3820, %v3981
        %v3983 = vpop.f32.mrf.mxu0
        %3984 = vmatprep.mubr.f32.mxu0 0.0
        %v3985 = vand.u32 %v2934, 4294901760
        %3986 = vmatmul.mubr.f32.gmra.mxu0 %v3985
        %v3987 = vpop.f32.mrf.mxu0
        %v3988 = vadd.f32 %v3826, %v3987
        %v3989 = vpop.f32.mrf.mxu0
        %3990 = vmatprep.mubr.f32.mxu0 0.0
        %v3991 = vand.u32 %v2937, 4294901760
        %3992 = vmatmul.mubr.f32.gmra.mxu0 %v3991
        %v3993 = vpop.f32.mrf.mxu0
        %v3994 = vadd.f32 %v3832, %v3993
        %v3995 = vpop.f32.mrf.mxu0
        %3996 = vmatprep.mubr.f32.mxu0 0.0
        %v3997 = vand.u32 %v2940, 4294901760
        %3998 = vmatmul.mubr.f32.gmra.mxu0 %v3997
        %v3999 = vpop.f32.mrf.mxu0
        %v4000 = vadd.f32 %v3838, %v3999
        %v4001 = vpop.f32.mrf.mxu0
        %4002 = vmatprep.mubr.f32.mxu0 0.0
        %v4003 = vand.u32 %v2943, 4294901760
        %4004 = vmatmul.mubr.f32.gmra.mxu0 %v4003
        %v4005 = vpop.f32.mrf.mxu0
        %v4006 = vadd.f32 %v3844, %v4005
        %v4007 = vpop.f32.mrf.mxu0
        %4008 = vmatprep.mubr.f32.mxu0 0.0
        %v4009 = vand.u32 %v2946, 4294901760
        %4010 = vmatmul.mubr.f32.gmra.mxu0 %v4009
        %v4011 = vpop.f32.mrf.mxu0
        %v4012 = vadd.f32 %v3850, %v4011
        %v4013 = vpop.f32.mrf.mxu0
        %4014 = vmatprep.mubr.f32.mxu0 0.0
        %v4015 = vand.u32 %v2949, 4294901760
        %4016 = vmatmul.mubr.f32.gmra.mxu0 %v4015
        %v4017 = vpop.f32.mrf.mxu0
        %v4018 = vadd.f32 %v3856, %v4017
        %v4019 = vpop.f32.mrf.mxu0
        %4020 = vmatprep.mubr.f32.mxu0 0.0
        %v4021 = vand.u32 %v2952, 4294901760
        %4022 = vmatmul.mubr.f32.gmra.mxu0 %v4021
        %v4023 = vpop.f32.mrf.mxu0
        %v4024 = vadd.f32 %v3862, %v4023
        %v4025 = vpop.f32.mrf.mxu0
        %4026 = vmatprep.mubr.f32.mxu0 0.0
        %v4027 = vand.u32 %v2955, 4294901760
        %4028 = vmatmul.mubr.f32.gmra.mxu0 %v4027
        %v4029 = vpop.f32.mrf.mxu0
        %v4030 = vadd.f32 %v3868, %v4029
        %v4031 = vpop.f32.mrf.mxu0
        %4032 = vmatprep.mubr.f32.mxu0 0.0
        %v4033 = vand.u32 %v2958, 4294901760
        %4034 = vmatmul.mubr.f32.gmra.mxu0 %v4033
        %v4035 = vpop.f32.mrf.mxu0
        %v4036 = vadd.f32 %v3874, %v4035
        %v4037 = vpop.f32.mrf.mxu0
        %4038 = vmatprep.mubr.f32.mxu0 0.0
        %v4039 = vand.u32 %v2961, 4294901760
        %4040 = vmatmul.mubr.f32.gmra.mxu0 %v4039
        %v4041 = vpop.f32.mrf.mxu0
        %v4042 = vadd.f32 %v3880, %v4041
        %v4043 = vpop.f32.mrf.mxu0
        %4044 = vmatprep.mubr.f32.mxu0 0.0
        %v4045 = vand.u32 %v2964, 4294901760
        %4046 = vmatmul.mubr.f32.gmra.mxu0 %v4045
        %v4047 = vpop.f32.mrf.mxu0
        %v4048 = vadd.f32 %v3886, %v4047
        %v4049 = vpop.f32.mrf.mxu0
        %4050 = vmatprep.mubr.f32.mxu0 0.0
        %v4051 = vand.u32 %v2967, 4294901760
        %4052 = vmatmul.mubr.f32.gmra.mxu0 %v4051
        %v4053 = vpop.f32.mrf.mxu0
        %v4054 = vadd.f32 %v3892, %v4053
        %v4055 = vpop.f32.mrf.mxu0
        %4056 = vmatprep.mubr.f32.mxu0 0.0
        %v4057 = vand.u32 %v2970, 4294901760
        %4058 = vmatmul.mubr.f32.gmra.mxu0 %v4057
        %v4059 = vpop.f32.mrf.mxu0
        %v4060 = vadd.f32 %v3898, %v4059
        %v4061 = vpop.f32.mrf.mxu0
        %4062 = vdwg.mxu0
        %v4064 = vsel %vm2923, %v2907, 0
        %v4067 = vsel %vm2923, %v2908, 0
        %v4070 = vsel %vm2923, %v2909, 0
        %v4073 = vsel %vm2923, %v2910, 0
        %v4076 = vsel %vm2923, %v2911, 0
        %v4079 = vsel %vm2923, %v2912, 0
        %v4082 = vsel %vm2923, %v2913, 0
        %v4085 = vsel %vm2923, %v2914, 0
        %v4088 = vsel %vm2923, %v2915, 0
        %v4091 = vsel %vm2923, %v2916, 0
        %v4094 = vsel %vm2923, %v2917, 0
        %v4097 = vsel %vm2923, %v2918, 0
        %v4100 = vsel %vm2923, %v2919, 0
        %v4103 = vsel %vm2923, %v2920, 0
        %v4106 = vsel %vm2923, %v2921, 0
        %v4109 = vsel %vm2923, %v2922, 0
        %4111 = vmatprep.subr.mxu0 0.0
        %4112 = vmatpush1.msra.mxu0 0.0
        %4113 = vmatprep.subr.mxu0 0.0
        %4114 = vmatpush1.msra.mxu0 0.0
        %4115 = vmatprep.subr.mxu0 0.0
        %4116 = vmatpush1.msra.mxu0 0.0
        %4117 = vmatprep.subr.mxu0 0.0
        %4118 = vmatpush1.msra.mxu0 0.0
        %4119 = vmatprep.subr.mxu0 0.0
        %4120 = vmatpush1.msra.mxu0 0.0
        %4121 = vmatprep.subr.mxu0 0.0
        %4122 = vmatpush1.msra.mxu0 0.0
        %4123 = vmatprep.subr.mxu0 0.0
        %4124 = vmatpush1.msra.mxu0 0.0
        %4125 = vmatprep.subr.mxu0 0.0
        %4126 = vmatpush1.msra.mxu0 0.0
        %4127 = vmatprep.subr.mxu0 0.0
        %4128 = vmatpush1.msra.mxu0 0.0
        %4129 = vmatprep.subr.mxu0 0.0
        %4130 = vmatpush1.msra.mxu0 0.0
        %4131 = vmatprep.subr.mxu0 0.0
        %4132 = vmatpush1.msra.mxu0 0.0
        %4133 = vmatprep.subr.mxu0 0.0
        %4134 = vmatpush1.msra.mxu0 0.0
        %4135 = vmatprep.subr.mxu0 0.0
        %4136 = vmatpush1.msra.mxu0 0.0
        %4137 = vmatprep.subr.mxu0 0.0
        %4138 = vmatpush1.msra.mxu0 0.0
        %4139 = vmatprep.subr.mxu0 0.0
        %4140 = vmatpush1.msra.mxu0 0.0
        %4141 = vmatprep.subr.mxu0 0.0
        %v4142 = vand.u32 %v415, 4294901760
        %4143 = vmatpush1.msra.mxu0 %v4142
        %4144 = vmatprep.subr.mxu0 0.0
        %4145 = vmatpush2.msra.mxu0 0.0
        %4146 = vmatprep.subr.mxu0 0.0
        %4147 = vmatpush2.msra.mxu0 0.0
        %4148 = vmatprep.subr.mxu0 0.0
        %4149 = vmatpush2.msra.mxu0 0.0
        %4150 = vmatprep.subr.mxu0 0.0
        %4151 = vmatpush2.msra.mxu0 0.0
        %4152 = vmatprep.subr.mxu0 0.0
        %4153 = vmatpush2.msra.mxu0 0.0
        %4154 = vmatprep.subr.mxu0 0.0
        %4155 = vmatpush2.msra.mxu0 0.0
        %4156 = vmatprep.subr.mxu0 0.0
        %4157 = vmatpush2.msra.mxu0 0.0
        %4158 = vmatprep.subr.mxu0 0.0
        %4159 = vmatpush2.msra.mxu0 0.0
        %4160 = vmatprep.subr.mxu0 0.0
        %4161 = vmatpush2.msra.mxu0 0.0
        %4162 = vmatprep.subr.mxu0 0.0
        %4163 = vmatpush2.msra.mxu0 0.0
        %4164 = vmatprep.subr.mxu0 0.0
        %4165 = vmatpush2.msra.mxu0 0.0
        %4166 = vmatprep.subr.mxu0 0.0
        %4167 = vmatpush2.msra.mxu0 0.0
        %4168 = vmatprep.subr.mxu0 0.0
        %4169 = vmatpush2.msra.mxu0 0.0
        %4170 = vmatprep.subr.mxu0 0.0
        %4171 = vmatpush2.msra.mxu0 0.0
        %4172 = vmatprep.subr.mxu0 0.0
        %4173 = vmatpush2.msra.mxu0 0.0
        %4174 = vmatprep.subr.mxu0 0.0
        %4175 = vmatpush2.msra.mxu0 0.0
        %4176 = vmatprep.mubr.f32.mxu0 0.0
        %v4177 = vand.u32 %v4064, 4294901760
        %v4178 = vsub.f32 %v4064, %v4177
        %v4179 = vand.u32 %v4178, 4294901760
        %v4180 = vsub.f32 %v4178, %v4179
        %v4181 = vand.u32 %v4180, 4294901760
        %4182 = vmatmul.mubr.f32.gmra.mxu0 %v4181
        %v4183 = vpop.f32.mrf.mxu0
        %v4184 = vadd.f32 0.0, %v4183
        %v4185 = vpop.f32.mrf.mxu0
        %4186 = vmatprep.mubr.f32.mxu0 0.0
        %v4187 = vand.u32 %v4067, 4294901760
        %v4188 = vsub.f32 %v4067, %v4187
        %v4189 = vand.u32 %v4188, 4294901760
        %v4190 = vsub.f32 %v4188, %v4189
        %v4191 = vand.u32 %v4190, 4294901760
        %4192 = vmatmul.mubr.f32.gmra.mxu0 %v4191
        %v4193 = vpop.f32.mrf.mxu0
        %v4194 = vadd.f32 0.0, %v4193
        %v4195 = vpop.f32.mrf.mxu0
        %4196 = vmatprep.mubr.f32.mxu0 0.0
        %v4197 = vand.u32 %v4070, 4294901760
        %v4198 = vsub.f32 %v4070, %v4197
        %v4199 = vand.u32 %v4198, 4294901760
        %v4200 = vsub.f32 %v4198, %v4199
        %v4201 = vand.u32 %v4200, 4294901760
        %4202 = vmatmul.mubr.f32.gmra.mxu0 %v4201
        %v4203 = vpop.f32.mrf.mxu0
        %v4204 = vadd.f32 0.0, %v4203
        %v4205 = vpop.f32.mrf.mxu0
        %4206 = vmatprep.mubr.f32.mxu0 0.0
        %v4207 = vand.u32 %v4073, 4294901760
        %v4208 = vsub.f32 %v4073, %v4207
        %v4209 = vand.u32 %v4208, 4294901760
        %v4210 = vsub.f32 %v4208, %v4209
        %v4211 = vand.u32 %v4210, 4294901760
        %4212 = vmatmul.mubr.f32.gmra.mxu0 %v4211
        %v4213 = vpop.f32.mrf.mxu0
        %v4214 = vadd.f32 0.0, %v4213
        %v4215 = vpop.f32.mrf.mxu0
        %4216 = vmatprep.mubr.f32.mxu0 0.0
        %v4217 = vand.u32 %v4076, 4294901760
        %v4218 = vsub.f32 %v4076, %v4217
        %v4219 = vand.u32 %v4218, 4294901760
        %v4220 = vsub.f32 %v4218, %v4219
        %v4221 = vand.u32 %v4220, 4294901760
        %4222 = vmatmul.mubr.f32.gmra.mxu0 %v4221
        %v4223 = vpop.f32.mrf.mxu0
        %v4224 = vadd.f32 0.0, %v4223
        %v4225 = vpop.f32.mrf.mxu0
        %4226 = vmatprep.mubr.f32.mxu0 0.0
        %v4227 = vand.u32 %v4079, 4294901760
        %v4228 = vsub.f32 %v4079, %v4227
        %v4229 = vand.u32 %v4228, 4294901760
        %v4230 = vsub.f32 %v4228, %v4229
        %v4231 = vand.u32 %v4230, 4294901760
        %4232 = vmatmul.mubr.f32.gmra.mxu0 %v4231
        %v4233 = vpop.f32.mrf.mxu0
        %v4234 = vadd.f32 0.0, %v4233
        %v4235 = vpop.f32.mrf.mxu0
        %4236 = vmatprep.mubr.f32.mxu0 0.0
        %v4237 = vand.u32 %v4082, 4294901760
        %v4238 = vsub.f32 %v4082, %v4237
        %v4239 = vand.u32 %v4238, 4294901760
        %v4240 = vsub.f32 %v4238, %v4239
        %v4241 = vand.u32 %v4240, 4294901760
        %4242 = vmatmul.mubr.f32.gmra.mxu0 %v4241
        %v4243 = vpop.f32.mrf.mxu0
        %v4244 = vadd.f32 0.0, %v4243
        %v4245 = vpop.f32.mrf.mxu0
        %4246 = vmatprep.mubr.f32.mxu0 0.0
        %v4247 = vand.u32 %v4085, 4294901760
        %v4248 = vsub.f32 %v4085, %v4247
        %v4249 = vand.u32 %v4248, 4294901760
        %v4250 = vsub.f32 %v4248, %v4249
        %v4251 = vand.u32 %v4250, 4294901760
        %4252 = vmatmul.mubr.f32.gmra.mxu0 %v4251
        %v4253 = vpop.f32.mrf.mxu0
        %v4254 = vadd.f32 0.0, %v4253
        %v4255 = vpop.f32.mrf.mxu0
        %4256 = vmatprep.mubr.f32.mxu0 0.0
        %v4257 = vand.u32 %v4088, 4294901760
        %v4258 = vsub.f32 %v4088, %v4257
        %v4259 = vand.u32 %v4258, 4294901760
        %v4260 = vsub.f32 %v4258, %v4259
        %v4261 = vand.u32 %v4260, 4294901760
        %4262 = vmatmul.mubr.f32.gmra.mxu0 %v4261
        %v4263 = vpop.f32.mrf.mxu0
        %v4264 = vadd.f32 0.0, %v4263
        %v4265 = vpop.f32.mrf.mxu0
        %4266 = vmatprep.mubr.f32.mxu0 0.0
        %v4267 = vand.u32 %v4091, 4294901760
        %v4268 = vsub.f32 %v4091, %v4267
        %v4269 = vand.u32 %v4268, 4294901760
        %v4270 = vsub.f32 %v4268, %v4269
        %v4271 = vand.u32 %v4270, 4294901760
        %4272 = vmatmul.mubr.f32.gmra.mxu0 %v4271
        %v4273 = vpop.f32.mrf.mxu0
        %v4274 = vadd.f32 0.0, %v4273
        %v4275 = vpop.f32.mrf.mxu0
        %4276 = vmatprep.mubr.f32.mxu0 0.0
        %v4277 = vand.u32 %v4094, 4294901760
        %v4278 = vsub.f32 %v4094, %v4277
        %v4279 = vand.u32 %v4278, 4294901760
        %v4280 = vsub.f32 %v4278, %v4279
        %v4281 = vand.u32 %v4280, 4294901760
        %4282 = vmatmul.mubr.f32.gmra.mxu0 %v4281
        %v4283 = vpop.f32.mrf.mxu0
        %v4284 = vadd.f32 0.0, %v4283
        %v4285 = vpop.f32.mrf.mxu0
        %4286 = vmatprep.mubr.f32.mxu0 0.0
        %v4287 = vand.u32 %v4097, 4294901760
        %v4288 = vsub.f32 %v4097, %v4287
        %v4289 = vand.u32 %v4288, 4294901760
        %v4290 = vsub.f32 %v4288, %v4289
        %v4291 = vand.u32 %v4290, 4294901760
        %4292 = vmatmul.mubr.f32.gmra.mxu0 %v4291
        %v4293 = vpop.f32.mrf.mxu0
        %v4294 = vadd.f32 0.0, %v4293
        %v4295 = vpop.f32.mrf.mxu0
        %4296 = vmatprep.mubr.f32.mxu0 0.0
        %v4297 = vand.u32 %v4100, 4294901760
        %v4298 = vsub.f32 %v4100, %v4297
        %v4299 = vand.u32 %v4298, 4294901760
        %v4300 = vsub.f32 %v4298, %v4299
        %v4301 = vand.u32 %v4300, 4294901760
        %4302 = vmatmul.mubr.f32.gmra.mxu0 %v4301
        %v4303 = vpop.f32.mrf.mxu0
        %v4304 = vadd.f32 0.0, %v4303
        %v4305 = vpop.f32.mrf.mxu0
        %4306 = vmatprep.mubr.f32.mxu0 0.0
        %v4307 = vand.u32 %v4103, 4294901760
        %v4308 = vsub.f32 %v4103, %v4307
        %v4309 = vand.u32 %v4308, 4294901760
        %v4310 = vsub.f32 %v4308, %v4309
        %v4311 = vand.u32 %v4310, 4294901760
        %4312 = vmatmul.mubr.f32.gmra.mxu0 %v4311
        %v4313 = vpop.f32.mrf.mxu0
        %v4314 = vadd.f32 0.0, %v4313
        %v4315 = vpop.f32.mrf.mxu0
        %4316 = vmatprep.mubr.f32.mxu0 0.0
        %v4317 = vand.u32 %v4106, 4294901760
        %v4318 = vsub.f32 %v4106, %v4317
        %v4319 = vand.u32 %v4318, 4294901760
        %v4320 = vsub.f32 %v4318, %v4319
        %v4321 = vand.u32 %v4320, 4294901760
        %4322 = vmatmul.mubr.f32.gmra.mxu0 %v4321
        %v4323 = vpop.f32.mrf.mxu0
        %v4324 = vadd.f32 0.0, %v4323
        %v4325 = vpop.f32.mrf.mxu0
        %4326 = vmatprep.mubr.f32.mxu0 0.0
        %v4327 = vand.u32 %v4109, 4294901760
        %v4328 = vsub.f32 %v4109, %v4327
        %v4329 = vand.u32 %v4328, 4294901760
        %v4330 = vsub.f32 %v4328, %v4329
        %v4331 = vand.u32 %v4330, 4294901760
        %4332 = vmatmul.mubr.f32.gmra.mxu0 %v4331
        %v4333 = vpop.f32.mrf.mxu0
        %v4334 = vadd.f32 0.0, %v4333
        %v4335 = vpop.f32.mrf.mxu0
        %4336 = vdwg.mxu0
        %4337 = vmatprep.subr.mxu0 0.0
        %4338 = vmatpush1.msra.mxu0 0.0
        %4339 = vmatprep.subr.mxu0 0.0
        %4340 = vmatpush1.msra.mxu0 0.0
        %4341 = vmatprep.subr.mxu0 0.0
        %4342 = vmatpush1.msra.mxu0 0.0
        %4343 = vmatprep.subr.mxu0 0.0
        %4344 = vmatpush1.msra.mxu0 0.0
        %4345 = vmatprep.subr.mxu0 0.0
        %4346 = vmatpush1.msra.mxu0 0.0
        %4347 = vmatprep.subr.mxu0 0.0
        %4348 = vmatpush1.msra.mxu0 0.0
        %4349 = vmatprep.subr.mxu0 0.0
        %4350 = vmatpush1.msra.mxu0 0.0
        %4351 = vmatprep.subr.mxu0 0.0
        %4352 = vmatpush1.msra.mxu0 0.0
        %4353 = vmatprep.subr.mxu0 0.0
        %4354 = vmatpush1.msra.mxu0 0.0
        %4355 = vmatprep.subr.mxu0 0.0
        %4356 = vmatpush1.msra.mxu0 0.0
        %4357 = vmatprep.subr.mxu0 0.0
        %4358 = vmatpush1.msra.mxu0 0.0
        %4359 = vmatprep.subr.mxu0 0.0
        %4360 = vmatpush1.msra.mxu0 0.0
        %4361 = vmatprep.subr.mxu0 0.0
        %4362 = vmatpush1.msra.mxu0 0.0
        %4363 = vmatprep.subr.mxu0 0.0
        %4364 = vmatpush1.msra.mxu0 0.0
        %4365 = vmatprep.subr.mxu0 0.0
        %4366 = vmatpush1.msra.mxu0 0.0
        %4367 = vmatprep.subr.mxu0 0.0
        %v4368 = vand.u32 %v415, 4294901760
        %v4369 = vsub.f32 %v415, %v4368
        %v4370 = vand.u32 %v4369, 4294901760
        %v4371 = vsub.f32 %v4369, %v4370
        %v4372 = vand.u32 %v4371, 4294901760
        %4373 = vmatpush1.msra.mxu0 %v4372
        %4374 = vmatprep.subr.mxu0 0.0
        %4375 = vmatpush2.msra.mxu0 0.0
        %4376 = vmatprep.subr.mxu0 0.0
        %4377 = vmatpush2.msra.mxu0 0.0
        %4378 = vmatprep.subr.mxu0 0.0
        %4379 = vmatpush2.msra.mxu0 0.0
        %4380 = vmatprep.subr.mxu0 0.0
        %4381 = vmatpush2.msra.mxu0 0.0
        %4382 = vmatprep.subr.mxu0 0.0
        %4383 = vmatpush2.msra.mxu0 0.0
        %4384 = vmatprep.subr.mxu0 0.0
        %4385 = vmatpush2.msra.mxu0 0.0
        %4386 = vmatprep.subr.mxu0 0.0
        %4387 = vmatpush2.msra.mxu0 0.0
        %4388 = vmatprep.subr.mxu0 0.0
        %4389 = vmatpush2.msra.mxu0 0.0
        %4390 = vmatprep.subr.mxu0 0.0
        %4391 = vmatpush2.msra.mxu0 0.0
        %4392 = vmatprep.subr.mxu0 0.0
        %4393 = vmatpush2.msra.mxu0 0.0
        %4394 = vmatprep.subr.mxu0 0.0
        %4395 = vmatpush2.msra.mxu0 0.0
        %4396 = vmatprep.subr.mxu0 0.0
        %4397 = vmatpush2.msra.mxu0 0.0
        %4398 = vmatprep.subr.mxu0 0.0
        %4399 = vmatpush2.msra.mxu0 0.0
        %4400 = vmatprep.subr.mxu0 0.0
        %4401 = vmatpush2.msra.mxu0 0.0
        %4402 = vmatprep.subr.mxu0 0.0
        %4403 = vmatpush2.msra.mxu0 0.0
        %4404 = vmatprep.subr.mxu0 0.0
        %4405 = vmatpush2.msra.mxu0 0.0
        %4406 = vmatprep.mubr.f32.mxu0 0.0
        %v4407 = vand.u32 %v4064, 4294901760
        %4408 = vmatmul.mubr.f32.gmra.mxu0 %v4407
        %v4409 = vpop.f32.mrf.mxu0
        %v4410 = vadd.f32 %v4184, %v4409
        %v4411 = vpop.f32.mrf.mxu0
        %4412 = vmatprep.mubr.f32.mxu0 0.0
        %v4413 = vand.u32 %v4067, 4294901760
        %4414 = vmatmul.mubr.f32.gmra.mxu0 %v4413
        %v4415 = vpop.f32.mrf.mxu0
        %v4416 = vadd.f32 %v4194, %v4415
        %v4417 = vpop.f32.mrf.mxu0
        %4418 = vmatprep.mubr.f32.mxu0 0.0
        %v4419 = vand.u32 %v4070, 4294901760
        %4420 = vmatmul.mubr.f32.gmra.mxu0 %v4419
        %v4421 = vpop.f32.mrf.mxu0
        %v4422 = vadd.f32 %v4204, %v4421
        %v4423 = vpop.f32.mrf.mxu0
        %4424 = vmatprep.mubr.f32.mxu0 0.0
        %v4425 = vand.u32 %v4073, 4294901760
        %4426 = vmatmul.mubr.f32.gmra.mxu0 %v4425
        %v4427 = vpop.f32.mrf.mxu0
        %v4428 = vadd.f32 %v4214, %v4427
        %v4429 = vpop.f32.mrf.mxu0
        %4430 = vmatprep.mubr.f32.mxu0 0.0
        %v4431 = vand.u32 %v4076, 4294901760
        %4432 = vmatmul.mubr.f32.gmra.mxu0 %v4431
        %v4433 = vpop.f32.mrf.mxu0
        %v4434 = vadd.f32 %v4224, %v4433
        %v4435 = vpop.f32.mrf.mxu0
        %4436 = vmatprep.mubr.f32.mxu0 0.0
        %v4437 = vand.u32 %v4079, 4294901760
        %4438 = vmatmul.mubr.f32.gmra.mxu0 %v4437
        %v4439 = vpop.f32.mrf.mxu0
        %v4440 = vadd.f32 %v4234, %v4439
        %v4441 = vpop.f32.mrf.mxu0
        %4442 = vmatprep.mubr.f32.mxu0 0.0
        %v4443 = vand.u32 %v4082, 4294901760
        %4444 = vmatmul.mubr.f32.gmra.mxu0 %v4443
        %v4445 = vpop.f32.mrf.mxu0
        %v4446 = vadd.f32 %v4244, %v4445
        %v4447 = vpop.f32.mrf.mxu0
        %4448 = vmatprep.mubr.f32.mxu0 0.0
        %v4449 = vand.u32 %v4085, 4294901760
        %4450 = vmatmul.mubr.f32.gmra.mxu0 %v4449
        %v4451 = vpop.f32.mrf.mxu0
        %v4452 = vadd.f32 %v4254, %v4451
        %v4453 = vpop.f32.mrf.mxu0
        %4454 = vmatprep.mubr.f32.mxu0 0.0
        %v4455 = vand.u32 %v4088, 4294901760
        %4456 = vmatmul.mubr.f32.gmra.mxu0 %v4455
        %v4457 = vpop.f32.mrf.mxu0
        %v4458 = vadd.f32 %v4264, %v4457
        %v4459 = vpop.f32.mrf.mxu0
        %4460 = vmatprep.mubr.f32.mxu0 0.0
        %v4461 = vand.u32 %v4091, 4294901760
        %4462 = vmatmul.mubr.f32.gmra.mxu0 %v4461
        %v4463 = vpop.f32.mrf.mxu0
        %v4464 = vadd.f32 %v4274, %v4463
        %v4465 = vpop.f32.mrf.mxu0
        %4466 = vmatprep.mubr.f32.mxu0 0.0
        %v4467 = vand.u32 %v4094, 4294901760
        %4468 = vmatmul.mubr.f32.gmra.mxu0 %v4467
        %v4469 = vpop.f32.mrf.mxu0
        %v4470 = vadd.f32 %v4284, %v4469
        %v4471 = vpop.f32.mrf.mxu0
        %4472 = vmatprep.mubr.f32.mxu0 0.0
        %v4473 = vand.u32 %v4097, 4294901760
        %4474 = vmatmul.mubr.f32.gmra.mxu0 %v4473
        %v4475 = vpop.f32.mrf.mxu0
        %v4476 = vadd.f32 %v4294, %v4475
        %v4477 = vpop.f32.mrf.mxu0
        %4478 = vmatprep.mubr.f32.mxu0 0.0
        %v4479 = vand.u32 %v4100, 4294901760
        %4480 = vmatmul.mubr.f32.gmra.mxu0 %v4479
        %v4481 = vpop.f32.mrf.mxu0
        %v4482 = vadd.f32 %v4304, %v4481
        %v4483 = vpop.f32.mrf.mxu0
        %4484 = vmatprep.mubr.f32.mxu0 0.0
        %v4485 = vand.u32 %v4103, 4294901760
        %4486 = vmatmul.mubr.f32.gmra.mxu0 %v4485
        %v4487 = vpop.f32.mrf.mxu0
        %v4488 = vadd.f32 %v4314, %v4487
        %v4489 = vpop.f32.mrf.mxu0
        %4490 = vmatprep.mubr.f32.mxu0 0.0
        %v4491 = vand.u32 %v4106, 4294901760
        %4492 = vmatmul.mubr.f32.gmra.mxu0 %v4491
        %v4493 = vpop.f32.mrf.mxu0
        %v4494 = vadd.f32 %v4324, %v4493
        %v4495 = vpop.f32.mrf.mxu0
        %4496 = vmatprep.mubr.f32.mxu0 0.0
        %v4497 = vand.u32 %v4109, 4294901760
        %4498 = vmatmul.mubr.f32.gmra.mxu0 %v4497
        %v4499 = vpop.f32.mrf.mxu0
        %v4500 = vadd.f32 %v4334, %v4499
        %v4501 = vpop.f32.mrf.mxu0
        %4502 = vdwg.mxu0
        %4503 = vmatprep.subr.mxu0 0.0
        %4504 = vmatpush1.msra.mxu0 0.0
        %4505 = vmatprep.subr.mxu0 0.0
        %4506 = vmatpush1.msra.mxu0 0.0
        %4507 = vmatprep.subr.mxu0 0.0
        %4508 = vmatpush1.msra.mxu0 0.0
        %4509 = vmatprep.subr.mxu0 0.0
        %4510 = vmatpush1.msra.mxu0 0.0
        %4511 = vmatprep.subr.mxu0 0.0
        %4512 = vmatpush1.msra.mxu0 0.0
        %4513 = vmatprep.subr.mxu0 0.0
        %4514 = vmatpush1.msra.mxu0 0.0
        %4515 = vmatprep.subr.mxu0 0.0
        %4516 = vmatpush1.msra.mxu0 0.0
        %4517 = vmatprep.subr.mxu0 0.0
        %4518 = vmatpush1.msra.mxu0 0.0
        %4519 = vmatprep.subr.mxu0 0.0
        %4520 = vmatpush1.msra.mxu0 0.0
        %4521 = vmatprep.subr.mxu0 0.0
        %4522 = vmatpush1.msra.mxu0 0.0
        %4523 = vmatprep.subr.mxu0 0.0
        %4524 = vmatpush1.msra.mxu0 0.0
        %4525 = vmatprep.subr.mxu0 0.0
        %4526 = vmatpush1.msra.mxu0 0.0
        %4527 = vmatprep.subr.mxu0 0.0
        %4528 = vmatpush1.msra.mxu0 0.0
        %4529 = vmatprep.subr.mxu0 0.0
        %4530 = vmatpush1.msra.mxu0 0.0
        %4531 = vmatprep.subr.mxu0 0.0
        %4532 = vmatpush1.msra.mxu0 0.0
        %4533 = vmatprep.subr.mxu0 0.0
        %v4534 = vand.u32 %v415, 4294901760
        %v4535 = vsub.f32 %v415, %v4534
        %4536 = vmatpush1.msra.mxu0 %v4535
        %4537 = vmatprep.subr.mxu0 0.0
        %4538 = vmatpush2.msra.mxu0 0.0
        %4539 = vmatprep.subr.mxu0 0.0
        %4540 = vmatpush2.msra.mxu0 0.0
        %4541 = vmatprep.subr.mxu0 0.0
        %4542 = vmatpush2.msra.mxu0 0.0
        %4543 = vmatprep.subr.mxu0 0.0
        %4544 = vmatpush2.msra.mxu0 0.0
        %4545 = vmatprep.subr.mxu0 0.0
        %4546 = vmatpush2.msra.mxu0 0.0
        %4547 = vmatprep.subr.mxu0 0.0
        %4548 = vmatpush2.msra.mxu0 0.0
        %4549 = vmatprep.subr.mxu0 0.0
        %4550 = vmatpush2.msra.mxu0 0.0
        %4551 = vmatprep.subr.mxu0 0.0
        %4552 = vmatpush2.msra.mxu0 0.0
        %4553 = vmatprep.subr.mxu0 0.0
        %4554 = vmatpush2.msra.mxu0 0.0
        %4555 = vmatprep.subr.mxu0 0.0
        %4556 = vmatpush2.msra.mxu0 0.0
        %4557 = vmatprep.subr.mxu0 0.0
        %4558 = vmatpush2.msra.mxu0 0.0
        %4559 = vmatprep.subr.mxu0 0.0
        %4560 = vmatpush2.msra.mxu0 0.0
        %4561 = vmatprep.subr.mxu0 0.0
        %4562 = vmatpush2.msra.mxu0 0.0
        %4563 = vmatprep.subr.mxu0 0.0
        %4564 = vmatpush2.msra.mxu0 0.0
        %4565 = vmatprep.subr.mxu0 0.0
        %4566 = vmatpush2.msra.mxu0 0.0
        %4567 = vmatprep.subr.mxu0 0.0
        %4568 = vmatpush2.msra.mxu0 0.0
        %4569 = vmatprep.mubr.f32.mxu0 0.0
        %v4570 = vand.u32 %v4064, 4294901760
        %v4571 = vsub.f32 %v4064, %v4570
        %4572 = vmatmul.mubr.f32.gmra.mxu0 %v4571
        %v4573 = vpop.f32.mrf.mxu0
        %v4574 = vadd.f32 %v4410, %v4573
        %v4575 = vpop.f32.mrf.mxu0
        %4576 = vmatprep.mubr.f32.mxu0 0.0
        %v4577 = vand.u32 %v4067, 4294901760
        %v4578 = vsub.f32 %v4067, %v4577
        %4579 = vmatmul.mubr.f32.gmra.mxu0 %v4578
        %v4580 = vpop.f32.mrf.mxu0
        %v4581 = vadd.f32 %v4416, %v4580
        %v4582 = vpop.f32.mrf.mxu0
        %4583 = vmatprep.mubr.f32.mxu0 0.0
        %v4584 = vand.u32 %v4070, 4294901760
        %v4585 = vsub.f32 %v4070, %v4584
        %4586 = vmatmul.mubr.f32.gmra.mxu0 %v4585
        %v4587 = vpop.f32.mrf.mxu0
        %v4588 = vadd.f32 %v4422, %v4587
        %v4589 = vpop.f32.mrf.mxu0
        %4590 = vmatprep.mubr.f32.mxu0 0.0
        %v4591 = vand.u32 %v4073, 4294901760
        %v4592 = vsub.f32 %v4073, %v4591
        %4593 = vmatmul.mubr.f32.gmra.mxu0 %v4592
        %v4594 = vpop.f32.mrf.mxu0
        %v4595 = vadd.f32 %v4428, %v4594
        %v4596 = vpop.f32.mrf.mxu0
        %4597 = vmatprep.mubr.f32.mxu0 0.0
        %v4598 = vand.u32 %v4076, 4294901760
        %v4599 = vsub.f32 %v4076, %v4598
        %4600 = vmatmul.mubr.f32.gmra.mxu0 %v4599
        %v4601 = vpop.f32.mrf.mxu0
        %v4602 = vadd.f32 %v4434, %v4601
        %v4603 = vpop.f32.mrf.mxu0
        %4604 = vmatprep.mubr.f32.mxu0 0.0
        %v4605 = vand.u32 %v4079, 4294901760
        %v4606 = vsub.f32 %v4079, %v4605
        %4607 = vmatmul.mubr.f32.gmra.mxu0 %v4606
        %v4608 = vpop.f32.mrf.mxu0
        %v4609 = vadd.f32 %v4440, %v4608
        %v4610 = vpop.f32.mrf.mxu0
        %4611 = vmatprep.mubr.f32.mxu0 0.0
        %v4612 = vand.u32 %v4082, 4294901760
        %v4613 = vsub.f32 %v4082, %v4612
        %4614 = vmatmul.mubr.f32.gmra.mxu0 %v4613
        %v4615 = vpop.f32.mrf.mxu0
        %v4616 = vadd.f32 %v4446, %v4615
        %v4617 = vpop.f32.mrf.mxu0
        %4618 = vmatprep.mubr.f32.mxu0 0.0
        %v4619 = vand.u32 %v4085, 4294901760
        %v4620 = vsub.f32 %v4085, %v4619
        %4621 = vmatmul.mubr.f32.gmra.mxu0 %v4620
        %v4622 = vpop.f32.mrf.mxu0
        %v4623 = vadd.f32 %v4452, %v4622
        %v4624 = vpop.f32.mrf.mxu0
        %4625 = vmatprep.mubr.f32.mxu0 0.0
        %v4626 = vand.u32 %v4088, 4294901760
        %v4627 = vsub.f32 %v4088, %v4626
        %4628 = vmatmul.mubr.f32.gmra.mxu0 %v4627
        %v4629 = vpop.f32.mrf.mxu0
        %v4630 = vadd.f32 %v4458, %v4629
        %v4631 = vpop.f32.mrf.mxu0
        %4632 = vmatprep.mubr.f32.mxu0 0.0
        %v4633 = vand.u32 %v4091, 4294901760
        %v4634 = vsub.f32 %v4091, %v4633
        %4635 = vmatmul.mubr.f32.gmra.mxu0 %v4634
        %v4636 = vpop.f32.mrf.mxu0
        %v4637 = vadd.f32 %v4464, %v4636
        %v4638 = vpop.f32.mrf.mxu0
        %4639 = vmatprep.mubr.f32.mxu0 0.0
        %v4640 = vand.u32 %v4094, 4294901760
        %v4641 = vsub.f32 %v4094, %v4640
        %4642 = vmatmul.mubr.f32.gmra.mxu0 %v4641
        %v4643 = vpop.f32.mrf.mxu0
        %v4644 = vadd.f32 %v4470, %v4643
        %v4645 = vpop.f32.mrf.mxu0
        %4646 = vmatprep.mubr.f32.mxu0 0.0
        %v4647 = vand.u32 %v4097, 4294901760
        %v4648 = vsub.f32 %v4097, %v4647
        %4649 = vmatmul.mubr.f32.gmra.mxu0 %v4648
        %v4650 = vpop.f32.mrf.mxu0
        %v4651 = vadd.f32 %v4476, %v4650
        %v4652 = vpop.f32.mrf.mxu0
        %4653 = vmatprep.mubr.f32.mxu0 0.0
        %v4654 = vand.u32 %v4100, 4294901760
        %v4655 = vsub.f32 %v4100, %v4654
        %4656 = vmatmul.mubr.f32.gmra.mxu0 %v4655
        %v4657 = vpop.f32.mrf.mxu0
        %v4658 = vadd.f32 %v4482, %v4657
        %v4659 = vpop.f32.mrf.mxu0
        %4660 = vmatprep.mubr.f32.mxu0 0.0
        %v4661 = vand.u32 %v4103, 4294901760
        %v4662 = vsub.f32 %v4103, %v4661
        %4663 = vmatmul.mubr.f32.gmra.mxu0 %v4662
        %v4664 = vpop.f32.mrf.mxu0
        %v4665 = vadd.f32 %v4488, %v4664
        %v4666 = vpop.f32.mrf.mxu0
        %4667 = vmatprep.mubr.f32.mxu0 0.0
        %v4668 = vand.u32 %v4106, 4294901760
        %v4669 = vsub.f32 %v4106, %v4668
        %4670 = vmatmul.mubr.f32.gmra.mxu0 %v4669
        %v4671 = vpop.f32.mrf.mxu0
        %v4672 = vadd.f32 %v4494, %v4671
        %v4673 = vpop.f32.mrf.mxu0
        %4674 = vmatprep.mubr.f32.mxu0 0.0
        %v4675 = vand.u32 %v4109, 4294901760
        %v4676 = vsub.f32 %v4109, %v4675
        %4677 = vmatmul.mubr.f32.gmra.mxu0 %v4676
        %v4678 = vpop.f32.mrf.mxu0
        %v4679 = vadd.f32 %v4500, %v4678
        %v4680 = vpop.f32.mrf.mxu0
        %4681 = vdwg.mxu0
        %4682 = vmatprep.subr.mxu0 0.0
        %4683 = vmatpush1.msra.mxu0 0.0
        %4684 = vmatprep.subr.mxu0 0.0
        %4685 = vmatpush1.msra.mxu0 0.0
        %4686 = vmatprep.subr.mxu0 0.0
        %4687 = vmatpush1.msra.mxu0 0.0
        %4688 = vmatprep.subr.mxu0 0.0
        %4689 = vmatpush1.msra.mxu0 0.0
        %4690 = vmatprep.subr.mxu0 0.0
        %4691 = vmatpush1.msra.mxu0 0.0
        %4692 = vmatprep.subr.mxu0 0.0
        %4693 = vmatpush1.msra.mxu0 0.0
        %4694 = vmatprep.subr.mxu0 0.0
        %4695 = vmatpush1.msra.mxu0 0.0
        %4696 = vmatprep.subr.mxu0 0.0
        %4697 = vmatpush1.msra.mxu0 0.0
        %4698 = vmatprep.subr.mxu0 0.0
        %4699 = vmatpush1.msra.mxu0 0.0
        %4700 = vmatprep.subr.mxu0 0.0
        %4701 = vmatpush1.msra.mxu0 0.0
        %4702 = vmatprep.subr.mxu0 0.0
        %4703 = vmatpush1.msra.mxu0 0.0
        %4704 = vmatprep.subr.mxu0 0.0
        %4705 = vmatpush1.msra.mxu0 0.0
        %4706 = vmatprep.subr.mxu0 0.0
        %4707 = vmatpush1.msra.mxu0 0.0
        %4708 = vmatprep.subr.mxu0 0.0
        %4709 = vmatpush1.msra.mxu0 0.0
        %4710 = vmatprep.subr.mxu0 0.0
        %4711 = vmatpush1.msra.mxu0 0.0
        %4712 = vmatprep.subr.mxu0 0.0
        %v4713 = vand.u32 %v415, 4294901760
        %4714 = vmatpush1.msra.mxu0 %v4713
        %4715 = vmatprep.subr.mxu0 0.0
        %4716 = vmatpush2.msra.mxu0 0.0
        %4717 = vmatprep.subr.mxu0 0.0
        %4718 = vmatpush2.msra.mxu0 0.0
        %4719 = vmatprep.subr.mxu0 0.0
        %4720 = vmatpush2.msra.mxu0 0.0
        %4721 = vmatprep.subr.mxu0 0.0
        %4722 = vmatpush2.msra.mxu0 0.0
        %4723 = vmatprep.subr.mxu0 0.0
        %4724 = vmatpush2.msra.mxu0 0.0
        %4725 = vmatprep.subr.mxu0 0.0
        %4726 = vmatpush2.msra.mxu0 0.0
        %4727 = vmatprep.subr.mxu0 0.0
        %4728 = vmatpush2.msra.mxu0 0.0
        %4729 = vmatprep.subr.mxu0 0.0
        %4730 = vmatpush2.msra.mxu0 0.0
        %4731 = vmatprep.subr.mxu0 0.0
        %4732 = vmatpush2.msra.mxu0 0.0
        %4733 = vmatprep.subr.mxu0 0.0
        %4734 = vmatpush2.msra.mxu0 0.0
        %4735 = vmatprep.subr.mxu0 0.0
        %4736 = vmatpush2.msra.mxu0 0.0
        %4737 = vmatprep.subr.mxu0 0.0
        %4738 = vmatpush2.msra.mxu0 0.0
        %4739 = vmatprep.subr.mxu0 0.0
        %4740 = vmatpush2.msra.mxu0 0.0
        %4741 = vmatprep.subr.mxu0 0.0
        %4742 = vmatpush2.msra.mxu0 0.0
        %4743 = vmatprep.subr.mxu0 0.0
        %4744 = vmatpush2.msra.mxu0 0.0
        %4745 = vmatprep.subr.mxu0 0.0
        %4746 = vmatpush2.msra.mxu0 0.0
        %4747 = vmatprep.mubr.f32.mxu0 0.0
        %v4748 = vand.u32 %v4064, 4294901760
        %v4749 = vsub.f32 %v4064, %v4748
        %v4750 = vand.u32 %v4749, 4294901760
        %4751 = vmatmul.mubr.f32.gmra.mxu0 %v4750
        %v4752 = vpop.f32.mrf.mxu0
        %v4753 = vadd.f32 %v4574, %v4752
        %v4754 = vpop.f32.mrf.mxu0
        %4755 = vmatprep.mubr.f32.mxu0 0.0
        %v4756 = vand.u32 %v4067, 4294901760
        %v4757 = vsub.f32 %v4067, %v4756
        %v4758 = vand.u32 %v4757, 4294901760
        %4759 = vmatmul.mubr.f32.gmra.mxu0 %v4758
        %v4760 = vpop.f32.mrf.mxu0
        %v4761 = vadd.f32 %v4581, %v4760
        %v4762 = vpop.f32.mrf.mxu0
        %4763 = vmatprep.mubr.f32.mxu0 0.0
        %v4764 = vand.u32 %v4070, 4294901760
        %v4765 = vsub.f32 %v4070, %v4764
        %v4766 = vand.u32 %v4765, 4294901760
        %4767 = vmatmul.mubr.f32.gmra.mxu0 %v4766
        %v4768 = vpop.f32.mrf.mxu0
        %v4769 = vadd.f32 %v4588, %v4768
        %v4770 = vpop.f32.mrf.mxu0
        %4771 = vmatprep.mubr.f32.mxu0 0.0
        %v4772 = vand.u32 %v4073, 4294901760
        %v4773 = vsub.f32 %v4073, %v4772
        %v4774 = vand.u32 %v4773, 4294901760
        %4775 = vmatmul.mubr.f32.gmra.mxu0 %v4774
        %v4776 = vpop.f32.mrf.mxu0
        %v4777 = vadd.f32 %v4595, %v4776
        %v4778 = vpop.f32.mrf.mxu0
        %4779 = vmatprep.mubr.f32.mxu0 0.0
        %v4780 = vand.u32 %v4076, 4294901760
        %v4781 = vsub.f32 %v4076, %v4780
        %v4782 = vand.u32 %v4781, 4294901760
        %4783 = vmatmul.mubr.f32.gmra.mxu0 %v4782
        %v4784 = vpop.f32.mrf.mxu0
        %v4785 = vadd.f32 %v4602, %v4784
        %v4786 = vpop.f32.mrf.mxu0
        %4787 = vmatprep.mubr.f32.mxu0 0.0
        %v4788 = vand.u32 %v4079, 4294901760
        %v4789 = vsub.f32 %v4079, %v4788
        %v4790 = vand.u32 %v4789, 4294901760
        %4791 = vmatmul.mubr.f32.gmra.mxu0 %v4790
        %v4792 = vpop.f32.mrf.mxu0
        %v4793 = vadd.f32 %v4609, %v4792
        %v4794 = vpop.f32.mrf.mxu0
        %4795 = vmatprep.mubr.f32.mxu0 0.0
        %v4796 = vand.u32 %v4082, 4294901760
        %v4797 = vsub.f32 %v4082, %v4796
        %v4798 = vand.u32 %v4797, 4294901760
        %4799 = vmatmul.mubr.f32.gmra.mxu0 %v4798
        %v4800 = vpop.f32.mrf.mxu0
        %v4801 = vadd.f32 %v4616, %v4800
        %v4802 = vpop.f32.mrf.mxu0
        %4803 = vmatprep.mubr.f32.mxu0 0.0
        %v4804 = vand.u32 %v4085, 4294901760
        %v4805 = vsub.f32 %v4085, %v4804
        %v4806 = vand.u32 %v4805, 4294901760
        %4807 = vmatmul.mubr.f32.gmra.mxu0 %v4806
        %v4808 = vpop.f32.mrf.mxu0
        %v4809 = vadd.f32 %v4623, %v4808
        %v4810 = vpop.f32.mrf.mxu0
        %4811 = vmatprep.mubr.f32.mxu0 0.0
        %v4812 = vand.u32 %v4088, 4294901760
        %v4813 = vsub.f32 %v4088, %v4812
        %v4814 = vand.u32 %v4813, 4294901760
        %4815 = vmatmul.mubr.f32.gmra.mxu0 %v4814
        %v4816 = vpop.f32.mrf.mxu0
        %v4817 = vadd.f32 %v4630, %v4816
        %v4818 = vpop.f32.mrf.mxu0
        %4819 = vmatprep.mubr.f32.mxu0 0.0
        %v4820 = vand.u32 %v4091, 4294901760
        %v4821 = vsub.f32 %v4091, %v4820
        %v4822 = vand.u32 %v4821, 4294901760
        %4823 = vmatmul.mubr.f32.gmra.mxu0 %v4822
        %v4824 = vpop.f32.mrf.mxu0
        %v4825 = vadd.f32 %v4637, %v4824
        %v4826 = vpop.f32.mrf.mxu0
        %4827 = vmatprep.mubr.f32.mxu0 0.0
        %v4828 = vand.u32 %v4094, 4294901760
        %v4829 = vsub.f32 %v4094, %v4828
        %v4830 = vand.u32 %v4829, 4294901760
        %4831 = vmatmul.mubr.f32.gmra.mxu0 %v4830
        %v4832 = vpop.f32.mrf.mxu0
        %v4833 = vadd.f32 %v4644, %v4832
        %v4834 = vpop.f32.mrf.mxu0
        %4835 = vmatprep.mubr.f32.mxu0 0.0
        %v4836 = vand.u32 %v4097, 4294901760
        %v4837 = vsub.f32 %v4097, %v4836
        %v4838 = vand.u32 %v4837, 4294901760
        %4839 = vmatmul.mubr.f32.gmra.mxu0 %v4838
        %v4840 = vpop.f32.mrf.mxu0
        %v4841 = vadd.f32 %v4651, %v4840
        %v4842 = vpop.f32.mrf.mxu0
        %4843 = vmatprep.mubr.f32.mxu0 0.0
        %v4844 = vand.u32 %v4100, 4294901760
        %v4845 = vsub.f32 %v4100, %v4844
        %v4846 = vand.u32 %v4845, 4294901760
        %4847 = vmatmul.mubr.f32.gmra.mxu0 %v4846
        %v4848 = vpop.f32.mrf.mxu0
        %v4849 = vadd.f32 %v4658, %v4848
        %v4850 = vpop.f32.mrf.mxu0
        %4851 = vmatprep.mubr.f32.mxu0 0.0
        %v4852 = vand.u32 %v4103, 4294901760
        %v4853 = vsub.f32 %v4103, %v4852
        %v4854 = vand.u32 %v4853, 4294901760
        %4855 = vmatmul.mubr.f32.gmra.mxu0 %v4854
        %v4856 = vpop.f32.mrf.mxu0
        %v4857 = vadd.f32 %v4665, %v4856
        %v4858 = vpop.f32.mrf.mxu0
        %4859 = vmatprep.mubr.f32.mxu0 0.0
        %v4860 = vand.u32 %v4106, 4294901760
        %v4861 = vsub.f32 %v4106, %v4860
        %v4862 = vand.u32 %v4861, 4294901760
        %4863 = vmatmul.mubr.f32.gmra.mxu0 %v4862
        %v4864 = vpop.f32.mrf.mxu0
        %v4865 = vadd.f32 %v4672, %v4864
        %v4866 = vpop.f32.mrf.mxu0
        %4867 = vmatprep.mubr.f32.mxu0 0.0
        %v4868 = vand.u32 %v4109, 4294901760
        %v4869 = vsub.f32 %v4109, %v4868
        %v4870 = vand.u32 %v4869, 4294901760
        %4871 = vmatmul.mubr.f32.gmra.mxu0 %v4870
        %v4872 = vpop.f32.mrf.mxu0
        %v4873 = vadd.f32 %v4679, %v4872
        %v4874 = vpop.f32.mrf.mxu0
        %4875 = vdwg.mxu0
        %4876 = vmatprep.subr.mxu0 0.0
        %4877 = vmatpush1.msra.mxu0 0.0
        %4878 = vmatprep.subr.mxu0 0.0
        %4879 = vmatpush1.msra.mxu0 0.0
        %4880 = vmatprep.subr.mxu0 0.0
        %4881 = vmatpush1.msra.mxu0 0.0
        %4882 = vmatprep.subr.mxu0 0.0
        %4883 = vmatpush1.msra.mxu0 0.0
        %4884 = vmatprep.subr.mxu0 0.0
        %4885 = vmatpush1.msra.mxu0 0.0
        %4886 = vmatprep.subr.mxu0 0.0
        %4887 = vmatpush1.msra.mxu0 0.0
        %4888 = vmatprep.subr.mxu0 0.0
        %4889 = vmatpush1.msra.mxu0 0.0
        %4890 = vmatprep.subr.mxu0 0.0
        %4891 = vmatpush1.msra.mxu0 0.0
        %4892 = vmatprep.subr.mxu0 0.0
        %4893 = vmatpush1.msra.mxu0 0.0
        %4894 = vmatprep.subr.mxu0 0.0
        %4895 = vmatpush1.msra.mxu0 0.0
        %4896 = vmatprep.subr.mxu0 0.0
        %4897 = vmatpush1.msra.mxu0 0.0
        %4898 = vmatprep.subr.mxu0 0.0
        %4899 = vmatpush1.msra.mxu0 0.0
        %4900 = vmatprep.subr.mxu0 0.0
        %4901 = vmatpush1.msra.mxu0 0.0
        %4902 = vmatprep.subr.mxu0 0.0
        %4903 = vmatpush1.msra.mxu0 0.0
        %4904 = vmatprep.subr.mxu0 0.0
        %4905 = vmatpush1.msra.mxu0 0.0
        %4906 = vmatprep.subr.mxu0 0.0
        %v4907 = vand.u32 %v415, 4294901760
        %v4908 = vsub.f32 %v415, %v4907
        %v4909 = vand.u32 %v4908, 4294901760
        %4910 = vmatpush1.msra.mxu0 %v4909
        %4911 = vmatprep.subr.mxu0 0.0
        %4912 = vmatpush2.msra.mxu0 0.0
        %4913 = vmatprep.subr.mxu0 0.0
        %4914 = vmatpush2.msra.mxu0 0.0
        %4915 = vmatprep.subr.mxu0 0.0
        %4916 = vmatpush2.msra.mxu0 0.0
        %4917 = vmatprep.subr.mxu0 0.0
        %4918 = vmatpush2.msra.mxu0 0.0
        %4919 = vmatprep.subr.mxu0 0.0
        %4920 = vmatpush2.msra.mxu0 0.0
        %4921 = vmatprep.subr.mxu0 0.0
        %4922 = vmatpush2.msra.mxu0 0.0
        %4923 = vmatprep.subr.mxu0 0.0
        %4924 = vmatpush2.msra.mxu0 0.0
        %4925 = vmatprep.subr.mxu0 0.0
        %4926 = vmatpush2.msra.mxu0 0.0
        %4927 = vmatprep.subr.mxu0 0.0
        %4928 = vmatpush2.msra.mxu0 0.0
        %4929 = vmatprep.subr.mxu0 0.0
        %4930 = vmatpush2.msra.mxu0 0.0
        %4931 = vmatprep.subr.mxu0 0.0
        %4932 = vmatpush2.msra.mxu0 0.0
        %4933 = vmatprep.subr.mxu0 0.0
        %4934 = vmatpush2.msra.mxu0 0.0
        %4935 = vmatprep.subr.mxu0 0.0
        %4936 = vmatpush2.msra.mxu0 0.0
        %4937 = vmatprep.subr.mxu0 0.0
        %4938 = vmatpush2.msra.mxu0 0.0
        %4939 = vmatprep.subr.mxu0 0.0
        %4940 = vmatpush2.msra.mxu0 0.0
        %4941 = vmatprep.subr.mxu0 0.0
        %4942 = vmatpush2.msra.mxu0 0.0
        %4943 = vmatprep.mubr.f32.mxu0 0.0
        %v4944 = vand.u32 %v4064, 4294901760
        %4945 = vmatmul.mubr.f32.gmra.mxu0 %v4944
        %v4946 = vpop.f32.mrf.mxu0
        %v4947 = vadd.f32 %v4753, %v4946
        %v4948 = vpop.f32.mrf.mxu0
        %4949 = vmatprep.mubr.f32.mxu0 0.0
        %v4950 = vand.u32 %v4067, 4294901760
        %4951 = vmatmul.mubr.f32.gmra.mxu0 %v4950
        %v4952 = vpop.f32.mrf.mxu0
        %v4953 = vadd.f32 %v4761, %v4952
        %v4954 = vpop.f32.mrf.mxu0
        %4955 = vmatprep.mubr.f32.mxu0 0.0
        %v4956 = vand.u32 %v4070, 4294901760
        %4957 = vmatmul.mubr.f32.gmra.mxu0 %v4956
        %v4958 = vpop.f32.mrf.mxu0
        %v4959 = vadd.f32 %v4769, %v4958
        %v4960 = vpop.f32.mrf.mxu0
        %4961 = vmatprep.mubr.f32.mxu0 0.0
        %v4962 = vand.u32 %v4073, 4294901760
        %4963 = vmatmul.mubr.f32.gmra.mxu0 %v4962
        %v4964 = vpop.f32.mrf.mxu0
        %v4965 = vadd.f32 %v4777, %v4964
        %v4966 = vpop.f32.mrf.mxu0
        %4967 = vmatprep.mubr.f32.mxu0 0.0
        %v4968 = vand.u32 %v4076, 4294901760
        %4969 = vmatmul.mubr.f32.gmra.mxu0 %v4968
        %v4970 = vpop.f32.mrf.mxu0
        %v4971 = vadd.f32 %v4785, %v4970
        %v4972 = vpop.f32.mrf.mxu0
        %4973 = vmatprep.mubr.f32.mxu0 0.0
        %v4974 = vand.u32 %v4079, 4294901760
        %4975 = vmatmul.mubr.f32.gmra.mxu0 %v4974
        %v4976 = vpop.f32.mrf.mxu0
        %v4977 = vadd.f32 %v4793, %v4976
        %v4978 = vpop.f32.mrf.mxu0
        %4979 = vmatprep.mubr.f32.mxu0 0.0
        %v4980 = vand.u32 %v4082, 4294901760
        %4981 = vmatmul.mubr.f32.gmra.mxu0 %v4980
        %v4982 = vpop.f32.mrf.mxu0
        %v4983 = vadd.f32 %v4801, %v4982
        %v4984 = vpop.f32.mrf.mxu0
        %4985 = vmatprep.mubr.f32.mxu0 0.0
        %v4986 = vand.u32 %v4085, 4294901760
        %4987 = vmatmul.mubr.f32.gmra.mxu0 %v4986
        %v4988 = vpop.f32.mrf.mxu0
        %v4989 = vadd.f32 %v4809, %v4988
        %v4990 = vpop.f32.mrf.mxu0
        %4991 = vmatprep.mubr.f32.mxu0 0.0
        %v4992 = vand.u32 %v4088, 4294901760
        %4993 = vmatmul.mubr.f32.gmra.mxu0 %v4992
        %v4994 = vpop.f32.mrf.mxu0
        %v4995 = vadd.f32 %v4817, %v4994
        %v4996 = vpop.f32.mrf.mxu0
        %4997 = vmatprep.mubr.f32.mxu0 0.0
        %v4998 = vand.u32 %v4091, 4294901760
        %4999 = vmatmul.mubr.f32.gmra.mxu0 %v4998
        %v5000 = vpop.f32.mrf.mxu0
        %v5001 = vadd.f32 %v4825, %v5000
        %v5002 = vpop.f32.mrf.mxu0
        %5003 = vmatprep.mubr.f32.mxu0 0.0
        %v5004 = vand.u32 %v4094, 4294901760
        %5005 = vmatmul.mubr.f32.gmra.mxu0 %v5004
        %v5006 = vpop.f32.mrf.mxu0
        %v5007 = vadd.f32 %v4833, %v5006
        %v5008 = vpop.f32.mrf.mxu0
        %5009 = vmatprep.mubr.f32.mxu0 0.0
        %v5010 = vand.u32 %v4097, 4294901760
        %5011 = vmatmul.mubr.f32.gmra.mxu0 %v5010
        %v5012 = vpop.f32.mrf.mxu0
        %v5013 = vadd.f32 %v4841, %v5012
        %v5014 = vpop.f32.mrf.mxu0
        %5015 = vmatprep.mubr.f32.mxu0 0.0
        %v5016 = vand.u32 %v4100, 4294901760
        %5017 = vmatmul.mubr.f32.gmra.mxu0 %v5016
        %v5018 = vpop.f32.mrf.mxu0
        %v5019 = vadd.f32 %v4849, %v5018
        %v5020 = vpop.f32.mrf.mxu0
        %5021 = vmatprep.mubr.f32.mxu0 0.0
        %v5022 = vand.u32 %v4103, 4294901760
        %5023 = vmatmul.mubr.f32.gmra.mxu0 %v5022
        %v5024 = vpop.f32.mrf.mxu0
        %v5025 = vadd.f32 %v4857, %v5024
        %v5026 = vpop.f32.mrf.mxu0
        %5027 = vmatprep.mubr.f32.mxu0 0.0
        %v5028 = vand.u32 %v4106, 4294901760
        %5029 = vmatmul.mubr.f32.gmra.mxu0 %v5028
        %v5030 = vpop.f32.mrf.mxu0
        %v5031 = vadd.f32 %v4865, %v5030
        %v5032 = vpop.f32.mrf.mxu0
        %5033 = vmatprep.mubr.f32.mxu0 0.0
        %v5034 = vand.u32 %v4109, 4294901760
        %5035 = vmatmul.mubr.f32.gmra.mxu0 %v5034
        %v5036 = vpop.f32.mrf.mxu0
        %v5037 = vadd.f32 %v4873, %v5036
        %v5038 = vpop.f32.mrf.mxu0
        %5039 = vdwg.mxu0
        %5040 = vmatprep.subr.mxu0 0.0
        %5041 = vmatpush1.msra.mxu0 0.0
        %5042 = vmatprep.subr.mxu0 0.0
        %5043 = vmatpush1.msra.mxu0 0.0
        %5044 = vmatprep.subr.mxu0 0.0
        %5045 = vmatpush1.msra.mxu0 0.0
        %5046 = vmatprep.subr.mxu0 0.0
        %5047 = vmatpush1.msra.mxu0 0.0
        %5048 = vmatprep.subr.mxu0 0.0
        %5049 = vmatpush1.msra.mxu0 0.0
        %5050 = vmatprep.subr.mxu0 0.0
        %5051 = vmatpush1.msra.mxu0 0.0
        %5052 = vmatprep.subr.mxu0 0.0
        %5053 = vmatpush1.msra.mxu0 0.0
        %5054 = vmatprep.subr.mxu0 0.0
        %5055 = vmatpush1.msra.mxu0 0.0
        %5056 = vmatprep.subr.mxu0 0.0
        %5057 = vmatpush1.msra.mxu0 0.0
        %5058 = vmatprep.subr.mxu0 0.0
        %5059 = vmatpush1.msra.mxu0 0.0
        %5060 = vmatprep.subr.mxu0 0.0
        %5061 = vmatpush1.msra.mxu0 0.0
        %5062 = vmatprep.subr.mxu0 0.0
        %5063 = vmatpush1.msra.mxu0 0.0
        %5064 = vmatprep.subr.mxu0 0.0
        %5065 = vmatpush1.msra.mxu0 0.0
        %5066 = vmatprep.subr.mxu0 0.0
        %5067 = vmatpush1.msra.mxu0 0.0
        %5068 = vmatprep.subr.mxu0 0.0
        %5069 = vmatpush1.msra.mxu0 0.0
        %5070 = vmatprep.subr.mxu0 0.0
        %v5071 = vand.u32 %v415, 4294901760
        %5072 = vmatpush1.msra.mxu0 %v5071
        %5073 = vmatprep.subr.mxu0 0.0
        %5074 = vmatpush2.msra.mxu0 0.0
        %5075 = vmatprep.subr.mxu0 0.0
        %5076 = vmatpush2.msra.mxu0 0.0
        %5077 = vmatprep.subr.mxu0 0.0
        %5078 = vmatpush2.msra.mxu0 0.0
        %5079 = vmatprep.subr.mxu0 0.0
        %5080 = vmatpush2.msra.mxu0 0.0
        %5081 = vmatprep.subr.mxu0 0.0
        %5082 = vmatpush2.msra.mxu0 0.0
        %5083 = vmatprep.subr.mxu0 0.0
        %5084 = vmatpush2.msra.mxu0 0.0
        %5085 = vmatprep.subr.mxu0 0.0
        %5086 = vmatpush2.msra.mxu0 0.0
        %5087 = vmatprep.subr.mxu0 0.0
        %5088 = vmatpush2.msra.mxu0 0.0
        %5089 = vmatprep.subr.mxu0 0.0
        %5090 = vmatpush2.msra.mxu0 0.0
        %5091 = vmatprep.subr.mxu0 0.0
        %5092 = vmatpush2.msra.mxu0 0.0
        %5093 = vmatprep.subr.mxu0 0.0
        %5094 = vmatpush2.msra.mxu0 0.0
        %5095 = vmatprep.subr.mxu0 0.0
        %5096 = vmatpush2.msra.mxu0 0.0
        %5097 = vmatprep.subr.mxu0 0.0
        %5098 = vmatpush2.msra.mxu0 0.0
        %5099 = vmatprep.subr.mxu0 0.0
        %5100 = vmatpush2.msra.mxu0 0.0
        %5101 = vmatprep.subr.mxu0 0.0
        %5102 = vmatpush2.msra.mxu0 0.0
        %5103 = vmatprep.subr.mxu0 0.0
        %5104 = vmatpush2.msra.mxu0 0.0
        %5105 = vmatprep.mubr.f32.mxu0 0.0
        %v5106 = vand.u32 %v4064, 4294901760
        %5107 = vmatmul.mubr.f32.gmra.mxu0 %v5106
        %v5108 = vpop.f32.mrf.mxu0
        %v5109 = vadd.f32 %v4947, %v5108
        %v5110 = vpop.f32.mrf.mxu0
        %5111 = vmatprep.mubr.f32.mxu0 0.0
        %v5112 = vand.u32 %v4067, 4294901760
        %5113 = vmatmul.mubr.f32.gmra.mxu0 %v5112
        %v5114 = vpop.f32.mrf.mxu0
        %v5115 = vadd.f32 %v4953, %v5114
        %v5116 = vpop.f32.mrf.mxu0
        %5117 = vmatprep.mubr.f32.mxu0 0.0
        %v5118 = vand.u32 %v4070, 4294901760
        %5119 = vmatmul.mubr.f32.gmra.mxu0 %v5118
        %v5120 = vpop.f32.mrf.mxu0
        %v5121 = vadd.f32 %v4959, %v5120
        %v5122 = vpop.f32.mrf.mxu0
        %5123 = vmatprep.mubr.f32.mxu0 0.0
        %v5124 = vand.u32 %v4073, 4294901760
        %5125 = vmatmul.mubr.f32.gmra.mxu0 %v5124
        %v5126 = vpop.f32.mrf.mxu0
        %v5127 = vadd.f32 %v4965, %v5126
        %v5128 = vpop.f32.mrf.mxu0
        %5129 = vmatprep.mubr.f32.mxu0 0.0
        %v5130 = vand.u32 %v4076, 4294901760
        %5131 = vmatmul.mubr.f32.gmra.mxu0 %v5130
        %v5132 = vpop.f32.mrf.mxu0
        %v5133 = vadd.f32 %v4971, %v5132
        %v5134 = vpop.f32.mrf.mxu0
        %5135 = vmatprep.mubr.f32.mxu0 0.0
        %v5136 = vand.u32 %v4079, 4294901760
        %5137 = vmatmul.mubr.f32.gmra.mxu0 %v5136
        %v5138 = vpop.f32.mrf.mxu0
        %v5139 = vadd.f32 %v4977, %v5138
        %v5140 = vpop.f32.mrf.mxu0
        %5141 = vmatprep.mubr.f32.mxu0 0.0
        %v5142 = vand.u32 %v4082, 4294901760
        %5143 = vmatmul.mubr.f32.gmra.mxu0 %v5142
        %v5144 = vpop.f32.mrf.mxu0
        %v5145 = vadd.f32 %v4983, %v5144
        %v5146 = vpop.f32.mrf.mxu0
        %5147 = vmatprep.mubr.f32.mxu0 0.0
        %v5148 = vand.u32 %v4085, 4294901760
        %5149 = vmatmul.mubr.f32.gmra.mxu0 %v5148
        %v5150 = vpop.f32.mrf.mxu0
        %v5151 = vadd.f32 %v4989, %v5150
        %v5152 = vpop.f32.mrf.mxu0
        %5153 = vmatprep.mubr.f32.mxu0 0.0
        %v5154 = vand.u32 %v4088, 4294901760
        %5155 = vmatmul.mubr.f32.gmra.mxu0 %v5154
        %v5156 = vpop.f32.mrf.mxu0
        %v5157 = vadd.f32 %v4995, %v5156
        %v5158 = vpop.f32.mrf.mxu0
        %5159 = vmatprep.mubr.f32.mxu0 0.0
        %v5160 = vand.u32 %v4091, 4294901760
        %5161 = vmatmul.mubr.f32.gmra.mxu0 %v5160
        %v5162 = vpop.f32.mrf.mxu0
        %v5163 = vadd.f32 %v5001, %v5162
        %v5164 = vpop.f32.mrf.mxu0
        %5165 = vmatprep.mubr.f32.mxu0 0.0
        %v5166 = vand.u32 %v4094, 4294901760
        %5167 = vmatmul.mubr.f32.gmra.mxu0 %v5166
        %v5168 = vpop.f32.mrf.mxu0
        %v5169 = vadd.f32 %v5007, %v5168
        %v5170 = vpop.f32.mrf.mxu0
        %5171 = vmatprep.mubr.f32.mxu0 0.0
        %v5172 = vand.u32 %v4097, 4294901760
        %5173 = vmatmul.mubr.f32.gmra.mxu0 %v5172
        %v5174 = vpop.f32.mrf.mxu0
        %v5175 = vadd.f32 %v5013, %v5174
        %v5176 = vpop.f32.mrf.mxu0
        %5177 = vmatprep.mubr.f32.mxu0 0.0
        %v5178 = vand.u32 %v4100, 4294901760
        %5179 = vmatmul.mubr.f32.gmra.mxu0 %v5178
        %v5180 = vpop.f32.mrf.mxu0
        %v5181 = vadd.f32 %v5019, %v5180
        %v5182 = vpop.f32.mrf.mxu0
        %5183 = vmatprep.mubr.f32.mxu0 0.0
        %v5184 = vand.u32 %v4103, 4294901760
        %5185 = vmatmul.mubr.f32.gmra.mxu0 %v5184
        %v5186 = vpop.f32.mrf.mxu0
        %v5187 = vadd.f32 %v5025, %v5186
        %v5188 = vpop.f32.mrf.mxu0
        %5189 = vmatprep.mubr.f32.mxu0 0.0
        %v5190 = vand.u32 %v4106, 4294901760
        %5191 = vmatmul.mubr.f32.gmra.mxu0 %v5190
        %v5192 = vpop.f32.mrf.mxu0
        %v5193 = vadd.f32 %v5031, %v5192
        %v5194 = vpop.f32.mrf.mxu0
        %5195 = vmatprep.mubr.f32.mxu0 0.0
        %v5196 = vand.u32 %v4109, 4294901760
        %5197 = vmatmul.mubr.f32.gmra.mxu0 %v5196
        %v5198 = vpop.f32.mrf.mxu0
        %v5199 = vadd.f32 %v5037, %v5198
        %v5200 = vpop.f32.mrf.mxu0
        %5201 = vdwg.mxu0
        %5202 = vst.msk [vmem:[%s286] sm:$0xff] %vm416, %v3970
        %5203 = vst.msk [vmem:[%s286 + $0x8] sm:$0xff] %vm416, %v3976
        %5204 = vst.msk [vmem:[%s286 + $0x10] sm:$0xff] %vm416, %v3982
        %5205 = vst.msk [vmem:[%s286 + $0x18] sm:$0xff] %vm416, %v3988
        %5206 = vst.msk [vmem:[%s286 + $0x20] sm:$0xff] %vm416, %v3994
        %5207 = vst.msk [vmem:[%s286 + $0x28] sm:$0xff] %vm416, %v4000
        %5208 = vst.msk [vmem:[%s286 + $0x30] sm:$0xff] %vm416, %v4006
        %5209 = vst.msk [vmem:[%s286 + $0x38] sm:$0xff] %vm416, %v4012
        %5210 = vst.msk [vmem:[%s286 + $0x40] sm:$0xff] %vm416, %v4018
        %5211 = vst.msk [vmem:[%s286 + $0x48] sm:$0xff] %vm416, %v4024
        %5212 = vst.msk [vmem:[%s286 + $0x50] sm:$0xff] %vm416, %v4030
        %5213 = vst.msk [vmem:[%s286 + $0x58] sm:$0xff] %vm416, %v4036
        %5214 = vst.msk [vmem:[%s286 + $0x60] sm:$0xff] %vm416, %v4042
        %5215 = vst.msk [vmem:[%s286 + $0x68] sm:$0xff] %vm416, %v4048
        %5216 = vst.msk [vmem:[%s286 + $0x70] sm:$0xff] %vm416, %v4054
        %5217 = vst.msk [vmem:[%s286 + $0x78] sm:$0xff] %vm416, %v4060
        %5218 = vst.msk [vmem:[%s286 + $0x80] sm:$0xff] %vm416, %v5109
        %5219 = vst.msk [vmem:[%s286 + $0x88] sm:$0xff] %vm416, %v5115
        %5220 = vst.msk [vmem:[%s286 + $0x90] sm:$0xff] %vm416, %v5121
        %5221 = vst.msk [vmem:[%s286 + $0x98] sm:$0xff] %vm416, %v5127
        %5222 = vst.msk [vmem:[%s286 + $0xa0] sm:$0xff] %vm416, %v5133
        %5223 = vst.msk [vmem:[%s286 + $0xa8] sm:$0xff] %vm416, %v5139
        %5224 = vst.msk [vmem:[%s286 + $0xb0] sm:$0xff] %vm416, %v5145
        %5225 = vst.msk [vmem:[%s286 + $0xb8] sm:$0xff] %vm416, %v5151
        %5226 = vst.msk [vmem:[%s286 + $0xc0] sm:$0xff] %vm416, %v5157
        %5227 = vst.msk [vmem:[%s286 + $0xc8] sm:$0xff] %vm416, %v5163
        %5228 = vst.msk [vmem:[%s286 + $0xd0] sm:$0xff] %vm416, %v5169
        %5229 = vst.msk [vmem:[%s286 + $0xd8] sm:$0xff] %vm416, %v5175
        %5230 = vst.msk [vmem:[%s286 + $0xe0] sm:$0xff] %vm416, %v5181
        %5231 = vst.msk [vmem:[%s286 + $0xe8] sm:$0xff] %vm416, %v5187
        %5232 = vst.msk [vmem:[%s286 + $0xf0] sm:$0xff] %vm416, %v5193
        %5233 = vst.msk [vmem:[%s286 + $0xf8] sm:$0xff] %vm416, %v5199
        %v5236 = vrot.slane %v2819, 5
        %v5237 = vrot.slane %v2820, 5
        %v5238 = vsel %vm2812, %v2740, %v2748
        %v5239 = vsel %vm2812, %v2741, %v2749
        %v5240 = vsel %vm2815, %v5238, %v2746
        %v5241 = vsel %vm2815, %v5239, %v2747
        %v5242 = vsel %vm2818, %v5240, %v5236
        %v5243 = vsel %vm2818, %v5241, %v5237
        %vm5244 = vcmask 1046528
        %v5245 = vsel %vm5244, %v5242, 0
        %v5246 = vsel %vm5244, %v5243, 0
        %5247 = vst [vmem:[%s261] sm:$0xff] %v5245
        %5248 = vst [vmem:[%s261 + $0x8] sm:$0xff] %v5246
        %s5249 = smul.u32 2, %s20
        %p5250 = scmp.lt.s32.totalorder %s5249, 3
        %s5251 = scalar_select %p5250, %s5249, 3
        %s5252 = smul.addr %s5251, 16
        %s5253 = smul.addr %s5252, 8
        %s5254 = scalar_lea.vmem %s4, %s5253
        %s5255 = sand.u32 %s153, 1
        %s5256 = scalar_lea.sflag [#allocation3], %s5255
        %s5257 = sand.u32 %s153, 1
        %s5258 = smul.addr %s5257, 16
        %s5259 = scalar_lea.vmem [#allocation2], %s5258
        // Predicated region
        $region37: #{tpu_custom_call.1} parent=35 // pred_check
          %p5260 = pneg %p137
        $region38: #{tpu_custom_call.1} parent=35 // pred_check_branch
          %5262 = sbr.rel (%p5260) target = $region40
        $region39: #{tpu_custom_call.1} parent=35 // pred_region
          %s5263 = smul.u32 2, %s20
        $region40: #{tpu_custom_call.1} parent=35 // pred_fallthru
          _
        // Predicated region
        $region41: #{tpu_custom_call.1} parent=35 // pred_check
          %p5264 = pneg %p163
        $region42: #{tpu_custom_call.1} parent=35 // pred_check_branch
          %5266 = sbr.rel (%p5264) target = $region44
        $region43: #{tpu_custom_call.1} parent=35 // pred_region
          %s5267 = smul.u32 2, %s20
          %s5269 = ssub.s32 256, 256
          %5270 = vsyncadd %s5256, %s5269
          %s5271 = smul.addr %s5267, 128
          %s5272 = scalar_lea.hbm %s5, %s5271
          %s5273 = sshll.u32 %s5259, 4
          %s5274 = int_to_ptr.vmem [resolvable:$true] %s5273
          %5279 = dma.vmem_to_hbm [thread:$0]  %s5274, 256, %s5272, %s5256, 128, 128, 8
        $region44: #{tpu_custom_call.1} parent=35 // pred_fallthru
          _
      $region36: #{tpu_custom_call.1} parent=5 // pred_fallthru
        _
      %p5280 = scmp.le.s32.totalorder 2, %s15
      // Predicated region
      $region45: #{tpu_custom_call.1} parent=5 // pred_check
        %p5281 = pneg %p5280
      $region46: #{tpu_custom_call.1} parent=5 // pred_check_branch
        %5283 = sbr.rel (%p5281) target = $region48
      $region47: #{tpu_custom_call.1} parent=5 // pred_region
        %s5284 = ssub.s32 %s15, 2
        // Predicated region
        $region49: #{tpu_custom_call.1} parent=47 // pred_check
          %p5285 = pneg %p143
        $region50: #{tpu_custom_call.1} parent=47 // pred_check_branch
          %5287 = sbr.rel (%p5285) target = $region52
        $region51: #{tpu_custom_call.1} parent=47 // pred_region
          %s5288 = smul.u32 2, %s21
          %p5289 = scmp.lt.s32.totalorder %s5288, 3
          %s5290 = scalar_select %p5289, %s5288, 3
          %s5291 = smul.addr %s5290, 16
          %s5292 = smul.addr %s5291, 8
          %s5293 = scalar_lea.vmem %s4, %s5292
        $region52: #{tpu_custom_call.1} parent=47 // pred_fallthru
          _
        // Predicated region
        $region53: #{tpu_custom_call.1} parent=47 // pred_check
          %p5294 = pneg %p169
        $region54: #{tpu_custom_call.1} parent=47 // pred_check_branch
          %5296 = sbr.rel (%p5294) target = $region56
        $region55: #{tpu_custom_call.1} parent=47 // pred_region
          %s5297 = sand.u32 %s154, 1
          %s5298 = scalar_lea.sflag [#allocation3], %s5297
          %s5299 = sand.u32 %s154, 1
          %s5300 = smul.addr %s5299, 16
          %s5301 = scalar_lea.vmem [#allocation2], %s5300
          %5302 = dma.done %s5298, 256
        $region56: #{tpu_custom_call.1} parent=47 // pred_fallthru
          _
      $region48: #{tpu_custom_call.1} parent=5 // pred_fallthru
        _
    $region6: #{tpu_custom_call.1} parent=1 // loop_footer
      %s19 = sadd.s32 1, %s15
    $region7: #{tpu_custom_call.1} parent=1 // loop_footer_branch
      %14 = sbr.rel target = $region3
    $region8: #{tpu_custom_call.1} parent=1 // loop_exit
      _
    %5303 = vsyncpa [#allocation3], 1
    %s5304 = scalar_lea.sflag [#allocation3], 1
    %5305 = vsyncpa %s5304, 1

</llo_original>
